<compile_context>
chip_gen: v6e
topology: v6e:2x2x1
jax: 0.10.0
libtpu: 0.0.40
codegen_flags: <defaults>
</compile_context>

<pallas_src>
import jax
import jax.numpy as jnp
from jax.experimental import pallas as pl
from jax.experimental.pallas import tpu as pltpu

# ---------------- config ----------------
VOCAB = 100
TYPE_VOCAB = 2
MAX_POS = 16
HIDDEN = 32
N_LAYERS = 2
N_HEADS = 4
HEAD_DIM = HIDDEN // N_HEADS
INTERMEDIATE = 64
N_CLASSES = 2
LN_EPS = 1e-12


# ---------------- in-kernel helpers ----------------
def _layer_norm(x, g, b):
    mu = jnp.mean(x, axis=-1, keepdims=True)
    var = jnp.mean(jnp.square(x - mu), axis=-1, keepdims=True)
    return (x - mu) * jax.lax.rsqrt(var + LN_EPS) * g + b


def _gelu(x):
    # TODO(synk): HF BERT uses exact (erf) GELU; tanh approximation used here.
    c = jnp.float32(0.7978845608028654)  # sqrt(2/pi)
    return 0.5 * x * (1.0 + jnp.tanh(c * (x + 0.044715 * x * x * x)))


# ---------------- fused whole-model kernel (one batch example per grid step) ----------------
def _bert_fused_kernel(
    emb_ref, mask_ref, eg_ref, eb_ref,
    wqkv_ref, bqkv_ref, wo_ref, bo_ref, ln1g_ref, ln1b_ref,
    w1_ref, b1_ref, w2_ref, b2_ref, ln2g_ref, ln2b_ref,
    fcw_ref, fcb_ref,
    out_ref):
    """Embedding-LN -> N encoder layers -> CLS classifier for ONE example."""
    m = mask_ref[...]  # (1, 1, S) additive mask; broadcasts over (heads, queries, keys)

    # Embedding LayerNorm (no residual -> no zeros tensor materialized / DMA'd).
    x = _layer_norm(emb_ref[...].astype(jnp.float32), eg_ref[...], eb_ref[...])  # (S, H)

    # TODO(synk): at BERT-base scale make layers a trailing "arbitrary" grid axis and
    # stream per-layer weights via BlockSpec instead of this static unroll.
    for li in range(N_LAYERS):
        # ---- fused Q/K/V projection (1/sqrt(head_dim) pre-folded into the Q weights) ----
        qkv = jnp.dot(x, wqkv_ref[li],
                      preferred_element_type=jnp.float32) + bqkv_ref[li]      # (S, 3H)

        # ---- head split kept in registers, then ONE batched contraction over heads ----
        def split_heads(base):
            return jnp.stack(
                [qkv[:, base + h * HEAD_DIM: base + (h + 1) * HEAD_DIM]
                 for h in range(N_HEADS)], axis=0)                            # (NH, S, HD)

        q = split_heads(0)
        k = split_heads(HIDDEN)
        v = split_heads(2 * HIDDEN)

        s = jnp.einsum('hqd,hkd->hqk', q, k,
                       preferred_element_type=jnp.float32) + m                # (NH, S, S)
        s = s - jnp.max(s, axis=-1, keepdims=True)
        p = jnp.exp(s)
        p = p * pl.reciprocal(jnp.sum(p, axis=-1, keepdims=True), approx=True)
        ctx_h = jnp.einsum('hqk,hkd->hqd', p, v,
                           preferred_element_type=jnp.float32)                # (NH, S, HD)
        # lane-concat of per-head contexts (no VMEM scratch round-trip)
        ctx = jnp.concatenate([ctx_h[h] for h in range(N_HEADS)], axis=-1)    # (S, H)

        # ---- output projection + residual + LayerNorm (fused) ----
        attn_out = jnp.dot(ctx, wo_ref[li],
                           preferred_element_type=jnp.float32) + bo_ref[li]
        x = _layer_norm(attn_out + x, ln1g_ref[li], ln1b_ref[li])

        # ---- FFN: linear + GELU + linear + residual + LayerNorm (fused) ----
        h1 = jnp.dot(x, w1_ref[li], preferred_element_type=jnp.float32) + b1_ref[li]
        h1 = _gelu(h1)
        h2 = jnp.dot(h1, w2_ref[li], preferred_element_type=jnp.float32) + b2_ref[li]
        x = _layer_norm(h2 + x, ln2g_ref[li], ln2b_ref[li])

    # ---- classifier on the CLS token only (row 0 of this example), single store ----
    cls = x[0:1, :]                                                           # (1, H)
    logits = jnp.dot(cls, fcw_ref[...],
                     preferred_element_type=jnp.float32) + fcb_ref[...]       # (1, 2)
    out_ref[0] = logits.astype(out_ref.dtype)


# ---------------- parameter init (deterministic, synthetic, pre-fused) ----------------
def init_params(key):
    k = jax.random.split(key, 8)
    n = lambda kk, shape: 0.02 * jax.random.normal(kk, shape, jnp.float32)
    L, H, I = N_LAYERS, HIDDEN, INTERMEDIATE

    # Q|K|V pre-fused into one [H, 3H] matmul; 1/sqrt(head_dim) folded into Q columns
    # (and would be folded into the Q bias too — bias is zero here).
    wqkv = n(k[3], (L, H, 3 * H))
    wqkv = wqkv.at[:, :, :H].multiply(1.0 / (HEAD_DIM ** 0.5))

    return {
        "word_emb": n(k[0], (VOCAB, H)),
        "pos_emb": n(k[1], (MAX_POS, H)),
        "type_emb": n(k[2], (TYPE_VOCAB, H)),
        "emb_ln_g": jnp.ones((1, H), jnp.float32),
        "emb_ln_b": jnp.zeros((1, H), jnp.float32),
        "wqkv": wqkv,
        "bqkv": jnp.zeros((L, 1, 3 * H), jnp.float32),
        "wo": n(k[4], (L, H, H)),
        "bo": jnp.zeros((L, 1, H), jnp.float32),
        "ln1_g": jnp.ones((L, 1, H), jnp.float32),
        "ln1_b": jnp.zeros((L, 1, H), jnp.float32),
        "w1": n(k[5], (L, H, I)),
        "b1": jnp.zeros((L, 1, I), jnp.float32),
        "w2": n(k[6], (L, I, H)),
        "b2": jnp.zeros((L, 1, H), jnp.float32),
        "ln2_g": jnp.ones((L, 1, H), jnp.float32),
        "ln2_b": jnp.zeros((L, 1, H), jnp.float32),
        "fc_w": n(k[7], (H, N_CLASSES)),
        "fc_b": jnp.zeros((1, N_CLASSES), jnp.float32),
    }


# ---------------- forward ----------------
def model_forward(params, input_ids, attention_mask, token_type_ids):
    B, S = input_ids.shape
    pos_ids = jnp.arange(S)

    # Embedding gathers are glue (plain JAX); everything downstream is ONE Pallas call.
    emb = (params["word_emb"][input_ids]
           + params["pos_emb"][pos_ids][None, :, :]
           + params["type_emb"][token_type_ids])
    emb2d = emb.reshape(B * S, HIDDEN).astype(jnp.float32)

    # HF-style additive mask: 0 where attended, -1e9 where padded; (B, 1, S) for broadcast.
    add_mask = ((1.0 - attention_mask.astype(jnp.float32)) * -1e9).reshape(B, 1, S)

    operands = (
        emb2d, add_mask, params["emb_ln_g"], params["emb_ln_b"],
        params["wqkv"], params["bqkv"], params["wo"], params["bo"],
        params["ln1_g"], params["ln1_b"],
        params["w1"], params["b1"], params["w2"], params["b2"],
        params["ln2_g"], params["ln2_b"],
        params["fc_w"], params["fc_b"],
    )

    def bcast_spec(a):
        zeros = (0,) * a.ndim
        return pl.BlockSpec(a.shape, lambda b, z=zeros: z)   # same block every grid step

    in_specs = (
        [pl.BlockSpec((S, HIDDEN), lambda b: (b, 0)),         # this example's S rows
         pl.BlockSpec((1, 1, S), lambda b: (b, 0, 0))]        # this example's mask
        + [bcast_spec(a) for a in operands[2:]]               # whole-model weights
    )

    out = pl.pallas_call(
        _bert_fused_kernel,
        out_shape=jax.ShapeDtypeStruct((B, 1, N_CLASSES), jnp.float32),
        grid=(B,),
        in_specs=in_specs,
        out_specs=pl.BlockSpec((1, 1, N_CLASSES), lambda b: (b, 0, 0)),
        compiler_params=pltpu.CompilerParams(
            # batch examples are independent -> v7x can shard them over its 2 TensorCores
            dimension_semantics=("parallel",)),
    )(*operands)
    return out.reshape(B, N_CLASSES)


# ---------------- main ----------------
if __name__ == "__main__":
    key = jax.random.PRNGKey(0)
    k_param, k_ids, k_type = jax.random.split(key, 3)

    B, S = 2, 8
    params = init_params(k_param)

    input_ids = jax.random.randint(k_ids, (B, S), 0, VOCAB, dtype=jnp.int32)
    attention_mask = jnp.array(
        [[1, 1, 1, 1, 1, 1, 1, 1],
         [1, 1, 1, 1, 1, 0, 0, 0]], dtype=jnp.int32)  # second example padded
    token_type_ids = jax.random.randint(k_type, (B, S), 0, TYPE_VOCAB, dtype=jnp.int32)

    fwd = jax.jit(model_forward)
    logits = fwd(params, input_ids, attention_mask, token_type_ids)
    jax.block_until_ready(logits)
    assert logits.shape == (B, N_CLASSES) and logits.dtype == jnp.float32
    assert bool(jnp.all(jnp.isfinite(logits)))
    print("KERNEL_OK")
</pallas_src>

<mosaic_0001>
module attributes {stable_mosaic.version = 11 : i64} {
  func.func @_bert_fused_kernel(%arg0: i32, %arg1: memref<8x32xf32, #tpu.memory_space<vmem>>, %arg2: memref<1x1x8xf32, #tpu.memory_space<vmem>>, %arg3: memref<1x32xf32, #tpu.memory_space<vmem>>, %arg4: memref<1x32xf32, #tpu.memory_space<vmem>>, %arg5: memref<2x32x96xf32, #tpu.memory_space<vmem>>, %arg6: memref<2x1x96xf32, #tpu.memory_space<vmem>>, %arg7: memref<2x32x32xf32, #tpu.memory_space<vmem>>, %arg8: memref<2x1x32xf32, #tpu.memory_space<vmem>>, %arg9: memref<2x1x32xf32, #tpu.memory_space<vmem>>, %arg10: memref<2x1x32xf32, #tpu.memory_space<vmem>>, %arg11: memref<2x32x64xf32, #tpu.memory_space<vmem>>, %arg12: memref<2x1x64xf32, #tpu.memory_space<vmem>>, %arg13: memref<2x64x32xf32, #tpu.memory_space<vmem>>, %arg14: memref<2x1x32xf32, #tpu.memory_space<vmem>>, %arg15: memref<2x1x32xf32, #tpu.memory_space<vmem>>, %arg16: memref<2x1x32xf32, #tpu.memory_space<vmem>>, %arg17: memref<32x2xf32, #tpu.memory_space<vmem>>, %arg18: memref<1x2xf32, #tpu.memory_space<vmem>>, %arg19: memref<1x1x2xf32, #tpu.memory_space<vmem>>) attributes {dimension_semantics = [#tpu.dimension_semantics<parallel>], iteration_bounds = array<i64: 2>, scalar_prefetch = 0 : i64, scratch_operands = 0 : i64, tpu.core_type = #tpu.core_type<tc>, window_params = [{transform_indices = @transform_0, window_bounds = array<i64: 8, 32>}, {transform_indices = @transform_1, window_bounds = array<i64: 1, 1, 8>}, {pipeline_mode = #tpu.pipeline_mode<synchronous>, transform_indices = @transform_2, window_bounds = array<i64: 1, 32>}, {pipeline_mode = #tpu.pipeline_mode<synchronous>, transform_indices = @transform_3, window_bounds = array<i64: 1, 32>}, {pipeline_mode = #tpu.pipeline_mode<synchronous>, transform_indices = @transform_4, window_bounds = array<i64: 2, 32, 96>}, {pipeline_mode = #tpu.pipeline_mode<synchronous>, transform_indices = @transform_5, window_bounds = array<i64: 2, 1, 96>}, {pipeline_mode = #tpu.pipeline_mode<synchronous>, transform_indices = @transform_6, window_bounds = array<i64: 2, 32, 32>}, {pipeline_mode = #tpu.pipeline_mode<synchronous>, transform_indices = @transform_7, window_bounds = array<i64: 2, 1, 32>}, {pipeline_mode = #tpu.pipeline_mode<synchronous>, transform_indices = @transform_8, window_bounds = array<i64: 2, 1, 32>}, {pipeline_mode = #tpu.pipeline_mode<synchronous>, transform_indices = @transform_9, window_bounds = array<i64: 2, 1, 32>}, {pipeline_mode = #tpu.pipeline_mode<synchronous>, transform_indices = @transform_10, window_bounds = array<i64: 2, 32, 64>}, {pipeline_mode = #tpu.pipeline_mode<synchronous>, transform_indices = @transform_11, window_bounds = array<i64: 2, 1, 64>}, {pipeline_mode = #tpu.pipeline_mode<synchronous>, transform_indices = @transform_12, window_bounds = array<i64: 2, 64, 32>}, {pipeline_mode = #tpu.pipeline_mode<synchronous>, transform_indices = @transform_13, window_bounds = array<i64: 2, 1, 32>}, {pipeline_mode = #tpu.pipeline_mode<synchronous>, transform_indices = @transform_14, window_bounds = array<i64: 2, 1, 32>}, {pipeline_mode = #tpu.pipeline_mode<synchronous>, transform_indices = @transform_15, window_bounds = array<i64: 2, 1, 32>}, {pipeline_mode = #tpu.pipeline_mode<synchronous>, transform_indices = @transform_16, window_bounds = array<i64: 32, 2>}, {pipeline_mode = #tpu.pipeline_mode<synchronous>, transform_indices = @transform_17, window_bounds = array<i64: 1, 2>}, {transform_indices = @transform_18, window_bounds = array<i64: 1, 1, 2>}]} {
    %c0 = arith.constant 0 : index
    %c0_0 = arith.constant 0 : index
    %c0_1 = arith.constant 0 : index
    %0 = vector.load %arg2[%c0, %c0_0, %c0_1] : memref<1x1x8xf32, #tpu.memory_space<vmem>>, vector<1x1x8xf32>
    %c0_2 = arith.constant 0 : index
    %c0_3 = arith.constant 0 : index
    %1 = vector.load %arg1[%c0_2, %c0_3] : memref<8x32xf32, #tpu.memory_space<vmem>>, vector<8x32xf32>
    %c0_4 = arith.constant 0 : index
    %c0_5 = arith.constant 0 : index
    %2 = vector.load %arg3[%c0_4, %c0_5] : memref<1x32xf32, #tpu.memory_space<vmem>>, vector<1x32xf32>
    %c0_6 = arith.constant 0 : index
    %c0_7 = arith.constant 0 : index
    %3 = vector.load %arg4[%c0_6, %c0_7] : memref<1x32xf32, #tpu.memory_space<vmem>>, vector<1x32xf32>
    %cst = arith.constant dense<0.000000e+00> : vector<8xf32>
    %4 = vector.multi_reduction <add>, %1, %cst [1] : vector<8x32xf32> to vector<8xf32>
    %5 = vector.shape_cast %4 : vector<8xf32> to vector<8x1xf32>
    %cst_8 = arith.constant 3.200000e+01 : f32
    %6 = vector.broadcast %cst_8 : f32 to vector<8x1xf32>
    %7 = arith.divf %5, %6 : vector<8x1xf32>
    %8 = vector.broadcast %7 : vector<8x1xf32> to vector<8x32xf32>
    %9 = arith.subf %1, %8 : vector<8x32xf32>
    %10 = arith.mulf %9, %9 : vector<8x32xf32>
    %cst_9 = arith.constant dense<0.000000e+00> : vector<8xf32>
    %11 = vector.multi_reduction <add>, %10, %cst_9 [1] : vector<8x32xf32> to vector<8xf32>
    %12 = vector.shape_cast %11 : vector<8xf32> to vector<8x1xf32>
    %cst_10 = arith.constant 3.200000e+01 : f32
    %13 = vector.broadcast %cst_10 : f32 to vector<8x1xf32>
    %14 = arith.divf %12, %13 : vector<8x1xf32>
    %15 = vector.broadcast %7 : vector<8x1xf32> to vector<8x32xf32>
    %16 = arith.subf %1, %15 : vector<8x32xf32>
    %cst_11 = arith.constant 9.99999996E-13 : f32
    %17 = vector.broadcast %cst_11 : f32 to vector<8x1xf32>
    %18 = arith.addf %14, %17 : vector<8x1xf32>
    %19 = math.rsqrt %18 : vector<8x1xf32>
    %20 = vector.broadcast %19 : vector<8x1xf32> to vector<8x32xf32>
    %21 = arith.mulf %16, %20 : vector<8x32xf32>
    %22 = vector.broadcast %2 : vector<1x32xf32> to vector<8x32xf32>
    %23 = arith.mulf %21, %22 : vector<8x32xf32>
    %24 = vector.broadcast %3 : vector<1x32xf32> to vector<8x32xf32>
    %25 = arith.addf %23, %24 : vector<8x32xf32>
    %c0_12 = arith.constant 0 : index
    %c0_13 = arith.constant 0 : index
    %c0_14 = arith.constant 0 : index
    %26 = vector.load %arg5[%c0_12, %c0_13, %c0_14] : memref<2x32x96xf32, #tpu.memory_space<vmem>>, vector<1x32x96xf32>
    %27 = vector.shape_cast %26 : vector<1x32x96xf32> to vector<32x96xf32>
    %cst_15 = arith.constant dense<0.000000e+00> : vector<8x96xf32>
    %28 = tpu.matmul %25, %27, %cst_15 {dimension_numbers = #tpu.dot_dimension_numbers<[1], [0], [0], [1], [0, 0, 1, 1], [], []>} : vector<8x32xf32>, vector<32x96xf32>, vector<8x96xf32> -> vector<8x96xf32>
    %c0_16 = arith.constant 0 : index
    %c0_17 = arith.constant 0 : index
    %c0_18 = arith.constant 0 : index
    %29 = vector.load %arg6[%c0_16, %c0_17, %c0_18] : memref<2x1x96xf32, #tpu.memory_space<vmem>>, vector<1x1x96xf32>
    %30 = vector.shape_cast %29 : vector<1x1x96xf32> to vector<1x96xf32>
    %31 = vector.broadcast %30 : vector<1x96xf32> to vector<8x96xf32>
    %32 = arith.addf %28, %31 : vector<8x96xf32>
    %33 = vector.extract_strided_slice %32 {offsets = [0, 0], sizes = [8, 8], strides = [1, 1]} : vector<8x96xf32> to vector<8x8xf32>
    %34 = vector.extract_strided_slice %32 {offsets = [0, 8], sizes = [8, 8], strides = [1, 1]} : vector<8x96xf32> to vector<8x8xf32>
    %35 = vector.extract_strided_slice %32 {offsets = [0, 16], sizes = [8, 8], strides = [1, 1]} : vector<8x96xf32> to vector<8x8xf32>
    %36 = vector.extract_strided_slice %32 {offsets = [0, 24], sizes = [8, 8], strides = [1, 1]} : vector<8x96xf32> to vector<8x8xf32>
    %37 = vector.shape_cast %33 : vector<8x8xf32> to vector<1x8x8xf32>
    %38 = vector.shape_cast %34 : vector<8x8xf32> to vector<1x8x8xf32>
    %39 = vector.shape_cast %35 : vector<8x8xf32> to vector<1x8x8xf32>
    %40 = vector.shape_cast %36 : vector<8x8xf32> to vector<1x8x8xf32>
    %41 = tpu.concatenate %37, %38, %39, %40 in 0 : vector<1x8x8xf32>, vector<1x8x8xf32>, vector<1x8x8xf32>, vector<1x8x8xf32> -> vector<4x8x8xf32>
    %42 = vector.extract_strided_slice %32 {offsets = [0, 32], sizes = [8, 8], strides = [1, 1]} : vector<8x96xf32> to vector<8x8xf32>
    %43 = vector.extract_strided_slice %32 {offsets = [0, 40], sizes = [8, 8], strides = [1, 1]} : vector<8x96xf32> to vector<8x8xf32>
    %44 = vector.extract_strided_slice %32 {offsets = [0, 48], sizes = [8, 8], strides = [1, 1]} : vector<8x96xf32> to vector<8x8xf32>
    %45 = vector.extract_strided_slice %32 {offsets = [0, 56], sizes = [8, 8], strides = [1, 1]} : vector<8x96xf32> to vector<8x8xf32>
    %46 = vector.shape_cast %42 : vector<8x8xf32> to vector<1x8x8xf32>
    %47 = vector.shape_cast %43 : vector<8x8xf32> to vector<1x8x8xf32>
    %48 = vector.shape_cast %44 : vector<8x8xf32> to vector<1x8x8xf32>
    %49 = vector.shape_cast %45 : vector<8x8xf32> to vector<1x8x8xf32>
    %50 = tpu.concatenate %46, %47, %48, %49 in 0 : vector<1x8x8xf32>, vector<1x8x8xf32>, vector<1x8x8xf32>, vector<1x8x8xf32> -> vector<4x8x8xf32>
    %51 = vector.extract_strided_slice %32 {offsets = [0, 64], sizes = [8, 8], strides = [1, 1]} : vector<8x96xf32> to vector<8x8xf32>
    %52 = vector.extract_strided_slice %32 {offsets = [0, 72], sizes = [8, 8], strides = [1, 1]} : vector<8x96xf32> to vector<8x8xf32>
    %53 = vector.extract_strided_slice %32 {offsets = [0, 80], sizes = [8, 8], strides = [1, 1]} : vector<8x96xf32> to vector<8x8xf32>
    %54 = vector.extract_strided_slice %32 {offsets = [0, 88], sizes = [8, 8], strides = [1, 1]} : vector<8x96xf32> to vector<8x8xf32>
    %55 = vector.shape_cast %51 : vector<8x8xf32> to vector<1x8x8xf32>
    %56 = vector.shape_cast %52 : vector<8x8xf32> to vector<1x8x8xf32>
    %57 = vector.shape_cast %53 : vector<8x8xf32> to vector<1x8x8xf32>
    %58 = vector.shape_cast %54 : vector<8x8xf32> to vector<1x8x8xf32>
    %59 = tpu.concatenate %55, %56, %57, %58 in 0 : vector<1x8x8xf32>, vector<1x8x8xf32>, vector<1x8x8xf32>, vector<1x8x8xf32> -> vector<4x8x8xf32>
    "tpu.trace_start"() <{level = 10 : i32, message = "hqd,hkd->hqk"}> : () -> ()
    %cst_19 = arith.constant dense<0.000000e+00> : vector<4x8x8xf32>
    %60 = tpu.matmul %41, %50, %cst_19 {dimension_numbers = #tpu.dot_dimension_numbers<[2], [2], [1], [1], [0, 0, 0, 1, 1, 1], [0], [0]>} : vector<4x8x8xf32>, vector<4x8x8xf32>, vector<4x8x8xf32> -> vector<4x8x8xf32>
    "tpu.trace_stop"() : () -> ()
    %61 = vector.broadcast %0 : vector<1x1x8xf32> to vector<4x8x8xf32>
    %62 = arith.addf %60, %61 : vector<4x8x8xf32>
    %cst_20 = arith.constant dense<0xFF800000> : vector<4x8xf32>
    %63 = vector.multi_reduction <maximumf>, %62, %cst_20 [2] : vector<4x8x8xf32> to vector<4x8xf32>
    %64 = vector.shape_cast %63 : vector<4x8xf32> to vector<4x8x1xf32>
    %65 = vector.broadcast %64 : vector<4x8x1xf32> to vector<4x8x8xf32>
    %66 = arith.subf %62, %65 : vector<4x8x8xf32>
    %67 = math.exp %66 : vector<4x8x8xf32>
    %cst_21 = arith.constant dense<0.000000e+00> : vector<4x8xf32>
    %68 = vector.multi_reduction <add>, %67, %cst_21 [2] : vector<4x8x8xf32> to vector<4x8xf32>
    %69 = vector.shape_cast %68 : vector<4x8xf32> to vector<4x8x1xf32>
    %70 = tpu.reciprocal %69 {approx = true} : vector<4x8x1xf32> -> vector<4x8x1xf32>
    %71 = vector.broadcast %70 : vector<4x8x1xf32> to vector<4x8x8xf32>
    %72 = arith.mulf %67, %71 : vector<4x8x8xf32>
    "tpu.trace_start"() <{level = 10 : i32, message = "hqk,hkd->hqd"}> : () -> ()
    %cst_22 = arith.constant dense<0.000000e+00> : vector<4x8x8xf32>
    %73 = tpu.matmul %72, %59, %cst_22 {dimension_numbers = #tpu.dot_dimension_numbers<[2], [1], [1], [2], [0, 0, 0, 1, 1, 2], [0], [0]>} : vector<4x8x8xf32>, vector<4x8x8xf32>, vector<4x8x8xf32> -> vector<4x8x8xf32>
    "tpu.trace_stop"() : () -> ()
    %74 = vector.extract_strided_slice %73 {offsets = [0, 0, 0], sizes = [1, 8, 8], strides = [1, 1, 1]} : vector<4x8x8xf32> to vector<1x8x8xf32>
    %75 = vector.shape_cast %74 : vector<1x8x8xf32> to vector<8x8xf32>
    %76 = vector.extract_strided_slice %73 {offsets = [1, 0, 0], sizes = [1, 8, 8], strides = [1, 1, 1]} : vector<4x8x8xf32> to vector<1x8x8xf32>
    %77 = vector.shape_cast %76 : vector<1x8x8xf32> to vector<8x8xf32>
    %78 = vector.extract_strided_slice %73 {offsets = [2, 0, 0], sizes = [1, 8, 8], strides = [1, 1, 1]} : vector<4x8x8xf32> to vector<1x8x8xf32>
    %79 = vector.shape_cast %78 : vector<1x8x8xf32> to vector<8x8xf32>
    %80 = vector.extract_strided_slice %73 {offsets = [3, 0, 0], sizes = [1, 8, 8], strides = [1, 1, 1]} : vector<4x8x8xf32> to vector<1x8x8xf32>
    %81 = vector.shape_cast %80 : vector<1x8x8xf32> to vector<8x8xf32>
    %82 = tpu.concatenate %75, %77, %79, %81 in 1 : vector<8x8xf32>, vector<8x8xf32>, vector<8x8xf32>, vector<8x8xf32> -> vector<8x32xf32>
    %c0_23 = arith.constant 0 : index
    %c0_24 = arith.constant 0 : index
    %c0_25 = arith.constant 0 : index
    %83 = vector.load %arg7[%c0_23, %c0_24, %c0_25] : memref<2x32x32xf32, #tpu.memory_space<vmem>>, vector<1x32x32xf32>
    %84 = vector.shape_cast %83 : vector<1x32x32xf32> to vector<32x32xf32>
    %cst_26 = arith.constant dense<0.000000e+00> : vector<8x32xf32>
    %85 = tpu.matmul %82, %84, %cst_26 {dimension_numbers = #tpu.dot_dimension_numbers<[1], [0], [0], [1], [0, 0, 1, 1], [], []>} : vector<8x32xf32>, vector<32x32xf32>, vector<8x32xf32> -> vector<8x32xf32>
    %c0_27 = arith.constant 0 : index
    %c0_28 = arith.constant 0 : index
    %c0_29 = arith.constant 0 : index
    %86 = vector.load %arg8[%c0_27, %c0_28, %c0_29] : memref<2x1x32xf32, #tpu.memory_space<vmem>>, vector<1x1x32xf32>
    %87 = vector.shape_cast %86 : vector<1x1x32xf32> to vector<1x32xf32>
    %88 = vector.broadcast %87 : vector<1x32xf32> to vector<8x32xf32>
    %89 = arith.addf %85, %88 : vector<8x32xf32>
    %90 = arith.addf %89, %25 : vector<8x32xf32>
    %c0_30 = arith.constant 0 : index
    %c0_31 = arith.constant 0 : index
    %c0_32 = arith.constant 0 : index
    %91 = vector.load %arg9[%c0_30, %c0_31, %c0_32] : memref<2x1x32xf32, #tpu.memory_space<vmem>>, vector<1x1x32xf32>
    %92 = vector.shape_cast %91 : vector<1x1x32xf32> to vector<1x32xf32>
    %c0_33 = arith.constant 0 : index
    %c0_34 = arith.constant 0 : index
    %c0_35 = arith.constant 0 : index
    %93 = vector.load %arg10[%c0_33, %c0_34, %c0_35] : memref<2x1x32xf32, #tpu.memory_space<vmem>>, vector<1x1x32xf32>
    %94 = vector.shape_cast %93 : vector<1x1x32xf32> to vector<1x32xf32>
    %cst_36 = arith.constant dense<0.000000e+00> : vector<8xf32>
    %95 = vector.multi_reduction <add>, %90, %cst_36 [1] : vector<8x32xf32> to vector<8xf32>
    %96 = vector.shape_cast %95 : vector<8xf32> to vector<8x1xf32>
    %cst_37 = arith.constant 3.200000e+01 : f32
    %97 = vector.broadcast %cst_37 : f32 to vector<8x1xf32>
    %98 = arith.divf %96, %97 : vector<8x1xf32>
    %99 = vector.broadcast %98 : vector<8x1xf32> to vector<8x32xf32>
    %100 = arith.subf %90, %99 : vector<8x32xf32>
    %101 = arith.mulf %100, %100 : vector<8x32xf32>
    %cst_38 = arith.constant dense<0.000000e+00> : vector<8xf32>
    %102 = vector.multi_reduction <add>, %101, %cst_38 [1] : vector<8x32xf32> to vector<8xf32>
    %103 = vector.shape_cast %102 : vector<8xf32> to vector<8x1xf32>
    %cst_39 = arith.constant 3.200000e+01 : f32
    %104 = vector.broadcast %cst_39 : f32 to vector<8x1xf32>
    %105 = arith.divf %103, %104 : vector<8x1xf32>
    %106 = vector.broadcast %98 : vector<8x1xf32> to vector<8x32xf32>
    %107 = arith.subf %90, %106 : vector<8x32xf32>
    %cst_40 = arith.constant 9.99999996E-13 : f32
    %108 = vector.broadcast %cst_40 : f32 to vector<8x1xf32>
    %109 = arith.addf %105, %108 : vector<8x1xf32>
    %110 = math.rsqrt %109 : vector<8x1xf32>
    %111 = vector.broadcast %110 : vector<8x1xf32> to vector<8x32xf32>
    %112 = arith.mulf %107, %111 : vector<8x32xf32>
    %113 = vector.broadcast %92 : vector<1x32xf32> to vector<8x32xf32>
    %114 = arith.mulf %112, %113 : vector<8x32xf32>
    %115 = vector.broadcast %94 : vector<1x32xf32> to vector<8x32xf32>
    %116 = arith.addf %114, %115 : vector<8x32xf32>
    %c0_41 = arith.constant 0 : index
    %c0_42 = arith.constant 0 : index
    %c0_43 = arith.constant 0 : index
    %117 = vector.load %arg11[%c0_41, %c0_42, %c0_43] : memref<2x32x64xf32, #tpu.memory_space<vmem>>, vector<1x32x64xf32>
    %118 = vector.shape_cast %117 : vector<1x32x64xf32> to vector<32x64xf32>
    %cst_44 = arith.constant dense<0.000000e+00> : vector<8x64xf32>
    %119 = tpu.matmul %116, %118, %cst_44 {dimension_numbers = #tpu.dot_dimension_numbers<[1], [0], [0], [1], [0, 0, 1, 1], [], []>} : vector<8x32xf32>, vector<32x64xf32>, vector<8x64xf32> -> vector<8x64xf32>
    %c0_45 = arith.constant 0 : index
    %c0_46 = arith.constant 0 : index
    %c0_47 = arith.constant 0 : index
    %120 = vector.load %arg12[%c0_45, %c0_46, %c0_47] : memref<2x1x64xf32, #tpu.memory_space<vmem>>, vector<1x1x64xf32>
    %121 = vector.shape_cast %120 : vector<1x1x64xf32> to vector<1x64xf32>
    %122 = vector.broadcast %121 : vector<1x64xf32> to vector<8x64xf32>
    %123 = arith.addf %119, %122 : vector<8x64xf32>
    %cst_48 = arith.constant 5.000000e-01 : f32
    %124 = vector.broadcast %cst_48 : f32 to vector<8x64xf32>
    %125 = arith.mulf %124, %123 : vector<8x64xf32>
    %cst_49 = arith.constant 4.471500e-02 : f32
    %126 = vector.broadcast %cst_49 : f32 to vector<8x64xf32>
    %127 = arith.mulf %126, %123 : vector<8x64xf32>
    %128 = arith.mulf %127, %123 : vector<8x64xf32>
    %129 = arith.mulf %128, %123 : vector<8x64xf32>
    %130 = arith.addf %123, %129 : vector<8x64xf32>
    %cst_50 = arith.constant 0.797884583 : f32
    %131 = vector.broadcast %cst_50 : f32 to vector<8x64xf32>
    %132 = arith.mulf %131, %130 : vector<8x64xf32>
    %133 = math.tanh %132 : vector<8x64xf32>
    %cst_51 = arith.constant 1.000000e+00 : f32
    %134 = vector.broadcast %cst_51 : f32 to vector<8x64xf32>
    %135 = arith.addf %134, %133 : vector<8x64xf32>
    %136 = arith.mulf %125, %135 : vector<8x64xf32>
    %c0_52 = arith.constant 0 : index
    %c0_53 = arith.constant 0 : index
    %c0_54 = arith.constant 0 : index
    %137 = vector.load %arg13[%c0_52, %c0_53, %c0_54] : memref<2x64x32xf32, #tpu.memory_space<vmem>>, vector<1x64x32xf32>
    %138 = vector.shape_cast %137 : vector<1x64x32xf32> to vector<64x32xf32>
    %cst_55 = arith.constant dense<0.000000e+00> : vector<8x32xf32>
    %139 = tpu.matmul %136, %138, %cst_55 {dimension_numbers = #tpu.dot_dimension_numbers<[1], [0], [0], [1], [0, 0, 1, 1], [], []>} : vector<8x64xf32>, vector<64x32xf32>, vector<8x32xf32> -> vector<8x32xf32>
    %c0_56 = arith.constant 0 : index
    %c0_57 = arith.constant 0 : index
    %c0_58 = arith.constant 0 : index
    %140 = vector.load %arg14[%c0_56, %c0_57, %c0_58] : memref<2x1x32xf32, #tpu.memory_space<vmem>>, vector<1x1x32xf32>
    %141 = vector.shape_cast %140 : vector<1x1x32xf32> to vector<1x32xf32>
    %142 = vector.broadcast %141 : vector<1x32xf32> to vector<8x32xf32>
    %143 = arith.addf %139, %142 : vector<8x32xf32>
    %144 = arith.addf %143, %116 : vector<8x32xf32>
    %c0_59 = arith.constant 0 : index
    %c0_60 = arith.constant 0 : index
    %c0_61 = arith.constant 0 : index
    %145 = vector.load %arg15[%c0_59, %c0_60, %c0_61] : memref<2x1x32xf32, #tpu.memory_space<vmem>>, vector<1x1x32xf32>
    %146 = vector.shape_cast %145 : vector<1x1x32xf32> to vector<1x32xf32>
    %c0_62 = arith.constant 0 : index
    %c0_63 = arith.constant 0 : index
    %c0_64 = arith.constant 0 : index
    %147 = vector.load %arg16[%c0_62, %c0_63, %c0_64] : memref<2x1x32xf32, #tpu.memory_space<vmem>>, vector<1x1x32xf32>
    %148 = vector.shape_cast %147 : vector<1x1x32xf32> to vector<1x32xf32>
    %cst_65 = arith.constant dense<0.000000e+00> : vector<8xf32>
    %149 = vector.multi_reduction <add>, %144, %cst_65 [1] : vector<8x32xf32> to vector<8xf32>
    %150 = vector.shape_cast %149 : vector<8xf32> to vector<8x1xf32>
    %cst_66 = arith.constant 3.200000e+01 : f32
    %151 = vector.broadcast %cst_66 : f32 to vector<8x1xf32>
    %152 = arith.divf %150, %151 : vector<8x1xf32>
    %153 = vector.broadcast %152 : vector<8x1xf32> to vector<8x32xf32>
    %154 = arith.subf %144, %153 : vector<8x32xf32>
    %155 = arith.mulf %154, %154 : vector<8x32xf32>
    %cst_67 = arith.constant dense<0.000000e+00> : vector<8xf32>
    %156 = vector.multi_reduction <add>, %155, %cst_67 [1] : vector<8x32xf32> to vector<8xf32>
    %157 = vector.shape_cast %156 : vector<8xf32> to vector<8x1xf32>
    %cst_68 = arith.constant 3.200000e+01 : f32
    %158 = vector.broadcast %cst_68 : f32 to vector<8x1xf32>
    %159 = arith.divf %157, %158 : vector<8x1xf32>
    %160 = vector.broadcast %152 : vector<8x1xf32> to vector<8x32xf32>
    %161 = arith.subf %144, %160 : vector<8x32xf32>
    %cst_69 = arith.constant 9.99999996E-13 : f32
    %162 = vector.broadcast %cst_69 : f32 to vector<8x1xf32>
    %163 = arith.addf %159, %162 : vector<8x1xf32>
    %164 = math.rsqrt %163 : vector<8x1xf32>
    %165 = vector.broadcast %164 : vector<8x1xf32> to vector<8x32xf32>
    %166 = arith.mulf %161, %165 : vector<8x32xf32>
    %167 = vector.broadcast %146 : vector<1x32xf32> to vector<8x32xf32>
    %168 = arith.mulf %166, %167 : vector<8x32xf32>
    %169 = vector.broadcast %148 : vector<1x32xf32> to vector<8x32xf32>
    %170 = arith.addf %168, %169 : vector<8x32xf32>
    %c1 = arith.constant 1 : index
    %c0_70 = arith.constant 0 : index
    %c0_71 = arith.constant 0 : index
    %171 = vector.load %arg5[%c1, %c0_70, %c0_71] : memref<2x32x96xf32, #tpu.memory_space<vmem>>, vector<1x32x96xf32>
    %172 = vector.shape_cast %171 : vector<1x32x96xf32> to vector<32x96xf32>
    %cst_72 = arith.constant dense<0.000000e+00> : vector<8x96xf32>
    %173 = tpu.matmul %170, %172, %cst_72 {dimension_numbers = #tpu.dot_dimension_numbers<[1], [0], [0], [1], [0, 0, 1, 1], [], []>} : vector<8x32xf32>, vector<32x96xf32>, vector<8x96xf32> -> vector<8x96xf32>
    %c1_73 = arith.constant 1 : index
    %c0_74 = arith.constant 0 : index
    %c0_75 = arith.constant 0 : index
    %174 = vector.load %arg6[%c1_73, %c0_74, %c0_75] : memref<2x1x96xf32, #tpu.memory_space<vmem>>, vector<1x1x96xf32>
    %175 = vector.shape_cast %174 : vector<1x1x96xf32> to vector<1x96xf32>
    %176 = vector.broadcast %175 : vector<1x96xf32> to vector<8x96xf32>
    %177 = arith.addf %173, %176 : vector<8x96xf32>
    %178 = vector.extract_strided_slice %177 {offsets = [0, 0], sizes = [8, 8], strides = [1, 1]} : vector<8x96xf32> to vector<8x8xf32>
    %179 = vector.extract_strided_slice %177 {offsets = [0, 8], sizes = [8, 8], strides = [1, 1]} : vector<8x96xf32> to vector<8x8xf32>
    %180 = vector.extract_strided_slice %177 {offsets = [0, 16], sizes = [8, 8], strides = [1, 1]} : vector<8x96xf32> to vector<8x8xf32>
    %181 = vector.extract_strided_slice %177 {offsets = [0, 24], sizes = [8, 8], strides = [1, 1]} : vector<8x96xf32> to vector<8x8xf32>
    %182 = vector.shape_cast %178 : vector<8x8xf32> to vector<1x8x8xf32>
    %183 = vector.shape_cast %179 : vector<8x8xf32> to vector<1x8x8xf32>
    %184 = vector.shape_cast %180 : vector<8x8xf32> to vector<1x8x8xf32>
    %185 = vector.shape_cast %181 : vector<8x8xf32> to vector<1x8x8xf32>
    %186 = tpu.concatenate %182, %183, %184, %185 in 0 : vector<1x8x8xf32>, vector<1x8x8xf32>, vector<1x8x8xf32>, vector<1x8x8xf32> -> vector<4x8x8xf32>
    %187 = vector.extract_strided_slice %177 {offsets = [0, 32], sizes = [8, 8], strides = [1, 1]} : vector<8x96xf32> to vector<8x8xf32>
    %188 = vector.extract_strided_slice %177 {offsets = [0, 40], sizes = [8, 8], strides = [1, 1]} : vector<8x96xf32> to vector<8x8xf32>
    %189 = vector.extract_strided_slice %177 {offsets = [0, 48], sizes = [8, 8], strides = [1, 1]} : vector<8x96xf32> to vector<8x8xf32>
    %190 = vector.extract_strided_slice %177 {offsets = [0, 56], sizes = [8, 8], strides = [1, 1]} : vector<8x96xf32> to vector<8x8xf32>
    %191 = vector.shape_cast %187 : vector<8x8xf32> to vector<1x8x8xf32>
    %192 = vector.shape_cast %188 : vector<8x8xf32> to vector<1x8x8xf32>
    %193 = vector.shape_cast %189 : vector<8x8xf32> to vector<1x8x8xf32>
    %194 = vector.shape_cast %190 : vector<8x8xf32> to vector<1x8x8xf32>
    %195 = tpu.concatenate %191, %192, %193, %194 in 0 : vector<1x8x8xf32>, vector<1x8x8xf32>, vector<1x8x8xf32>, vector<1x8x8xf32> -> vector<4x8x8xf32>
    %196 = vector.extract_strided_slice %177 {offsets = [0, 64], sizes = [8, 8], strides = [1, 1]} : vector<8x96xf32> to vector<8x8xf32>
    %197 = vector.extract_strided_slice %177 {offsets = [0, 72], sizes = [8, 8], strides = [1, 1]} : vector<8x96xf32> to vector<8x8xf32>
    %198 = vector.extract_strided_slice %177 {offsets = [0, 80], sizes = [8, 8], strides = [1, 1]} : vector<8x96xf32> to vector<8x8xf32>
    %199 = vector.extract_strided_slice %177 {offsets = [0, 88], sizes = [8, 8], strides = [1, 1]} : vector<8x96xf32> to vector<8x8xf32>
    %200 = vector.shape_cast %196 : vector<8x8xf32> to vector<1x8x8xf32>
    %201 = vector.shape_cast %197 : vector<8x8xf32> to vector<1x8x8xf32>
    %202 = vector.shape_cast %198 : vector<8x8xf32> to vector<1x8x8xf32>
    %203 = vector.shape_cast %199 : vector<8x8xf32> to vector<1x8x8xf32>
    %204 = tpu.concatenate %200, %201, %202, %203 in 0 : vector<1x8x8xf32>, vector<1x8x8xf32>, vector<1x8x8xf32>, vector<1x8x8xf32> -> vector<4x8x8xf32>
    "tpu.trace_start"() <{level = 10 : i32, message = "hqd,hkd->hqk"}> : () -> ()
    %cst_76 = arith.constant dense<0.000000e+00> : vector<4x8x8xf32>
    %205 = tpu.matmul %186, %195, %cst_76 {dimension_numbers = #tpu.dot_dimension_numbers<[2], [2], [1], [1], [0, 0, 0, 1, 1, 1], [0], [0]>} : vector<4x8x8xf32>, vector<4x8x8xf32>, vector<4x8x8xf32> -> vector<4x8x8xf32>
    "tpu.trace_stop"() : () -> ()
    %206 = vector.broadcast %0 : vector<1x1x8xf32> to vector<4x8x8xf32>
    %207 = arith.addf %205, %206 : vector<4x8x8xf32>
    %cst_77 = arith.constant dense<0xFF800000> : vector<4x8xf32>
    %208 = vector.multi_reduction <maximumf>, %207, %cst_77 [2] : vector<4x8x8xf32> to vector<4x8xf32>
    %209 = vector.shape_cast %208 : vector<4x8xf32> to vector<4x8x1xf32>
    %210 = vector.broadcast %209 : vector<4x8x1xf32> to vector<4x8x8xf32>
    %211 = arith.subf %207, %210 : vector<4x8x8xf32>
    %212 = math.exp %211 : vector<4x8x8xf32>
    %cst_78 = arith.constant dense<0.000000e+00> : vector<4x8xf32>
    %213 = vector.multi_reduction <add>, %212, %cst_78 [2] : vector<4x8x8xf32> to vector<4x8xf32>
    %214 = vector.shape_cast %213 : vector<4x8xf32> to vector<4x8x1xf32>
    %215 = tpu.reciprocal %214 {approx = true} : vector<4x8x1xf32> -> vector<4x8x1xf32>
    %216 = vector.broadcast %215 : vector<4x8x1xf32> to vector<4x8x8xf32>
    %217 = arith.mulf %212, %216 : vector<4x8x8xf32>
    "tpu.trace_start"() <{level = 10 : i32, message = "hqk,hkd->hqd"}> : () -> ()
    %cst_79 = arith.constant dense<0.000000e+00> : vector<4x8x8xf32>
    %218 = tpu.matmul %217, %204, %cst_79 {dimension_numbers = #tpu.dot_dimension_numbers<[2], [1], [1], [2], [0, 0, 0, 1, 1, 2], [0], [0]>} : vector<4x8x8xf32>, vector<4x8x8xf32>, vector<4x8x8xf32> -> vector<4x8x8xf32>
    "tpu.trace_stop"() : () -> ()
    %219 = vector.extract_strided_slice %218 {offsets = [0, 0, 0], sizes = [1, 8, 8], strides = [1, 1, 1]} : vector<4x8x8xf32> to vector<1x8x8xf32>
    %220 = vector.shape_cast %219 : vector<1x8x8xf32> to vector<8x8xf32>
    %221 = vector.extract_strided_slice %218 {offsets = [1, 0, 0], sizes = [1, 8, 8], strides = [1, 1, 1]} : vector<4x8x8xf32> to vector<1x8x8xf32>
    %222 = vector.shape_cast %221 : vector<1x8x8xf32> to vector<8x8xf32>
    %223 = vector.extract_strided_slice %218 {offsets = [2, 0, 0], sizes = [1, 8, 8], strides = [1, 1, 1]} : vector<4x8x8xf32> to vector<1x8x8xf32>
    %224 = vector.shape_cast %223 : vector<1x8x8xf32> to vector<8x8xf32>
    %225 = vector.extract_strided_slice %218 {offsets = [3, 0, 0], sizes = [1, 8, 8], strides = [1, 1, 1]} : vector<4x8x8xf32> to vector<1x8x8xf32>
    %226 = vector.shape_cast %225 : vector<1x8x8xf32> to vector<8x8xf32>
    %227 = tpu.concatenate %220, %222, %224, %226 in 1 : vector<8x8xf32>, vector<8x8xf32>, vector<8x8xf32>, vector<8x8xf32> -> vector<8x32xf32>
    %c1_80 = arith.constant 1 : index
    %c0_81 = arith.constant 0 : index
    %c0_82 = arith.constant 0 : index
    %228 = vector.load %arg7[%c1_80, %c0_81, %c0_82] : memref<2x32x32xf32, #tpu.memory_space<vmem>>, vector<1x32x32xf32>
    %229 = vector.shape_cast %228 : vector<1x32x32xf32> to vector<32x32xf32>
    %cst_83 = arith.constant dense<0.000000e+00> : vector<8x32xf32>
    %230 = tpu.matmul %227, %229, %cst_83 {dimension_numbers = #tpu.dot_dimension_numbers<[1], [0], [0], [1], [0, 0, 1, 1], [], []>} : vector<8x32xf32>, vector<32x32xf32>, vector<8x32xf32> -> vector<8x32xf32>
    %c1_84 = arith.constant 1 : index
    %c0_85 = arith.constant 0 : index
    %c0_86 = arith.constant 0 : index
    %231 = vector.load %arg8[%c1_84, %c0_85, %c0_86] : memref<2x1x32xf32, #tpu.memory_space<vmem>>, vector<1x1x32xf32>
    %232 = vector.shape_cast %231 : vector<1x1x32xf32> to vector<1x32xf32>
    %233 = vector.broadcast %232 : vector<1x32xf32> to vector<8x32xf32>
    %234 = arith.addf %230, %233 : vector<8x32xf32>
    %235 = arith.addf %234, %170 : vector<8x32xf32>
    %c1_87 = arith.constant 1 : index
    %c0_88 = arith.constant 0 : index
    %c0_89 = arith.constant 0 : index
    %236 = vector.load %arg9[%c1_87, %c0_88, %c0_89] : memref<2x1x32xf32, #tpu.memory_space<vmem>>, vector<1x1x32xf32>
    %237 = vector.shape_cast %236 : vector<1x1x32xf32> to vector<1x32xf32>
    %c1_90 = arith.constant 1 : index
    %c0_91 = arith.constant 0 : index
    %c0_92 = arith.constant 0 : index
    %238 = vector.load %arg10[%c1_90, %c0_91, %c0_92] : memref<2x1x32xf32, #tpu.memory_space<vmem>>, vector<1x1x32xf32>
    %239 = vector.shape_cast %238 : vector<1x1x32xf32> to vector<1x32xf32>
    %cst_93 = arith.constant dense<0.000000e+00> : vector<8xf32>
    %240 = vector.multi_reduction <add>, %235, %cst_93 [1] : vector<8x32xf32> to vector<8xf32>
    %241 = vector.shape_cast %240 : vector<8xf32> to vector<8x1xf32>
    %cst_94 = arith.constant 3.200000e+01 : f32
    %242 = vector.broadcast %cst_94 : f32 to vector<8x1xf32>
    %243 = arith.divf %241, %242 : vector<8x1xf32>
    %244 = vector.broadcast %243 : vector<8x1xf32> to vector<8x32xf32>
    %245 = arith.subf %235, %244 : vector<8x32xf32>
    %246 = arith.mulf %245, %245 : vector<8x32xf32>
    %cst_95 = arith.constant dense<0.000000e+00> : vector<8xf32>
    %247 = vector.multi_reduction <add>, %246, %cst_95 [1] : vector<8x32xf32> to vector<8xf32>
    %248 = vector.shape_cast %247 : vector<8xf32> to vector<8x1xf32>
    %cst_96 = arith.constant 3.200000e+01 : f32
    %249 = vector.broadcast %cst_96 : f32 to vector<8x1xf32>
    %250 = arith.divf %248, %249 : vector<8x1xf32>
    %251 = vector.broadcast %243 : vector<8x1xf32> to vector<8x32xf32>
    %252 = arith.subf %235, %251 : vector<8x32xf32>
    %cst_97 = arith.constant 9.99999996E-13 : f32
    %253 = vector.broadcast %cst_97 : f32 to vector<8x1xf32>
    %254 = arith.addf %250, %253 : vector<8x1xf32>
    %255 = math.rsqrt %254 : vector<8x1xf32>
    %256 = vector.broadcast %255 : vector<8x1xf32> to vector<8x32xf32>
    %257 = arith.mulf %252, %256 : vector<8x32xf32>
    %258 = vector.broadcast %237 : vector<1x32xf32> to vector<8x32xf32>
    %259 = arith.mulf %257, %258 : vector<8x32xf32>
    %260 = vector.broadcast %239 : vector<1x32xf32> to vector<8x32xf32>
    %261 = arith.addf %259, %260 : vector<8x32xf32>
    %c1_98 = arith.constant 1 : index
    %c0_99 = arith.constant 0 : index
    %c0_100 = arith.constant 0 : index
    %262 = vector.load %arg11[%c1_98, %c0_99, %c0_100] : memref<2x32x64xf32, #tpu.memory_space<vmem>>, vector<1x32x64xf32>
    %263 = vector.shape_cast %262 : vector<1x32x64xf32> to vector<32x64xf32>
    %cst_101 = arith.constant dense<0.000000e+00> : vector<8x64xf32>
    %264 = tpu.matmul %261, %263, %cst_101 {dimension_numbers = #tpu.dot_dimension_numbers<[1], [0], [0], [1], [0, 0, 1, 1], [], []>} : vector<8x32xf32>, vector<32x64xf32>, vector<8x64xf32> -> vector<8x64xf32>
    %c1_102 = arith.constant 1 : index
    %c0_103 = arith.constant 0 : index
    %c0_104 = arith.constant 0 : index
    %265 = vector.load %arg12[%c1_102, %c0_103, %c0_104] : memref<2x1x64xf32, #tpu.memory_space<vmem>>, vector<1x1x64xf32>
    %266 = vector.shape_cast %265 : vector<1x1x64xf32> to vector<1x64xf32>
    %267 = vector.broadcast %266 : vector<1x64xf32> to vector<8x64xf32>
    %268 = arith.addf %264, %267 : vector<8x64xf32>
    %cst_105 = arith.constant 5.000000e-01 : f32
    %269 = vector.broadcast %cst_105 : f32 to vector<8x64xf32>
    %270 = arith.mulf %269, %268 : vector<8x64xf32>
    %cst_106 = arith.constant 4.471500e-02 : f32
    %271 = vector.broadcast %cst_106 : f32 to vector<8x64xf32>
    %272 = arith.mulf %271, %268 : vector<8x64xf32>
    %273 = arith.mulf %272, %268 : vector<8x64xf32>
    %274 = arith.mulf %273, %268 : vector<8x64xf32>
    %275 = arith.addf %268, %274 : vector<8x64xf32>
    %cst_107 = arith.constant 0.797884583 : f32
    %276 = vector.broadcast %cst_107 : f32 to vector<8x64xf32>
    %277 = arith.mulf %276, %275 : vector<8x64xf32>
    %278 = math.tanh %277 : vector<8x64xf32>
    %cst_108 = arith.constant 1.000000e+00 : f32
    %279 = vector.broadcast %cst_108 : f32 to vector<8x64xf32>
    %280 = arith.addf %279, %278 : vector<8x64xf32>
    %281 = arith.mulf %270, %280 : vector<8x64xf32>
    %c1_109 = arith.constant 1 : index
    %c0_110 = arith.constant 0 : index
    %c0_111 = arith.constant 0 : index
    %282 = vector.load %arg13[%c1_109, %c0_110, %c0_111] : memref<2x64x32xf32, #tpu.memory_space<vmem>>, vector<1x64x32xf32>
    %283 = vector.shape_cast %282 : vector<1x64x32xf32> to vector<64x32xf32>
    %cst_112 = arith.constant dense<0.000000e+00> : vector<8x32xf32>
    %284 = tpu.matmul %281, %283, %cst_112 {dimension_numbers = #tpu.dot_dimension_numbers<[1], [0], [0], [1], [0, 0, 1, 1], [], []>} : vector<8x64xf32>, vector<64x32xf32>, vector<8x32xf32> -> vector<8x32xf32>
    %c1_113 = arith.constant 1 : index
    %c0_114 = arith.constant 0 : index
    %c0_115 = arith.constant 0 : index
    %285 = vector.load %arg14[%c1_113, %c0_114, %c0_115] : memref<2x1x32xf32, #tpu.memory_space<vmem>>, vector<1x1x32xf32>
    %286 = vector.shape_cast %285 : vector<1x1x32xf32> to vector<1x32xf32>
    %287 = vector.broadcast %286 : vector<1x32xf32> to vector<8x32xf32>
    %288 = arith.addf %284, %287 : vector<8x32xf32>
    %289 = arith.addf %288, %261 : vector<8x32xf32>
    %c1_116 = arith.constant 1 : index
    %c0_117 = arith.constant 0 : index
    %c0_118 = arith.constant 0 : index
    %290 = vector.load %arg15[%c1_116, %c0_117, %c0_118] : memref<2x1x32xf32, #tpu.memory_space<vmem>>, vector<1x1x32xf32>
    %291 = vector.shape_cast %290 : vector<1x1x32xf32> to vector<1x32xf32>
    %c1_119 = arith.constant 1 : index
    %c0_120 = arith.constant 0 : index
    %c0_121 = arith.constant 0 : index
    %292 = vector.load %arg16[%c1_119, %c0_120, %c0_121] : memref<2x1x32xf32, #tpu.memory_space<vmem>>, vector<1x1x32xf32>
    %293 = vector.shape_cast %292 : vector<1x1x32xf32> to vector<1x32xf32>
    %cst_122 = arith.constant dense<0.000000e+00> : vector<8xf32>
    %294 = vector.multi_reduction <add>, %289, %cst_122 [1] : vector<8x32xf32> to vector<8xf32>
    %295 = vector.shape_cast %294 : vector<8xf32> to vector<8x1xf32>
    %cst_123 = arith.constant 3.200000e+01 : f32
    %296 = vector.broadcast %cst_123 : f32 to vector<8x1xf32>
    %297 = arith.divf %295, %296 : vector<8x1xf32>
    %298 = vector.broadcast %297 : vector<8x1xf32> to vector<8x32xf32>
    %299 = arith.subf %289, %298 : vector<8x32xf32>
    %300 = arith.mulf %299, %299 : vector<8x32xf32>
    %cst_124 = arith.constant dense<0.000000e+00> : vector<8xf32>
    %301 = vector.multi_reduction <add>, %300, %cst_124 [1] : vector<8x32xf32> to vector<8xf32>
    %302 = vector.shape_cast %301 : vector<8xf32> to vector<8x1xf32>
    %cst_125 = arith.constant 3.200000e+01 : f32
    %303 = vector.broadcast %cst_125 : f32 to vector<8x1xf32>
    %304 = arith.divf %302, %303 : vector<8x1xf32>
    %305 = vector.broadcast %297 : vector<8x1xf32> to vector<8x32xf32>
    %306 = arith.subf %289, %305 : vector<8x32xf32>
    %cst_126 = arith.constant 9.99999996E-13 : f32
    %307 = vector.broadcast %cst_126 : f32 to vector<8x1xf32>
    %308 = arith.addf %304, %307 : vector<8x1xf32>
    %309 = math.rsqrt %308 : vector<8x1xf32>
    %310 = vector.broadcast %309 : vector<8x1xf32> to vector<8x32xf32>
    %311 = arith.mulf %306, %310 : vector<8x32xf32>
    %312 = vector.broadcast %291 : vector<1x32xf32> to vector<8x32xf32>
    %313 = arith.mulf %311, %312 : vector<8x32xf32>
    %314 = vector.broadcast %293 : vector<1x32xf32> to vector<8x32xf32>
    %315 = arith.addf %313, %314 : vector<8x32xf32>
    %316 = vector.extract_strided_slice %315 {offsets = [0, 0], sizes = [1, 32], strides = [1, 1]} : vector<8x32xf32> to vector<1x32xf32>
    %c0_127 = arith.constant 0 : index
    %c0_128 = arith.constant 0 : index
    %317 = vector.load %arg17[%c0_127, %c0_128] : memref<32x2xf32, #tpu.memory_space<vmem>>, vector<32x2xf32>
    %cst_129 = arith.constant dense<0.000000e+00> : vector<1x2xf32>
    %318 = tpu.matmul %316, %317, %cst_129 {dimension_numbers = #tpu.dot_dimension_numbers<[1], [0], [0], [1], [0, 0, 1, 1], [], []>} : vector<1x32xf32>, vector<32x2xf32>, vector<1x2xf32> -> vector<1x2xf32>
    %c0_130 = arith.constant 0 : index
    %c0_131 = arith.constant 0 : index
    %319 = vector.load %arg18[%c0_130, %c0_131] : memref<1x2xf32, #tpu.memory_space<vmem>>, vector<1x2xf32>
    %320 = arith.addf %318, %319 : vector<1x2xf32>
    %c0_132 = arith.constant 0 : index
    %c0_133 = arith.constant 0 : index
    %c0_134 = arith.constant 0 : index
    %321 = vector.load %arg19[%c0_132, %c0_133, %c0_134] : memref<1x1x2xf32, #tpu.memory_space<vmem>>, vector<1x1x2xf32>
    %322 = vector.shape_cast %321 : vector<1x1x2xf32> to vector<1x2xf32>
    %323 = vector.shape_cast %320 : vector<1x2xf32> to vector<1x1x2xf32>
    tpu.vector_store %arg19[%c0_132, %c0_133, %c0_134], %323 {strides = array<i32>} : memref<1x1x2xf32, #tpu.memory_space<vmem>>, vector<1x1x2xf32>,
    return
  }
  func.func @transform_0(%arg0: i32) -> (i32, i32) {
    %c0_i32 = arith.constant 0 : i32
    %c0_i32_0 = arith.constant 0 : i32
    return %arg0, %c0_i32 : i32, i32
  }
  func.func @transform_1(%arg0: i32) -> (i32, i32, i32) {
    %c0_i32 = arith.constant 0 : i32
    %c0_i32_0 = arith.constant 0 : i32
    %c0_i32_1 = arith.constant 0 : i32
    return %arg0, %c0_i32, %c0_i32_0 : i32, i32, i32
  }
  func.func @transform_2(%arg0: i32) -> (i32, i32) {
    %c0_i32 = arith.constant 0 : i32
    %c0_i32_0 = arith.constant 0 : i32
    %c0_i32_1 = arith.constant 0 : i32
    return %c0_i32, %c0_i32_0 : i32, i32
  }
  func.func @transform_3(%arg0: i32) -> (i32, i32) {
    %c0_i32 = arith.constant 0 : i32
    %c0_i32_0 = arith.constant 0 : i32
    %c0_i32_1 = arith.constant 0 : i32
    return %c0_i32, %c0_i32_0 : i32, i32
  }
  func.func @transform_4(%arg0: i32) -> (i32, i32, i32) {
    %c0_i32 = arith.constant 0 : i32
    %c0_i32_0 = arith.constant 0 : i32
    %c0_i32_1 = arith.constant 0 : i32
    %c0_i32_2 = arith.constant 0 : i32
    return %c0_i32, %c0_i32_0, %c0_i32_1 : i32, i32, i32
  }
  func.func @transform_5(%arg0: i32) -> (i32, i32, i32) {
    %c0_i32 = arith.constant 0 : i32
    %c0_i32_0 = arith.constant 0 : i32
    %c0_i32_1 = arith.constant 0 : i32
    %c0_i32_2 = arith.constant 0 : i32
    return %c0_i32, %c0_i32_0, %c0_i32_1 : i32, i32, i32
  }
  func.func @transform_6(%arg0: i32) -> (i32, i32, i32) {
    %c0_i32 = arith.constant 0 : i32
    %c0_i32_0 = arith.constant 0 : i32
    %c0_i32_1 = arith.constant 0 : i32
    %c0_i32_2 = arith.constant 0 : i32
    return %c0_i32, %c0_i32_0, %c0_i32_1 : i32, i32, i32
  }
  func.func @transform_7(%arg0: i32) -> (i32, i32, i32) {
    %c0_i32 = arith.constant 0 : i32
    %c0_i32_0 = arith.constant 0 : i32
    %c0_i32_1 = arith.constant 0 : i32
    %c0_i32_2 = arith.constant 0 : i32
    return %c0_i32, %c0_i32_0, %c0_i32_1 : i32, i32, i32
  }
  func.func @transform_8(%arg0: i32) -> (i32, i32, i32) {
    %c0_i32 = arith.constant 0 : i32
    %c0_i32_0 = arith.constant 0 : i32
    %c0_i32_1 = arith.constant 0 : i32
    %c0_i32_2 = arith.constant 0 : i32
    return %c0_i32, %c0_i32_0, %c0_i32_1 : i32, i32, i32
  }
  func.func @transform_9(%arg0: i32) -> (i32, i32, i32) {
    %c0_i32 = arith.constant 0 : i32
    %c0_i32_0 = arith.constant 0 : i32
    %c0_i32_1 = arith.constant 0 : i32
    %c0_i32_2 = arith.constant 0 : i32
    return %c0_i32, %c0_i32_0, %c0_i32_1 : i32, i32, i32
  }
  func.func @transform_10(%arg0: i32) -> (i32, i32, i32) {
    %c0_i32 = arith.constant 0 : i32
    %c0_i32_0 = arith.constant 0 : i32
    %c0_i32_1 = arith.constant 0 : i32
    %c0_i32_2 = arith.constant 0 : i32
    return %c0_i32, %c0_i32_0, %c0_i32_1 : i32, i32, i32
  }
  func.func @transform_11(%arg0: i32) -> (i32, i32, i32) {
    %c0_i32 = arith.constant 0 : i32
    %c0_i32_0 = arith.constant 0 : i32
    %c0_i32_1 = arith.constant 0 : i32
    %c0_i32_2 = arith.constant 0 : i32
    return %c0_i32, %c0_i32_0, %c0_i32_1 : i32, i32, i32
  }
  func.func @transform_12(%arg0: i32) -> (i32, i32, i32) {
    %c0_i32 = arith.constant 0 : i32
    %c0_i32_0 = arith.constant 0 : i32
    %c0_i32_1 = arith.constant 0 : i32
    %c0_i32_2 = arith.constant 0 : i32
    return %c0_i32, %c0_i32_0, %c0_i32_1 : i32, i32, i32
  }
  func.func @transform_13(%arg0: i32) -> (i32, i32, i32) {
    %c0_i32 = arith.constant 0 : i32
    %c0_i32_0 = arith.constant 0 : i32
    %c0_i32_1 = arith.constant 0 : i32
    %c0_i32_2 = arith.constant 0 : i32
    return %c0_i32, %c0_i32_0, %c0_i32_1 : i32, i32, i32
  }
  func.func @transform_14(%arg0: i32) -> (i32, i32, i32) {
    %c0_i32 = arith.constant 0 : i32
    %c0_i32_0 = arith.constant 0 : i32
    %c0_i32_1 = arith.constant 0 : i32
    %c0_i32_2 = arith.constant 0 : i32
    return %c0_i32, %c0_i32_0, %c0_i32_1 : i32, i32, i32
  }
  func.func @transform_15(%arg0: i32) -> (i32, i32, i32) {
    %c0_i32 = arith.constant 0 : i32
    %c0_i32_0 = arith.constant 0 : i32
    %c0_i32_1 = arith.constant 0 : i32
    %c0_i32_2 = arith.constant 0 : i32
    return %c0_i32, %c0_i32_0, %c0_i32_1 : i32, i32, i32
  }
  func.func @transform_16(%arg0: i32) -> (i32, i32) {
    %c0_i32 = arith.constant 0 : i32
    %c0_i32_0 = arith.constant 0 : i32
    %c0_i32_1 = arith.constant 0 : i32
    return %c0_i32, %c0_i32_0 : i32, i32
  }
  func.func @transform_17(%arg0: i32) -> (i32, i32) {
    %c0_i32 = arith.constant 0 : i32
    %c0_i32_0 = arith.constant 0 : i32
    %c0_i32_1 = arith.constant 0 : i32
    return %c0_i32, %c0_i32_0 : i32, i32
  }
  func.func @transform_18(%arg0: i32) -> (i32, i32, i32) {
    %c0_i32 = arith.constant 0 : i32
    %c0_i32_0 = arith.constant 0 : i32
    %c0_i32_1 = arith.constant 0 : i32
    return %arg0, %c0_i32, %c0_i32_0 : i32, i32, i32
  }
}

</mosaic_0001>

<llo_original>
// kernel: model_forward.1
$region0: #{model_forward.1}
  #allocation0 [shape = 'u32[]', space=smem, size = 0x4, offset = 0x4, fixed_abs, tag = 'smem constant byte address 0x4 - core index']
  #allocation1 [shape = 'u32[144,128]{1,0:T(1,128)}', space=vmem, size = 0x12000, scoped, tag = 'internal scratch']
  %s0 = inlined_call_operand.vmem [shape: f32[16,32], index: 0, kind: input, shape index: {}]
  %s1 = inlined_call_operand.vmem [shape: f32[2,1,8], index: 1, kind: input, shape index: {}]
  %s2 = inlined_call_operand.vmem [shape: f32[1,32], index: 2, kind: input, shape index: {}]
  %s3 = inlined_call_operand.vmem [shape: f32[1,32], index: 3, kind: input, shape index: {}]
  %s4 = inlined_call_operand.vmem [shape: f32[2,32,96], index: 4, kind: input, shape index: {}]
  %s5 = inlined_call_operand.vmem [shape: f32[2,1,96], index: 5, kind: input, shape index: {}]
  %s6 = inlined_call_operand.vmem [shape: f32[2,32,32], index: 6, kind: input, shape index: {}]
  %s7 = inlined_call_operand.vmem [shape: f32[2,1,32], index: 7, kind: input, shape index: {}]
  %s8 = inlined_call_operand.vmem [shape: f32[2,1,32], index: 8, kind: input, shape index: {}]
  %s9 = inlined_call_operand.vmem [shape: f32[2,1,32], index: 9, kind: input, shape index: {}]
  %s10 = inlined_call_operand.vmem [shape: f32[2,32,64], index: 10, kind: input, shape index: {}]
  %s11 = inlined_call_operand.vmem [shape: f32[2,1,64], index: 11, kind: input, shape index: {}]
  %s12 = inlined_call_operand.vmem [shape: f32[2,64,32], index: 12, kind: input, shape index: {}]
  %s13 = inlined_call_operand.vmem [shape: f32[2,1,32], index: 13, kind: input, shape index: {}]
  %s14 = inlined_call_operand.vmem [shape: f32[2,1,32], index: 14, kind: input, shape index: {}]
  %s15 = inlined_call_operand.vmem [shape: f32[2,1,32], index: 15, kind: input, shape index: {}]
  %s16 = inlined_call_operand.vmem [shape: f32[32,2], index: 16, kind: input, shape index: {}]
  %s17 = inlined_call_operand.vmem [shape: f32[1,2], index: 17, kind: input, shape index: {}]
  %s18 = inlined_call_operand.hbm [shape: f32[2,1,2], index: 18, kind: output, shape index: {}]
  %s19 = sld [smem:[#allocation0]]
  $region105: #{model_forward.1} parent=0
    _
  %s21 = ssub.s32 1, %s19
  %s22 = scalar_select 0, %s21, %s19
  $region1: #{model_forward.1} parent=0
    #allocation2 [shape = 'u8[1024]{0}', space=vmem, size = 0x400, scoped, tag = 'output window, operand 0']
    #allocation3 [shape = 's32[2]{0}', space=sflag, size = 0x8, scoped, tag = 'scoped memory for model_forward.1']
    %23 = vsyncpa [#allocation3], 0
    %s24 = scalar_lea.sflag [#allocation3], 1
    %25 = vsyncpa %s24, 0
    loop: start=0, step=1, limit=4
    $region2: #{model_forward.1} parent=1 // loop_pre_header
      _
    $region3: #{model_forward.1} parent=1 // loop_header
      %s27 = sphi 0, %s31
      %p28 = scmp.ge.s32.totalorder %s27, 4
      %s37 = sphi 0, %s39
      %s40 = sphi 0, %s37
      %s41 = sphi 0, %s40
      %s57 = sphi 0, %s41
      %s63 = sphi 0, %s65
      %s66 = sphi 0, %s63
      %s67 = sphi 0, %s66
      %s83 = sphi 0, %s67
      %s87 = sphi 0, %s87
      %s89 = sphi 0, %s87
      %s90 = sphi 0, %s89
      %s104 = sphi 0, %s90
      %s108 = sphi 0, %s108
      %s110 = sphi 0, %s108
      %s111 = sphi 0, %s110
      %s125 = sphi 0, %s111
      %s129 = sphi 0, %s129
      %s131 = sphi 0, %s129
      %s132 = sphi 0, %s131
      %s146 = sphi 0, %s132
      %s150 = sphi 0, %s150
      %s152 = sphi 0, %s150
      %s153 = sphi 0, %s152
      %s167 = sphi 0, %s153
      %s171 = sphi 0, %s171
      %s173 = sphi 0, %s171
      %s174 = sphi 0, %s173
      %s188 = sphi 0, %s174
      %s192 = sphi 0, %s192
      %s194 = sphi 0, %s192
      %s195 = sphi 0, %s194
      %s209 = sphi 0, %s195
      %s213 = sphi 0, %s213
      %s215 = sphi 0, %s213
      %s216 = sphi 0, %s215
      %s230 = sphi 0, %s216
      %s234 = sphi 0, %s234
      %s236 = sphi 0, %s234
      %s237 = sphi 0, %s236
      %s251 = sphi 0, %s237
      %s255 = sphi 0, %s255
      %s257 = sphi 0, %s255
      %s258 = sphi 0, %s257
      %s272 = sphi 0, %s258
      %s276 = sphi 0, %s276
      %s278 = sphi 0, %s276
      %s279 = sphi 0, %s278
      %s293 = sphi 0, %s279
      %s297 = sphi 0, %s297
      %s299 = sphi 0, %s297
      %s300 = sphi 0, %s299
      %s314 = sphi 0, %s300
      %s318 = sphi 0, %s318
      %s320 = sphi 0, %s318
      %s321 = sphi 0, %s320
      %s335 = sphi 0, %s321
      %s339 = sphi 0, %s339
      %s341 = sphi 0, %s339
      %s342 = sphi 0, %s341
      %s356 = sphi 0, %s342
      %s360 = sphi 0, %s360
      %s362 = sphi 0, %s360
      %s363 = sphi 0, %s362
      %s377 = sphi 0, %s363
      %s381 = sphi 0, %s381
      %s383 = sphi 0, %s381
      %s384 = sphi 0, %s383
      %s398 = sphi 0, %s384
      %s402 = sphi 0, %s402
      %s404 = sphi 0, %s402
      %s405 = sphi 0, %s404
      %s419 = sphi 0, %s405
      %s425 = sphi 0, %s427
      %s428 = sphi 0, %s425
      %s429 = sphi 0, %s428
      %s445 = sphi 0, %s429
    $region4: #{model_forward.1} parent=1 // loop_header_branch
      %30 = sbr.rel (%p28) target = $region8
    $region5: #{model_forward.1} parent=1 // loop_body
      %s32 = ssub.s32 %s27, 1
      %s33 = ssub.s32 %s27, 2
      %s34 = sadd.s32 %s27, 1
      %s35 = ssub.s32 %s27, %s34
      %p36 = scmp.eq.s32.totalorder %s35, 0
      %s38 = sadd.s32 %s37, 1
      %s39 = scalar_select %p36, %s37, %s38
      %p42 = pneg %p36
      %p43 = scmp.eq.s32.totalorder %s27, 1
      %p44 = por %p42, %p43
      %p45 = scmp.ne.s32.totalorder %s37, %s40
      %p46 = scmp.eq.s32.totalorder %s27, 0
      %p47 = por %p45, %p46
      %p48 = scmp.ne.s32.totalorder %s37, %s40
      %p49 = scmp.eq.s32.totalorder %s32, 1
      %p50 = por %p48, %p49
      %p51 = scmp.ne.s32.totalorder %s40, %s41
      %p52 = scmp.eq.s32.totalorder %s32, 0
      %p53 = por %p51, %p52
      %p54 = scmp.ne.s32.totalorder %s40, %s41
      %p55 = scmp.eq.s32.totalorder %s33, 1
      %p56 = por %p54, %p55
      %p58 = scmp.ne.s32.totalorder %s41, %s57
      %p59 = scmp.eq.s32.totalorder %s33, 0
      %p60 = por %p58, %p59
      %s61 = ssub.s32 %s27, %s34
      %p62 = scmp.eq.s32.totalorder %s61, 0
      %s64 = sadd.s32 %s63, 1
      %s65 = scalar_select %p62, %s63, %s64
      %p68 = pneg %p62
      %p69 = scmp.eq.s32.totalorder %s27, 1
      %p70 = por %p68, %p69
      %p71 = scmp.ne.s32.totalorder %s63, %s66
      %p72 = scmp.eq.s32.totalorder %s27, 0
      %p73 = por %p71, %p72
      %p74 = scmp.ne.s32.totalorder %s63, %s66
      %p75 = scmp.eq.s32.totalorder %s32, 1
      %p76 = por %p74, %p75
      %p77 = scmp.ne.s32.totalorder %s66, %s67
      %p78 = scmp.eq.s32.totalorder %s32, 0
      %p79 = por %p77, %p78
      %p80 = scmp.ne.s32.totalorder %s66, %s67
      %p81 = scmp.eq.s32.totalorder %s33, 1
      %p82 = por %p80, %p81
      %p84 = scmp.ne.s32.totalorder %s67, %s83
      %p85 = scmp.eq.s32.totalorder %s33, 0
      %p86 = por %p84, %p85
      %s88 = sadd.s32 %s87, 1
      %p91 = scmp.eq.s32.totalorder %s27, 1
      %p92 = scmp.ne.s32.totalorder %s87, %s89
      %p93 = scmp.eq.s32.totalorder %s27, 0
      %p94 = por %p92, %p93
      %p95 = scmp.ne.s32.totalorder %s87, %s89
      %p96 = scmp.eq.s32.totalorder %s32, 1
      %p97 = por %p95, %p96
      %p98 = scmp.ne.s32.totalorder %s89, %s90
      %p99 = scmp.eq.s32.totalorder %s32, 0
      %p100 = por %p98, %p99
      %p101 = scmp.ne.s32.totalorder %s89, %s90
      %p102 = scmp.eq.s32.totalorder %s33, 1
      %p103 = por %p101, %p102
      %p105 = scmp.ne.s32.totalorder %s90, %s104
      %p106 = scmp.eq.s32.totalorder %s33, 0
      %p107 = por %p105, %p106
      %s109 = sadd.s32 %s108, 1
      %p112 = scmp.eq.s32.totalorder %s27, 1
      %p113 = scmp.ne.s32.totalorder %s108, %s110
      %p114 = scmp.eq.s32.totalorder %s27, 0
      %p115 = por %p113, %p114
      %p116 = scmp.ne.s32.totalorder %s108, %s110
      %p117 = scmp.eq.s32.totalorder %s32, 1
      %p118 = por %p116, %p117
      %p119 = scmp.ne.s32.totalorder %s110, %s111
      %p120 = scmp.eq.s32.totalorder %s32, 0
      %p121 = por %p119, %p120
      %p122 = scmp.ne.s32.totalorder %s110, %s111
      %p123 = scmp.eq.s32.totalorder %s33, 1
      %p124 = por %p122, %p123
      %p126 = scmp.ne.s32.totalorder %s111, %s125
      %p127 = scmp.eq.s32.totalorder %s33, 0
      %p128 = por %p126, %p127
      %s130 = sadd.s32 %s129, 1
      %p133 = scmp.eq.s32.totalorder %s27, 1
      %p134 = scmp.ne.s32.totalorder %s129, %s131
      %p135 = scmp.eq.s32.totalorder %s27, 0
      %p136 = por %p134, %p135
      %p137 = scmp.ne.s32.totalorder %s129, %s131
      %p138 = scmp.eq.s32.totalorder %s32, 1
      %p139 = por %p137, %p138
      %p140 = scmp.ne.s32.totalorder %s131, %s132
      %p141 = scmp.eq.s32.totalorder %s32, 0
      %p142 = por %p140, %p141
      %p143 = scmp.ne.s32.totalorder %s131, %s132
      %p144 = scmp.eq.s32.totalorder %s33, 1
      %p145 = por %p143, %p144
      %p147 = scmp.ne.s32.totalorder %s132, %s146
      %p148 = scmp.eq.s32.totalorder %s33, 0
      %p149 = por %p147, %p148
      %s151 = sadd.s32 %s150, 1
      %p154 = scmp.eq.s32.totalorder %s27, 1
      %p155 = scmp.ne.s32.totalorder %s150, %s152
      %p156 = scmp.eq.s32.totalorder %s27, 0
      %p157 = por %p155, %p156
      %p158 = scmp.ne.s32.totalorder %s150, %s152
      %p159 = scmp.eq.s32.totalorder %s32, 1
      %p160 = por %p158, %p159
      %p161 = scmp.ne.s32.totalorder %s152, %s153
      %p162 = scmp.eq.s32.totalorder %s32, 0
      %p163 = por %p161, %p162
      %p164 = scmp.ne.s32.totalorder %s152, %s153
      %p165 = scmp.eq.s32.totalorder %s33, 1
      %p166 = por %p164, %p165
      %p168 = scmp.ne.s32.totalorder %s153, %s167
      %p169 = scmp.eq.s32.totalorder %s33, 0
      %p170 = por %p168, %p169
      %s172 = sadd.s32 %s171, 1
      %p175 = scmp.eq.s32.totalorder %s27, 1
      %p176 = scmp.ne.s32.totalorder %s171, %s173
      %p177 = scmp.eq.s32.totalorder %s27, 0
      %p178 = por %p176, %p177
      %p179 = scmp.ne.s32.totalorder %s171, %s173
      %p180 = scmp.eq.s32.totalorder %s32, 1
      %p181 = por %p179, %p180
      %p182 = scmp.ne.s32.totalorder %s173, %s174
      %p183 = scmp.eq.s32.totalorder %s32, 0
      %p184 = por %p182, %p183
      %p185 = scmp.ne.s32.totalorder %s173, %s174
      %p186 = scmp.eq.s32.totalorder %s33, 1
      %p187 = por %p185, %p186
      %p189 = scmp.ne.s32.totalorder %s174, %s188
      %p190 = scmp.eq.s32.totalorder %s33, 0
      %p191 = por %p189, %p190
      %s193 = sadd.s32 %s192, 1
      %p196 = scmp.eq.s32.totalorder %s27, 1
      %p197 = scmp.ne.s32.totalorder %s192, %s194
      %p198 = scmp.eq.s32.totalorder %s27, 0
      %p199 = por %p197, %p198
      %p200 = scmp.ne.s32.totalorder %s192, %s194
      %p201 = scmp.eq.s32.totalorder %s32, 1
      %p202 = por %p200, %p201
      %p203 = scmp.ne.s32.totalorder %s194, %s195
      %p204 = scmp.eq.s32.totalorder %s32, 0
      %p205 = por %p203, %p204
      %p206 = scmp.ne.s32.totalorder %s194, %s195
      %p207 = scmp.eq.s32.totalorder %s33, 1
      %p208 = por %p206, %p207
      %p210 = scmp.ne.s32.totalorder %s195, %s209
      %p211 = scmp.eq.s32.totalorder %s33, 0
      %p212 = por %p210, %p211
      %s214 = sadd.s32 %s213, 1
      %p217 = scmp.eq.s32.totalorder %s27, 1
      %p218 = scmp.ne.s32.totalorder %s213, %s215
      %p219 = scmp.eq.s32.totalorder %s27, 0
      %p220 = por %p218, %p219
      %p221 = scmp.ne.s32.totalorder %s213, %s215
      %p222 = scmp.eq.s32.totalorder %s32, 1
      %p223 = por %p221, %p222
      %p224 = scmp.ne.s32.totalorder %s215, %s216
      %p225 = scmp.eq.s32.totalorder %s32, 0
      %p226 = por %p224, %p225
      %p227 = scmp.ne.s32.totalorder %s215, %s216
      %p228 = scmp.eq.s32.totalorder %s33, 1
      %p229 = por %p227, %p228
      %p231 = scmp.ne.s32.totalorder %s216, %s230
      %p232 = scmp.eq.s32.totalorder %s33, 0
      %p233 = por %p231, %p232
      %s235 = sadd.s32 %s234, 1
      %p238 = scmp.eq.s32.totalorder %s27, 1
      %p239 = scmp.ne.s32.totalorder %s234, %s236
      %p240 = scmp.eq.s32.totalorder %s27, 0
      %p241 = por %p239, %p240
      %p242 = scmp.ne.s32.totalorder %s234, %s236
      %p243 = scmp.eq.s32.totalorder %s32, 1
      %p244 = por %p242, %p243
      %p245 = scmp.ne.s32.totalorder %s236, %s237
      %p246 = scmp.eq.s32.totalorder %s32, 0
      %p247 = por %p245, %p246
      %p248 = scmp.ne.s32.totalorder %s236, %s237
      %p249 = scmp.eq.s32.totalorder %s33, 1
      %p250 = por %p248, %p249
      %p252 = scmp.ne.s32.totalorder %s237, %s251
      %p253 = scmp.eq.s32.totalorder %s33, 0
      %p254 = por %p252, %p253
      %s256 = sadd.s32 %s255, 1
      %p259 = scmp.eq.s32.totalorder %s27, 1
      %p260 = scmp.ne.s32.totalorder %s255, %s257
      %p261 = scmp.eq.s32.totalorder %s27, 0
      %p262 = por %p260, %p261
      %p263 = scmp.ne.s32.totalorder %s255, %s257
      %p264 = scmp.eq.s32.totalorder %s32, 1
      %p265 = por %p263, %p264
      %p266 = scmp.ne.s32.totalorder %s257, %s258
      %p267 = scmp.eq.s32.totalorder %s32, 0
      %p268 = por %p266, %p267
      %p269 = scmp.ne.s32.totalorder %s257, %s258
      %p270 = scmp.eq.s32.totalorder %s33, 1
      %p271 = por %p269, %p270
      %p273 = scmp.ne.s32.totalorder %s258, %s272
      %p274 = scmp.eq.s32.totalorder %s33, 0
      %p275 = por %p273, %p274
      %s277 = sadd.s32 %s276, 1
      %p280 = scmp.eq.s32.totalorder %s27, 1
      %p281 = scmp.ne.s32.totalorder %s276, %s278
      %p282 = scmp.eq.s32.totalorder %s27, 0
      %p283 = por %p281, %p282
      %p284 = scmp.ne.s32.totalorder %s276, %s278
      %p285 = scmp.eq.s32.totalorder %s32, 1
      %p286 = por %p284, %p285
      %p287 = scmp.ne.s32.totalorder %s278, %s279
      %p288 = scmp.eq.s32.totalorder %s32, 0
      %p289 = por %p287, %p288
      %p290 = scmp.ne.s32.totalorder %s278, %s279
      %p291 = scmp.eq.s32.totalorder %s33, 1
      %p292 = por %p290, %p291
      %p294 = scmp.ne.s32.totalorder %s279, %s293
      %p295 = scmp.eq.s32.totalorder %s33, 0
      %p296 = por %p294, %p295
      %s298 = sadd.s32 %s297, 1
      %p301 = scmp.eq.s32.totalorder %s27, 1
      %p302 = scmp.ne.s32.totalorder %s297, %s299
      %p303 = scmp.eq.s32.totalorder %s27, 0
      %p304 = por %p302, %p303
      %p305 = scmp.ne.s32.totalorder %s297, %s299
      %p306 = scmp.eq.s32.totalorder %s32, 1
      %p307 = por %p305, %p306
      %p308 = scmp.ne.s32.totalorder %s299, %s300
      %p309 = scmp.eq.s32.totalorder %s32, 0
      %p310 = por %p308, %p309
      %p311 = scmp.ne.s32.totalorder %s299, %s300
      %p312 = scmp.eq.s32.totalorder %s33, 1
      %p313 = por %p311, %p312
      %p315 = scmp.ne.s32.totalorder %s300, %s314
      %p316 = scmp.eq.s32.totalorder %s33, 0
      %p317 = por %p315, %p316
      %s319 = sadd.s32 %s318, 1
      %p322 = scmp.eq.s32.totalorder %s27, 1
      %p323 = scmp.ne.s32.totalorder %s318, %s320
      %p324 = scmp.eq.s32.totalorder %s27, 0
      %p325 = por %p323, %p324
      %p326 = scmp.ne.s32.totalorder %s318, %s320
      %p327 = scmp.eq.s32.totalorder %s32, 1
      %p328 = por %p326, %p327
      %p329 = scmp.ne.s32.totalorder %s320, %s321
      %p330 = scmp.eq.s32.totalorder %s32, 0
      %p331 = por %p329, %p330
      %p332 = scmp.ne.s32.totalorder %s320, %s321
      %p333 = scmp.eq.s32.totalorder %s33, 1
      %p334 = por %p332, %p333
      %p336 = scmp.ne.s32.totalorder %s321, %s335
      %p337 = scmp.eq.s32.totalorder %s33, 0
      %p338 = por %p336, %p337
      %s340 = sadd.s32 %s339, 1
      %p343 = scmp.eq.s32.totalorder %s27, 1
      %p344 = scmp.ne.s32.totalorder %s339, %s341
      %p345 = scmp.eq.s32.totalorder %s27, 0
      %p346 = por %p344, %p345
      %p347 = scmp.ne.s32.totalorder %s339, %s341
      %p348 = scmp.eq.s32.totalorder %s32, 1
      %p349 = por %p347, %p348
      %p350 = scmp.ne.s32.totalorder %s341, %s342
      %p351 = scmp.eq.s32.totalorder %s32, 0
      %p352 = por %p350, %p351
      %p353 = scmp.ne.s32.totalorder %s341, %s342
      %p354 = scmp.eq.s32.totalorder %s33, 1
      %p355 = por %p353, %p354
      %p357 = scmp.ne.s32.totalorder %s342, %s356
      %p358 = scmp.eq.s32.totalorder %s33, 0
      %p359 = por %p357, %p358
      %s361 = sadd.s32 %s360, 1
      %p364 = scmp.eq.s32.totalorder %s27, 1
      %p365 = scmp.ne.s32.totalorder %s360, %s362
      %p366 = scmp.eq.s32.totalorder %s27, 0
      %p367 = por %p365, %p366
      %p368 = scmp.ne.s32.totalorder %s360, %s362
      %p369 = scmp.eq.s32.totalorder %s32, 1
      %p370 = por %p368, %p369
      %p371 = scmp.ne.s32.totalorder %s362, %s363
      %p372 = scmp.eq.s32.totalorder %s32, 0
      %p373 = por %p371, %p372
      %p374 = scmp.ne.s32.totalorder %s362, %s363
      %p375 = scmp.eq.s32.totalorder %s33, 1
      %p376 = por %p374, %p375
      %p378 = scmp.ne.s32.totalorder %s363, %s377
      %p379 = scmp.eq.s32.totalorder %s33, 0
      %p380 = por %p378, %p379
      %s382 = sadd.s32 %s381, 1
      %p385 = scmp.eq.s32.totalorder %s27, 1
      %p386 = scmp.ne.s32.totalorder %s381, %s383
      %p387 = scmp.eq.s32.totalorder %s27, 0
      %p388 = por %p386, %p387
      %p389 = scmp.ne.s32.totalorder %s381, %s383
      %p390 = scmp.eq.s32.totalorder %s32, 1
      %p391 = por %p389, %p390
      %p392 = scmp.ne.s32.totalorder %s383, %s384
      %p393 = scmp.eq.s32.totalorder %s32, 0
      %p394 = por %p392, %p393
      %p395 = scmp.ne.s32.totalorder %s383, %s384
      %p396 = scmp.eq.s32.totalorder %s33, 1
      %p397 = por %p395, %p396
      %p399 = scmp.ne.s32.totalorder %s384, %s398
      %p400 = scmp.eq.s32.totalorder %s33, 0
      %p401 = por %p399, %p400
      %s403 = sadd.s32 %s402, 1
      %p406 = scmp.eq.s32.totalorder %s27, 1
      %p407 = scmp.ne.s32.totalorder %s402, %s404
      %p408 = scmp.eq.s32.totalorder %s27, 0
      %p409 = por %p407, %p408
      %p410 = scmp.ne.s32.totalorder %s402, %s404
      %p411 = scmp.eq.s32.totalorder %s32, 1
      %p412 = por %p410, %p411
      %p413 = scmp.ne.s32.totalorder %s404, %s405
      %p414 = scmp.eq.s32.totalorder %s32, 0
      %p415 = por %p413, %p414
      %p416 = scmp.ne.s32.totalorder %s404, %s405
      %p417 = scmp.eq.s32.totalorder %s33, 1
      %p418 = por %p416, %p417
      %p420 = scmp.ne.s32.totalorder %s405, %s419
      %p421 = scmp.eq.s32.totalorder %s33, 0
      %p422 = por %p420, %p421
      %s423 = ssub.s32 %s27, %s34
      %p424 = scmp.eq.s32.totalorder %s423, 0
      %s426 = sadd.s32 %s425, 1
      %s427 = scalar_select %p424, %s425, %s426
      %p430 = pneg %p424
      %p431 = scmp.eq.s32.totalorder %s27, 1
      %p432 = por %p430, %p431
      %p433 = scmp.ne.s32.totalorder %s425, %s428
      %p434 = scmp.eq.s32.totalorder %s27, 0
      %p435 = por %p433, %p434
      %p436 = scmp.ne.s32.totalorder %s425, %s428
      %p437 = scmp.eq.s32.totalorder %s32, 1
      %p438 = por %p436, %p437
      %p439 = scmp.ne.s32.totalorder %s428, %s429
      %p440 = scmp.eq.s32.totalorder %s32, 0
      %p441 = por %p439, %p440
      %p442 = scmp.ne.s32.totalorder %s428, %s429
      %p443 = scmp.eq.s32.totalorder %s33, 1
      %p444 = por %p442, %p443
      %p446 = scmp.ne.s32.totalorder %s429, %s445
      %p447 = scmp.eq.s32.totalorder %s33, 0
      %p448 = por %p446, %p447
      %p449 = scmp.le.s32.totalorder 1, %s27
      %p450 = scmp.lt.s32.totalorder %s27, 3
      %p451 = pnand %p449, %p450
      %p452 = pneg %p451
      // Predicated region
      $region9: #{model_forward.1} parent=5 // pred_check
        _
      $region10: #{model_forward.1} parent=5 // pred_check_branch
        %454 = sbr.rel (%p451) target = $region12
      $region11: #{model_forward.1} parent=5 // pred_region
        %s455 = ssub.s32 %s27, 1
        // Predicated region
        $region13: #{model_forward.1} parent=11 // pred_check
          %p456 = pneg %p100
        $region14: #{model_forward.1} parent=11 // pred_check_branch
          %458 = sbr.rel (%p456) target = $region16
        $region15: #{model_forward.1} parent=11 // pred_region
          _
        $region16: #{model_forward.1} parent=11 // pred_fallthru
          _
        // Predicated region
        $region17: #{model_forward.1} parent=11 // pred_check
          %p459 = pneg %p121
        $region18: #{model_forward.1} parent=11 // pred_check_branch
          %461 = sbr.rel (%p459) target = $region20
        $region19: #{model_forward.1} parent=11 // pred_region
          _
        $region20: #{model_forward.1} parent=11 // pred_fallthru
          _
        // Predicated region
        $region21: #{model_forward.1} parent=11 // pred_check
          %p462 = pneg %p142
        $region22: #{model_forward.1} parent=11 // pred_check_branch
          %464 = sbr.rel (%p462) target = $region24
        $region23: #{model_forward.1} parent=11 // pred_region
          _
        $region24: #{model_forward.1} parent=11 // pred_fallthru
          _
        // Predicated region
        $region25: #{model_forward.1} parent=11 // pred_check
          %p465 = pneg %p163
        $region26: #{model_forward.1} parent=11 // pred_check_branch
          %467 = sbr.rel (%p465) target = $region28
        $region27: #{model_forward.1} parent=11 // pred_region
          _
        $region28: #{model_forward.1} parent=11 // pred_fallthru
          _
        // Predicated region
        $region29: #{model_forward.1} parent=11 // pred_check
          %p468 = pneg %p184
        $region30: #{model_forward.1} parent=11 // pred_check_branch
          %470 = sbr.rel (%p468) target = $region32
        $region31: #{model_forward.1} parent=11 // pred_region
          _
        $region32: #{model_forward.1} parent=11 // pred_fallthru
          _
        // Predicated region
        $region33: #{model_forward.1} parent=11 // pred_check
          %p471 = pneg %p205
        $region34: #{model_forward.1} parent=11 // pred_check_branch
          %473 = sbr.rel (%p471) target = $region36
        $region35: #{model_forward.1} parent=11 // pred_region
          _
        $region36: #{model_forward.1} parent=11 // pred_fallthru
          _
        // Predicated region
        $region37: #{model_forward.1} parent=11 // pred_check
          %p474 = pneg %p226
        $region38: #{model_forward.1} parent=11 // pred_check_branch
          %476 = sbr.rel (%p474) target = $region40
        $region39: #{model_forward.1} parent=11 // pred_region
          _
        $region40: #{model_forward.1} parent=11 // pred_fallthru
          _
        // Predicated region
        $region41: #{model_forward.1} parent=11 // pred_check
          %p477 = pneg %p247
        $region42: #{model_forward.1} parent=11 // pred_check_branch
          %479 = sbr.rel (%p477) target = $region44
        $region43: #{model_forward.1} parent=11 // pred_region
          _
        $region44: #{model_forward.1} parent=11 // pred_fallthru
          _
        // Predicated region
        $region45: #{model_forward.1} parent=11 // pred_check
          %p480 = pneg %p268
        $region46: #{model_forward.1} parent=11 // pred_check_branch
          %482 = sbr.rel (%p480) target = $region48
        $region47: #{model_forward.1} parent=11 // pred_region
          _
        $region48: #{model_forward.1} parent=11 // pred_fallthru
          _
        // Predicated region
        $region49: #{model_forward.1} parent=11 // pred_check
          %p483 = pneg %p289
        $region50: #{model_forward.1} parent=11 // pred_check_branch
          %485 = sbr.rel (%p483) target = $region52
        $region51: #{model_forward.1} parent=11 // pred_region
          _
        $region52: #{model_forward.1} parent=11 // pred_fallthru
          _
        // Predicated region
        $region53: #{model_forward.1} parent=11 // pred_check
          %p486 = pneg %p310
        $region54: #{model_forward.1} parent=11 // pred_check_branch
          %488 = sbr.rel (%p486) target = $region56
        $region55: #{model_forward.1} parent=11 // pred_region
          _
        $region56: #{model_forward.1} parent=11 // pred_fallthru
          _
        // Predicated region
        $region57: #{model_forward.1} parent=11 // pred_check
          %p489 = pneg %p331
        $region58: #{model_forward.1} parent=11 // pred_check_branch
          %491 = sbr.rel (%p489) target = $region60
        $region59: #{model_forward.1} parent=11 // pred_region
          _
        $region60: #{model_forward.1} parent=11 // pred_fallthru
          _
        // Predicated region
        $region61: #{model_forward.1} parent=11 // pred_check
          %p492 = pneg %p352
        $region62: #{model_forward.1} parent=11 // pred_check_branch
          %494 = sbr.rel (%p492) target = $region64
        $region63: #{model_forward.1} parent=11 // pred_region
          _
        $region64: #{model_forward.1} parent=11 // pred_fallthru
          _
        // Predicated region
        $region65: #{model_forward.1} parent=11 // pred_check
          %p495 = pneg %p373
        $region66: #{model_forward.1} parent=11 // pred_check_branch
          %497 = sbr.rel (%p495) target = $region68
        $region67: #{model_forward.1} parent=11 // pred_region
          _
        $region68: #{model_forward.1} parent=11 // pred_fallthru
          _
        // Predicated region
        $region69: #{model_forward.1} parent=11 // pred_check
          %p498 = pneg %p394
        $region70: #{model_forward.1} parent=11 // pred_check_branch
          %500 = sbr.rel (%p498) target = $region72
        $region71: #{model_forward.1} parent=11 // pred_region
          _
        $region72: #{model_forward.1} parent=11 // pred_fallthru
          _
        // Predicated region
        $region73: #{model_forward.1} parent=11 // pred_check
          %p501 = pneg %p415
        $region74: #{model_forward.1} parent=11 // pred_check_branch
          %503 = sbr.rel (%p501) target = $region76
        $region75: #{model_forward.1} parent=11 // pred_region
          _
        $region76: #{model_forward.1} parent=11 // pred_fallthru
          _
      $region12: #{model_forward.1} parent=5 // pred_fallthru
        _
      %p504 = scmp.lt.s32.totalorder %s27, 2
      // Predicated region
      $region77: #{model_forward.1} parent=5 // pred_check
        %p505 = pneg %p504
      $region78: #{model_forward.1} parent=5 // pred_check_branch
        %507 = sbr.rel (%p505) target = $region80
      $region79: #{model_forward.1} parent=5 // pred_region
        // Predicated region
        $region81: #{model_forward.1} parent=79 // pred_check
          %p508 = pneg %p47
        $region82: #{model_forward.1} parent=79 // pred_check_branch
          %510 = sbr.rel (%p508) target = $region84
        $region83: #{model_forward.1} parent=79 // pred_region
          %p511 = scmp.lt.s32.totalorder %s27, 1
          %s512 = scalar_select %p511, %s27, 1
          %s513 = smul.addr %s512, 8
          %s514 = scalar_lea.vmem %s0, %s513
        $region84: #{model_forward.1} parent=79 // pred_fallthru
          _
        // Predicated region
        $region85: #{model_forward.1} parent=79 // pred_check
          %p515 = pneg %p73
        $region86: #{model_forward.1} parent=79 // pred_check_branch
          %517 = sbr.rel (%p515) target = $region88
        $region87: #{model_forward.1} parent=79 // pred_region
          %p518 = scmp.lt.s32.totalorder %s27, 1
          %s519 = scalar_select %p518, %s27, 1
          %s520 = scalar_lea.vmem %s1, %s519
        $region88: #{model_forward.1} parent=79 // pred_fallthru
          _
      $region80: #{model_forward.1} parent=5 // pred_fallthru
        _
      %p521 = scmp.le.s32.totalorder 1, %s27
      %p522 = scmp.lt.s32.totalorder %s27, 3
      %p523 = pnand %p521, %p522
      %p524 = pneg %p523
      // Predicated region
      $region89: #{model_forward.1} parent=5 // pred_check
        _
      $region90: #{model_forward.1} parent=5 // pred_check_branch
        %526 = sbr.rel (%p523) target = $region92
      $region91: #{model_forward.1} parent=5 // pred_region
        %s527 = ssub.s32 %s27, 1
        %p528 = scmp.lt.s32.totalorder %s32, 1
        %s529 = scalar_select %p528, %s32, 1
        %s530 = smul.addr %s529, 8
        %s531 = scalar_lea.vmem %s0, %s530
        %p532 = pneg %p53
        %p533 = pneg %p50
        %p534 = scmp.lt.s32.totalorder %s32, 1
        %s535 = scalar_select %p534, %s32, 1
        %s536 = scalar_lea.vmem %s1, %s535
        %p537 = pneg %p79
        %p538 = pneg %p76
        %p539 = pneg %p100
        %p540 = pneg %p97
        %p541 = pneg %p121
        %p542 = pneg %p118
        %p543 = pneg %p142
        %p544 = pneg %p139
        %p545 = pneg %p163
        %p546 = pneg %p160
        %p547 = pneg %p184
        %p548 = pneg %p181
        %p549 = pneg %p205
        %p550 = pneg %p202
        %p551 = pneg %p226
        %p552 = pneg %p223
        %p553 = pneg %p247
        %p554 = pneg %p244
        %p555 = pneg %p268
        %p556 = pneg %p265
        %p557 = pneg %p289
        %p558 = pneg %p286
        %p559 = pneg %p310
        %p560 = pneg %p307
        %p561 = pneg %p331
        %p562 = pneg %p328
        %p563 = pneg %p352
        %p564 = pneg %p349
        %p565 = pneg %p373
        %p566 = pneg %p370
        %p567 = pneg %p394
        %p568 = pneg %p391
        %p569 = pneg %p415
        %p570 = pneg %p412
        %p571 = pneg %p441
        %p572 = pneg %p438
        %s573 = sand.u32 %s428, 1
        %s574 = scalar_lea.sflag [#allocation3], %s573
        %s575 = sand.u32 %s428, 1
        %s576 = scalar_lea.vmem [#allocation2], %s575
        %p577 = scmp.lt.s32.totalorder %s32, 1
        %s578 = scalar_select %p577, %s32, 1
        %s579 = smul.addr %s578, 8
        %s580 = scalar_lea.vmem %s0, %s579
        %p581 = scmp.lt.s32.totalorder %s32, 1
        %s582 = scalar_select %p581, %s32, 1
        %s583 = scalar_lea.vmem %s1, %s582
        %v584 = vld [vmem:[%s583] sm:$0x1]
        %v585 = vld [vmem:[%s580] sm:$0xff]
        %v586 = vld [vmem:[%s2] sm:$0x1]
        %v587 = vld [vmem:[%s3] sm:$0x1]
        %vm588 = vcmask 261120
        %v589 = vsel %vm588, %v585, 0.0
        %590 = vadd.xlane.f32.xlu0 %v589
        %v591 = vpop.xlane.xlu0 %590
        %v592 = vrcp.pop 32.0
        %v593 = vmul.f32 %v591, %v592
        %v594 = vsub.f32 %v585, %v593
        %v595 = vmul.f32 %v594, %v594
        %v596 = vsel %vm588, %v595, 0.0
        %597 = vadd.xlane.f32.xlu0 %v596
        %v598 = vpop.xlane.xlu0 %597
        %v599 = vmul.f32 %v598, %v592
        %v600 = vadd.f32 %v599, 1e-12
        %v601 = vrsqrt.pop %v600
        %v602 = vmul.f32 %v594, %v601
        %v604 = vlaneseq
        %v605 = vshrl.u32 %v604, 7
        %v606 = vsub.s32 0, %v605
        %v607 = vrot.slane %v586, %v606
        %v609 = vmul.f32 %v602, %v607
        %v611 = vlaneseq
        %v612 = vshrl.u32 %v611, 7
        %v613 = vsub.s32 0, %v612
        %v614 = vrot.slane %v587, %v613
        %v616 = vadd.f32 %v609, %v614
        %v617 = vld [vmem:[%s4] sm:$0xff]
        %v618 = vld [vmem:[%s4 + $0x8] sm:$0xff]
        %v619 = vld [vmem:[%s4 + $0x10] sm:$0xff]
        %v620 = vld [vmem:[%s4 + $0x18] sm:$0xff]
        %v621 = vld [vmem:[%s5] sm:$0x1]
        %v623 = vlaneseq
        %v624 = vshrl.u32 %v623, 7
        %v625 = vsub.s32 0, %v624
        %v626 = vrot.slane %v621, %v625
        %v629 = vsel %vm588, %v616, 0
        %631 = vmatprep.subr.mxu0 0.0
        %632 = vmatpush1.msra.mxu0 0.0
        %633 = vmatprep.subr.mxu0 0.0
        %634 = vmatpush1.msra.mxu0 0.0
        %635 = vmatprep.subr.mxu0 0.0
        %636 = vmatpush1.msra.mxu0 0.0
        %637 = vmatprep.subr.mxu0 0.0
        %638 = vmatpush1.msra.mxu0 0.0
        %639 = vmatprep.subr.mxu0 0.0
        %640 = vmatpush1.msra.mxu0 0.0
        %641 = vmatprep.subr.mxu0 0.0
        %642 = vmatpush1.msra.mxu0 0.0
        %643 = vmatprep.subr.mxu0 0.0
        %644 = vmatpush1.msra.mxu0 0.0
        %645 = vmatprep.subr.mxu0 0.0
        %646 = vmatpush1.msra.mxu0 0.0
        %647 = vmatprep.subr.mxu0 0.0
        %648 = vmatpush1.msra.mxu0 0.0
        %649 = vmatprep.subr.mxu0 0.0
        %650 = vmatpush1.msra.mxu0 0.0
        %651 = vmatprep.subr.mxu0 0.0
        %652 = vmatpush1.msra.mxu0 0.0
        %653 = vmatprep.subr.mxu0 0.0
        %654 = vmatpush1.msra.mxu0 0.0
        %655 = vmatprep.subr.mxu0 0.0
        %656 = vmatpush1.msra.mxu0 %v620
        %657 = vmatprep.subr.mxu0 0.0
        %658 = vmatpush1.msra.mxu0 %v619
        %659 = vmatprep.subr.mxu0 0.0
        %660 = vmatpush1.msra.mxu0 %v618
        %661 = vmatprep.subr.mxu0 0.0
        %662 = vmatpush1.msra.mxu0 %v617
        %663 = vmatprep.subr.mxu0 0.0
        %664 = vmatpush2.msra.mxu0 0.0
        %665 = vmatprep.subr.mxu0 0.0
        %666 = vmatpush2.msra.mxu0 0.0
        %667 = vmatprep.subr.mxu0 0.0
        %668 = vmatpush2.msra.mxu0 0.0
        %669 = vmatprep.subr.mxu0 0.0
        %670 = vmatpush2.msra.mxu0 0.0
        %671 = vmatprep.subr.mxu0 0.0
        %672 = vmatpush2.msra.mxu0 0.0
        %673 = vmatprep.subr.mxu0 0.0
        %674 = vmatpush2.msra.mxu0 0.0
        %675 = vmatprep.subr.mxu0 0.0
        %676 = vmatpush2.msra.mxu0 0.0
        %677 = vmatprep.subr.mxu0 0.0
        %678 = vmatpush2.msra.mxu0 0.0
        %679 = vmatprep.subr.mxu0 0.0
        %680 = vmatpush2.msra.mxu0 0.0
        %681 = vmatprep.subr.mxu0 0.0
        %682 = vmatpush2.msra.mxu0 0.0
        %683 = vmatprep.subr.mxu0 0.0
        %684 = vmatpush2.msra.mxu0 0.0
        %685 = vmatprep.subr.mxu0 0.0
        %686 = vmatpush2.msra.mxu0 0.0
        %687 = vmatprep.subr.mxu0 0.0
        %688 = vmatpush2.msra.mxu0 0.0
        %689 = vmatprep.subr.mxu0 0.0
        %690 = vmatpush2.msra.mxu0 0.0
        %691 = vmatprep.subr.mxu0 0.0
        %692 = vmatpush2.msra.mxu0 0.0
        %693 = vmatprep.subr.mxu0 0.0
        %694 = vmatpush2.msra.mxu0 0.0
        %695 = vmatprep.mubr.f32.mxu0 0.0
        %696 = vmatmul.mubr.f32.gmra.mxu0 %v629
        %v697 = vpop.f32.mrf.mxu0
        %v698 = vadd.f32 %v626, %v697
        %v699 = vpop.f32.mrf.mxu0
        %700 = vdwg.mxu0
        %702 = vrot.lane.b32.xlu0 %v698, 120
        %v703 = vpop.permute.xlu0 %702
        %704 = vrot.lane.b32.xlu0 %v698, 112
        %v705 = vpop.permute.xlu0 %704
        %706 = vrot.lane.b32.xlu0 %v698, 104
        %v707 = vpop.permute.xlu0 %706
        %v709 = vlaneseq
        %v710 = vshrl.u32 %v709, 7
        %v711 = vsub.s32 0, %v710
        %v712 = vrot.slane %v584, %v711
        %714 = vrot.lane.b32.xlu0 %v698, 96
        %v715 = vpop.permute.xlu0 %714
        %vm716 = vcmask 64512
        %v717 = vsel %vm716, %v698, 0
        %v719 = vsel %vm716, %v715, 0
        %721 = vmatprep.subr.mxu0 0.0
        %722 = vmatpush1.xpose.msra.mxu0 0.0
        %723 = vmatprep.subr.mxu0 0.0
        %724 = vmatpush1.xpose.msra.mxu0 0.0
        %725 = vmatprep.subr.mxu0 0.0
        %726 = vmatpush1.xpose.msra.mxu0 0.0
        %727 = vmatprep.subr.mxu0 0.0
        %728 = vmatpush1.xpose.msra.mxu0 0.0
        %729 = vmatprep.subr.mxu0 0.0
        %730 = vmatpush1.xpose.msra.mxu0 0.0
        %731 = vmatprep.subr.mxu0 0.0
        %732 = vmatpush1.xpose.msra.mxu0 0.0
        %733 = vmatprep.subr.mxu0 0.0
        %734 = vmatpush1.xpose.msra.mxu0 0.0
        %735 = vmatprep.subr.mxu0 0.0
        %736 = vmatpush1.xpose.msra.mxu0 0.0
        %737 = vmatprep.subr.mxu0 0.0
        %738 = vmatpush1.xpose.msra.mxu0 0.0
        %739 = vmatprep.subr.mxu0 0.0
        %740 = vmatpush1.xpose.msra.mxu0 0.0
        %741 = vmatprep.subr.mxu0 0.0
        %742 = vmatpush1.xpose.msra.mxu0 0.0
        %743 = vmatprep.subr.mxu0 0.0
        %744 = vmatpush1.xpose.msra.mxu0 0.0
        %745 = vmatprep.subr.mxu0 0.0
        %746 = vmatpush1.xpose.msra.mxu0 0.0
        %747 = vmatprep.subr.mxu0 0.0
        %748 = vmatpush1.xpose.msra.mxu0 0.0
        %749 = vmatprep.subr.mxu0 0.0
        %750 = vmatpush1.xpose.msra.mxu0 0.0
        %751 = vmatprep.subr.mxu0 0.0
        %752 = vmatpush1.xpose.msra.mxu0 %v719
        %753 = vmatprep.subr.mxu0 0.0
        %754 = vmatpush2.xpose.msra.mxu0 0.0
        %755 = vmatprep.subr.mxu0 0.0
        %756 = vmatpush2.xpose.msra.mxu0 0.0
        %757 = vmatprep.subr.mxu0 0.0
        %758 = vmatpush2.xpose.msra.mxu0 0.0
        %759 = vmatprep.subr.mxu0 0.0
        %760 = vmatpush2.xpose.msra.mxu0 0.0
        %761 = vmatprep.subr.mxu0 0.0
        %762 = vmatpush2.xpose.msra.mxu0 0.0
        %763 = vmatprep.subr.mxu0 0.0
        %764 = vmatpush2.xpose.msra.mxu0 0.0
        %765 = vmatprep.subr.mxu0 0.0
        %766 = vmatpush2.xpose.msra.mxu0 0.0
        %767 = vmatprep.subr.mxu0 0.0
        %768 = vmatpush2.xpose.msra.mxu0 0.0
        %769 = vmatprep.subr.mxu0 0.0
        %770 = vmatpush2.xpose.msra.mxu0 0.0
        %771 = vmatprep.subr.mxu0 0.0
        %772 = vmatpush2.xpose.msra.mxu0 0.0
        %773 = vmatprep.subr.mxu0 0.0
        %774 = vmatpush2.xpose.msra.mxu0 0.0
        %775 = vmatprep.subr.mxu0 0.0
        %776 = vmatpush2.xpose.msra.mxu0 0.0
        %777 = vmatprep.subr.mxu0 0.0
        %778 = vmatpush2.xpose.msra.mxu0 0.0
        %779 = vmatprep.subr.mxu0 0.0
        %780 = vmatpush2.xpose.msra.mxu0 0.0
        %781 = vmatprep.subr.mxu0 0.0
        %782 = vmatpush2.xpose.msra.mxu0 0.0
        %783 = vmatprep.subr.mxu0 0.0
        %784 = vmatpush2.xpose.msra.mxu0 0.0
        %785 = vmatprep.mubr.f32.mxu0 0.0
        %786 = vmatmul.mubr.f32.gmra.mxu0 %v717
        %v787 = vpop.f32.mrf.mxu0
        %v788 = vadd.f32 %v712, %v787
        %v789 = vpop.f32.mrf.mxu0
        %790 = vdwg.mxu0
        %791 = vrot.lane.b32.xlu0 %v703, 96
        %v792 = vpop.permute.xlu0 %791
        %v793 = vsel %vm716, %v703, 0
        %v795 = vsel %vm716, %v792, 0
        %797 = vmatprep.subr.mxu0 0.0
        %798 = vmatpush1.xpose.msra.mxu0 0.0
        %799 = vmatprep.subr.mxu0 0.0
        %800 = vmatpush1.xpose.msra.mxu0 0.0
        %801 = vmatprep.subr.mxu0 0.0
        %802 = vmatpush1.xpose.msra.mxu0 0.0
        %803 = vmatprep.subr.mxu0 0.0
        %804 = vmatpush1.xpose.msra.mxu0 0.0
        %805 = vmatprep.subr.mxu0 0.0
        %806 = vmatpush1.xpose.msra.mxu0 0.0
        %807 = vmatprep.subr.mxu0 0.0
        %808 = vmatpush1.xpose.msra.mxu0 0.0
        %809 = vmatprep.subr.mxu0 0.0
        %810 = vmatpush1.xpose.msra.mxu0 0.0
        %811 = vmatprep.subr.mxu0 0.0
        %812 = vmatpush1.xpose.msra.mxu0 0.0
        %813 = vmatprep.subr.mxu0 0.0
        %814 = vmatpush1.xpose.msra.mxu0 0.0
        %815 = vmatprep.subr.mxu0 0.0
        %816 = vmatpush1.xpose.msra.mxu0 0.0
        %817 = vmatprep.subr.mxu0 0.0
        %818 = vmatpush1.xpose.msra.mxu0 0.0
        %819 = vmatprep.subr.mxu0 0.0
        %820 = vmatpush1.xpose.msra.mxu0 0.0
        %821 = vmatprep.subr.mxu0 0.0
        %822 = vmatpush1.xpose.msra.mxu0 0.0
        %823 = vmatprep.subr.mxu0 0.0
        %824 = vmatpush1.xpose.msra.mxu0 0.0
        %825 = vmatprep.subr.mxu0 0.0
        %826 = vmatpush1.xpose.msra.mxu0 0.0
        %827 = vmatprep.subr.mxu0 0.0
        %828 = vmatpush1.xpose.msra.mxu0 %v795
        %829 = vmatprep.subr.mxu0 0.0
        %830 = vmatpush2.xpose.msra.mxu0 0.0
        %831 = vmatprep.subr.mxu0 0.0
        %832 = vmatpush2.xpose.msra.mxu0 0.0
        %833 = vmatprep.subr.mxu0 0.0
        %834 = vmatpush2.xpose.msra.mxu0 0.0
        %835 = vmatprep.subr.mxu0 0.0
        %836 = vmatpush2.xpose.msra.mxu0 0.0
        %837 = vmatprep.subr.mxu0 0.0
        %838 = vmatpush2.xpose.msra.mxu0 0.0
        %839 = vmatprep.subr.mxu0 0.0
        %840 = vmatpush2.xpose.msra.mxu0 0.0
        %841 = vmatprep.subr.mxu0 0.0
        %842 = vmatpush2.xpose.msra.mxu0 0.0
        %843 = vmatprep.subr.mxu0 0.0
        %844 = vmatpush2.xpose.msra.mxu0 0.0
        %845 = vmatprep.subr.mxu0 0.0
        %846 = vmatpush2.xpose.msra.mxu0 0.0
        %847 = vmatprep.subr.mxu0 0.0
        %848 = vmatpush2.xpose.msra.mxu0 0.0
        %849 = vmatprep.subr.mxu0 0.0
        %850 = vmatpush2.xpose.msra.mxu0 0.0
        %851 = vmatprep.subr.mxu0 0.0
        %852 = vmatpush2.xpose.msra.mxu0 0.0
        %853 = vmatprep.subr.mxu0 0.0
        %854 = vmatpush2.xpose.msra.mxu0 0.0
        %855 = vmatprep.subr.mxu0 0.0
        %856 = vmatpush2.xpose.msra.mxu0 0.0
        %857 = vmatprep.subr.mxu0 0.0
        %858 = vmatpush2.xpose.msra.mxu0 0.0
        %859 = vmatprep.subr.mxu0 0.0
        %860 = vmatpush2.xpose.msra.mxu0 0.0
        %861 = vmatprep.mubr.f32.mxu0 0.0
        %862 = vmatmul.mubr.f32.gmra.mxu0 %v793
        %v863 = vpop.f32.mrf.mxu0
        %v864 = vadd.f32 %v712, %v863
        %v865 = vpop.f32.mrf.mxu0
        %866 = vdwg.mxu0
        %867 = vrot.lane.b32.xlu0 %v705, 96
        %v868 = vpop.permute.xlu0 %867
        %v869 = vsel %vm716, %v705, 0
        %v871 = vsel %vm716, %v868, 0
        %873 = vmatprep.subr.mxu0 0.0
        %874 = vmatpush1.xpose.msra.mxu0 0.0
        %875 = vmatprep.subr.mxu0 0.0
        %876 = vmatpush1.xpose.msra.mxu0 0.0
        %877 = vmatprep.subr.mxu0 0.0
        %878 = vmatpush1.xpose.msra.mxu0 0.0
        %879 = vmatprep.subr.mxu0 0.0
        %880 = vmatpush1.xpose.msra.mxu0 0.0
        %881 = vmatprep.subr.mxu0 0.0
        %882 = vmatpush1.xpose.msra.mxu0 0.0
        %883 = vmatprep.subr.mxu0 0.0
        %884 = vmatpush1.xpose.msra.mxu0 0.0
        %885 = vmatprep.subr.mxu0 0.0
        %886 = vmatpush1.xpose.msra.mxu0 0.0
        %887 = vmatprep.subr.mxu0 0.0
        %888 = vmatpush1.xpose.msra.mxu0 0.0
        %889 = vmatprep.subr.mxu0 0.0
        %890 = vmatpush1.xpose.msra.mxu0 0.0
        %891 = vmatprep.subr.mxu0 0.0
        %892 = vmatpush1.xpose.msra.mxu0 0.0
        %893 = vmatprep.subr.mxu0 0.0
        %894 = vmatpush1.xpose.msra.mxu0 0.0
        %895 = vmatprep.subr.mxu0 0.0
        %896 = vmatpush1.xpose.msra.mxu0 0.0
        %897 = vmatprep.subr.mxu0 0.0
        %898 = vmatpush1.xpose.msra.mxu0 0.0
        %899 = vmatprep.subr.mxu0 0.0
        %900 = vmatpush1.xpose.msra.mxu0 0.0
        %901 = vmatprep.subr.mxu0 0.0
        %902 = vmatpush1.xpose.msra.mxu0 0.0
        %903 = vmatprep.subr.mxu0 0.0
        %904 = vmatpush1.xpose.msra.mxu0 %v871
        %905 = vmatprep.subr.mxu0 0.0
        %906 = vmatpush2.xpose.msra.mxu0 0.0
        %907 = vmatprep.subr.mxu0 0.0
        %908 = vmatpush2.xpose.msra.mxu0 0.0
        %909 = vmatprep.subr.mxu0 0.0
        %910 = vmatpush2.xpose.msra.mxu0 0.0
        %911 = vmatprep.subr.mxu0 0.0
        %912 = vmatpush2.xpose.msra.mxu0 0.0
        %913 = vmatprep.subr.mxu0 0.0
        %914 = vmatpush2.xpose.msra.mxu0 0.0
        %915 = vmatprep.subr.mxu0 0.0
        %916 = vmatpush2.xpose.msra.mxu0 0.0
        %917 = vmatprep.subr.mxu0 0.0
        %918 = vmatpush2.xpose.msra.mxu0 0.0
        %919 = vmatprep.subr.mxu0 0.0
        %920 = vmatpush2.xpose.msra.mxu0 0.0
        %921 = vmatprep.subr.mxu0 0.0
        %922 = vmatpush2.xpose.msra.mxu0 0.0
        %923 = vmatprep.subr.mxu0 0.0
        %924 = vmatpush2.xpose.msra.mxu0 0.0
        %925 = vmatprep.subr.mxu0 0.0
        %926 = vmatpush2.xpose.msra.mxu0 0.0
        %927 = vmatprep.subr.mxu0 0.0
        %928 = vmatpush2.xpose.msra.mxu0 0.0
        %929 = vmatprep.subr.mxu0 0.0
        %930 = vmatpush2.xpose.msra.mxu0 0.0
        %931 = vmatprep.subr.mxu0 0.0
        %932 = vmatpush2.xpose.msra.mxu0 0.0
        %933 = vmatprep.subr.mxu0 0.0
        %934 = vmatpush2.xpose.msra.mxu0 0.0
        %935 = vmatprep.subr.mxu0 0.0
        %936 = vmatpush2.xpose.msra.mxu0 0.0
        %937 = vmatprep.mubr.f32.mxu0 0.0
        %938 = vmatmul.mubr.f32.gmra.mxu0 %v869
        %v939 = vpop.f32.mrf.mxu0
        %v940 = vadd.f32 %v712, %v939
        %v941 = vpop.f32.mrf.mxu0
        %942 = vdwg.mxu0
        %943 = vrot.lane.b32.xlu0 %v707, 96
        %v944 = vpop.permute.xlu0 %943
        %v945 = vsel %vm716, %v707, 0
        %v947 = vsel %vm716, %v944, 0
        %949 = vmatprep.subr.mxu0 0.0
        %950 = vmatpush1.xpose.msra.mxu0 0.0
        %951 = vmatprep.subr.mxu0 0.0
        %952 = vmatpush1.xpose.msra.mxu0 0.0
        %953 = vmatprep.subr.mxu0 0.0
        %954 = vmatpush1.xpose.msra.mxu0 0.0
        %955 = vmatprep.subr.mxu0 0.0
        %956 = vmatpush1.xpose.msra.mxu0 0.0
        %957 = vmatprep.subr.mxu0 0.0
        %958 = vmatpush1.xpose.msra.mxu0 0.0
        %959 = vmatprep.subr.mxu0 0.0
        %960 = vmatpush1.xpose.msra.mxu0 0.0
        %961 = vmatprep.subr.mxu0 0.0
        %962 = vmatpush1.xpose.msra.mxu0 0.0
        %963 = vmatprep.subr.mxu0 0.0
        %964 = vmatpush1.xpose.msra.mxu0 0.0
        %965 = vmatprep.subr.mxu0 0.0
        %966 = vmatpush1.xpose.msra.mxu0 0.0
        %967 = vmatprep.subr.mxu0 0.0
        %968 = vmatpush1.xpose.msra.mxu0 0.0
        %969 = vmatprep.subr.mxu0 0.0
        %970 = vmatpush1.xpose.msra.mxu0 0.0
        %971 = vmatprep.subr.mxu0 0.0
        %972 = vmatpush1.xpose.msra.mxu0 0.0
        %973 = vmatprep.subr.mxu0 0.0
        %974 = vmatpush1.xpose.msra.mxu0 0.0
        %975 = vmatprep.subr.mxu0 0.0
        %976 = vmatpush1.xpose.msra.mxu0 0.0
        %977 = vmatprep.subr.mxu0 0.0
        %978 = vmatpush1.xpose.msra.mxu0 0.0
        %979 = vmatprep.subr.mxu0 0.0
        %980 = vmatpush1.xpose.msra.mxu0 %v947
        %981 = vmatprep.subr.mxu0 0.0
        %982 = vmatpush2.xpose.msra.mxu0 0.0
        %983 = vmatprep.subr.mxu0 0.0
        %984 = vmatpush2.xpose.msra.mxu0 0.0
        %985 = vmatprep.subr.mxu0 0.0
        %986 = vmatpush2.xpose.msra.mxu0 0.0
        %987 = vmatprep.subr.mxu0 0.0
        %988 = vmatpush2.xpose.msra.mxu0 0.0
        %989 = vmatprep.subr.mxu0 0.0
        %990 = vmatpush2.xpose.msra.mxu0 0.0
        %991 = vmatprep.subr.mxu0 0.0
        %992 = vmatpush2.xpose.msra.mxu0 0.0
        %993 = vmatprep.subr.mxu0 0.0
        %994 = vmatpush2.xpose.msra.mxu0 0.0
        %995 = vmatprep.subr.mxu0 0.0
        %996 = vmatpush2.xpose.msra.mxu0 0.0
        %997 = vmatprep.subr.mxu0 0.0
        %998 = vmatpush2.xpose.msra.mxu0 0.0
        %999 = vmatprep.subr.mxu0 0.0
        %1000 = vmatpush2.xpose.msra.mxu0 0.0
        %1001 = vmatprep.subr.mxu0 0.0
        %1002 = vmatpush2.xpose.msra.mxu0 0.0
        %1003 = vmatprep.subr.mxu0 0.0
        %1004 = vmatpush2.xpose.msra.mxu0 0.0
        %1005 = vmatprep.subr.mxu0 0.0
        %1006 = vmatpush2.xpose.msra.mxu0 0.0
        %1007 = vmatprep.subr.mxu0 0.0
        %1008 = vmatpush2.xpose.msra.mxu0 0.0
        %1009 = vmatprep.subr.mxu0 0.0
        %1010 = vmatpush2.xpose.msra.mxu0 0.0
        %1011 = vmatprep.subr.mxu0 0.0
        %1012 = vmatpush2.xpose.msra.mxu0 0.0
        %1013 = vmatprep.mubr.f32.mxu0 0.0
        %1014 = vmatmul.mubr.f32.gmra.mxu0 %v945
        %v1015 = vpop.f32.mrf.mxu0
        %v1016 = vadd.f32 %v712, %v1015
        %v1017 = vpop.f32.mrf.mxu0
        %1018 = vdwg.mxu0
        %v1019 = vsel %vm716, %v788, -inf
        %1020 = vmax.xlane.f32.xlu0 %v1019
        %v1021 = vpop.xlane.xlu0 %1020
        %v1022 = vsel %vm716, %v864, -inf
        %1023 = vmax.xlane.f32.xlu0 %v1022
        %v1024 = vpop.xlane.xlu0 %1023
        %v1025 = vsel %vm716, %v940, -inf
        %1026 = vmax.xlane.f32.xlu0 %v1025
        %v1027 = vpop.xlane.xlu0 %1026
        %v1028 = vsel %vm716, %v1016, -inf
        %1029 = vmax.xlane.f32.xlu0 %v1028
        %v1030 = vpop.xlane.xlu0 %1029
        %v1031 = vsub.f32 %v788, %v1021
        %v1032 = vsub.f32 %v864, %v1024
        %v1033 = vsub.f32 %v940, %v1027
        %v1034 = vsub.f32 %v1016, %v1030
        %v1035 = vmul.f32 %v1031, 1.442695
        %v1036 = vpow.pop %v1035
        %v1037 = vmul.f32 %v1032, 1.442695
        %v1038 = vpow.pop %v1037
        %v1039 = vmul.f32 %v1033, 1.442695
        %v1040 = vpow.pop %v1039
        %v1041 = vmul.f32 %v1034, 1.442695
        %v1042 = vpow.pop %v1041
        %v1043 = vsel %vm716, %v1036, 0.0
        %1044 = vadd.xlane.f32.xlu0 %v1043
        %v1045 = vpop.xlane.xlu0 %1044
        %v1046 = vsel %vm716, %v1038, 0.0
        %1047 = vadd.xlane.f32.xlu0 %v1046
        %v1048 = vpop.xlane.xlu0 %1047
        %v1049 = vsel %vm716, %v1040, 0.0
        %1050 = vadd.xlane.f32.xlu0 %v1049
        %v1051 = vpop.xlane.xlu0 %1050
        %v1052 = vsel %vm716, %v1042, 0.0
        %1053 = vadd.xlane.f32.xlu0 %v1052
        %v1054 = vpop.xlane.xlu0 %1053
        %v1055 = vrcp.pop %v1045
        %v1056 = vrcp.pop %v1048
        %v1057 = vrcp.pop %v1051
        %v1058 = vrcp.pop %v1054
        %v1059 = vmul.f32 %v1036, %v1055
        %v1060 = vmul.f32 %v1038, %v1056
        %v1061 = vmul.f32 %v1040, %v1057
        %v1062 = vmul.f32 %v1042, %v1058
        %1063 = vrot.lane.b32.xlu0 %v698, 64
        %v1064 = vpop.permute.xlu0 %1063
        %v1067 = vsel %vm716, %v1059, 0
        %1069 = vmatprep.subr.mxu0 0.0
        %1070 = vmatpush1.msra.mxu0 0.0
        %1071 = vmatprep.subr.mxu0 0.0
        %1072 = vmatpush1.msra.mxu0 0.0
        %1073 = vmatprep.subr.mxu0 0.0
        %1074 = vmatpush1.msra.mxu0 0.0
        %1075 = vmatprep.subr.mxu0 0.0
        %1076 = vmatpush1.msra.mxu0 0.0
        %1077 = vmatprep.subr.mxu0 0.0
        %1078 = vmatpush1.msra.mxu0 0.0
        %1079 = vmatprep.subr.mxu0 0.0
        %1080 = vmatpush1.msra.mxu0 0.0
        %1081 = vmatprep.subr.mxu0 0.0
        %1082 = vmatpush1.msra.mxu0 0.0
        %1083 = vmatprep.subr.mxu0 0.0
        %1084 = vmatpush1.msra.mxu0 0.0
        %1085 = vmatprep.subr.mxu0 0.0
        %1086 = vmatpush1.msra.mxu0 0.0
        %1087 = vmatprep.subr.mxu0 0.0
        %1088 = vmatpush1.msra.mxu0 0.0
        %1089 = vmatprep.subr.mxu0 0.0
        %1090 = vmatpush1.msra.mxu0 0.0
        %1091 = vmatprep.subr.mxu0 0.0
        %1092 = vmatpush1.msra.mxu0 0.0
        %1093 = vmatprep.subr.mxu0 0.0
        %1094 = vmatpush1.msra.mxu0 0.0
        %1095 = vmatprep.subr.mxu0 0.0
        %1096 = vmatpush1.msra.mxu0 0.0
        %1097 = vmatprep.subr.mxu0 0.0
        %1098 = vmatpush1.msra.mxu0 0.0
        %1099 = vmatprep.subr.mxu0 0.0
        %1100 = vmatpush1.msra.mxu0 %v1064
        %1101 = vmatprep.subr.mxu0 0.0
        %1102 = vmatpush2.msra.mxu0 0.0
        %1103 = vmatprep.subr.mxu0 0.0
        %1104 = vmatpush2.msra.mxu0 0.0
        %1105 = vmatprep.subr.mxu0 0.0
        %1106 = vmatpush2.msra.mxu0 0.0
        %1107 = vmatprep.subr.mxu0 0.0
        %1108 = vmatpush2.msra.mxu0 0.0
        %1109 = vmatprep.subr.mxu0 0.0
        %1110 = vmatpush2.msra.mxu0 0.0
        %1111 = vmatprep.subr.mxu0 0.0
        %1112 = vmatpush2.msra.mxu0 0.0
        %1113 = vmatprep.subr.mxu0 0.0
        %1114 = vmatpush2.msra.mxu0 0.0
        %1115 = vmatprep.subr.mxu0 0.0
        %1116 = vmatpush2.msra.mxu0 0.0
        %1117 = vmatprep.subr.mxu0 0.0
        %1118 = vmatpush2.msra.mxu0 0.0
        %1119 = vmatprep.subr.mxu0 0.0
        %1120 = vmatpush2.msra.mxu0 0.0
        %1121 = vmatprep.subr.mxu0 0.0
        %1122 = vmatpush2.msra.mxu0 0.0
        %1123 = vmatprep.subr.mxu0 0.0
        %1124 = vmatpush2.msra.mxu0 0.0
        %1125 = vmatprep.subr.mxu0 0.0
        %1126 = vmatpush2.msra.mxu0 0.0
        %1127 = vmatprep.subr.mxu0 0.0
        %1128 = vmatpush2.msra.mxu0 0.0
        %1129 = vmatprep.subr.mxu0 0.0
        %1130 = vmatpush2.msra.mxu0 0.0
        %1131 = vmatprep.subr.mxu0 0.0
        %1132 = vmatpush2.msra.mxu0 0.0
        %1133 = vmatprep.mubr.f32.mxu0 0.0
        %1134 = vmatmul.mubr.f32.gmra.mxu0 %v1067
        %v1135 = vpop.f32.mrf.mxu0
        %v1136 = vadd.f32 0.0, %v1135
        %v1137 = vpop.f32.mrf.mxu0
        %1138 = vdwg.mxu0
        %1139 = vrot.lane.b32.xlu0 %v703, 64
        %v1140 = vpop.permute.xlu0 %1139
        %v1143 = vsel %vm716, %v1060, 0
        %1145 = vmatprep.subr.mxu0 0.0
        %1146 = vmatpush1.msra.mxu0 0.0
        %1147 = vmatprep.subr.mxu0 0.0
        %1148 = vmatpush1.msra.mxu0 0.0
        %1149 = vmatprep.subr.mxu0 0.0
        %1150 = vmatpush1.msra.mxu0 0.0
        %1151 = vmatprep.subr.mxu0 0.0
        %1152 = vmatpush1.msra.mxu0 0.0
        %1153 = vmatprep.subr.mxu0 0.0
        %1154 = vmatpush1.msra.mxu0 0.0
        %1155 = vmatprep.subr.mxu0 0.0
        %1156 = vmatpush1.msra.mxu0 0.0
        %1157 = vmatprep.subr.mxu0 0.0
        %1158 = vmatpush1.msra.mxu0 0.0
        %1159 = vmatprep.subr.mxu0 0.0
        %1160 = vmatpush1.msra.mxu0 0.0
        %1161 = vmatprep.subr.mxu0 0.0
        %1162 = vmatpush1.msra.mxu0 0.0
        %1163 = vmatprep.subr.mxu0 0.0
        %1164 = vmatpush1.msra.mxu0 0.0
        %1165 = vmatprep.subr.mxu0 0.0
        %1166 = vmatpush1.msra.mxu0 0.0
        %1167 = vmatprep.subr.mxu0 0.0
        %1168 = vmatpush1.msra.mxu0 0.0
        %1169 = vmatprep.subr.mxu0 0.0
        %1170 = vmatpush1.msra.mxu0 0.0
        %1171 = vmatprep.subr.mxu0 0.0
        %1172 = vmatpush1.msra.mxu0 0.0
        %1173 = vmatprep.subr.mxu0 0.0
        %1174 = vmatpush1.msra.mxu0 0.0
        %1175 = vmatprep.subr.mxu0 0.0
        %1176 = vmatpush1.msra.mxu0 %v1140
        %1177 = vmatprep.subr.mxu0 0.0
        %1178 = vmatpush2.msra.mxu0 0.0
        %1179 = vmatprep.subr.mxu0 0.0
        %1180 = vmatpush2.msra.mxu0 0.0
        %1181 = vmatprep.subr.mxu0 0.0
        %1182 = vmatpush2.msra.mxu0 0.0
        %1183 = vmatprep.subr.mxu0 0.0
        %1184 = vmatpush2.msra.mxu0 0.0
        %1185 = vmatprep.subr.mxu0 0.0
        %1186 = vmatpush2.msra.mxu0 0.0
        %1187 = vmatprep.subr.mxu0 0.0
        %1188 = vmatpush2.msra.mxu0 0.0
        %1189 = vmatprep.subr.mxu0 0.0
        %1190 = vmatpush2.msra.mxu0 0.0
        %1191 = vmatprep.subr.mxu0 0.0
        %1192 = vmatpush2.msra.mxu0 0.0
        %1193 = vmatprep.subr.mxu0 0.0
        %1194 = vmatpush2.msra.mxu0 0.0
        %1195 = vmatprep.subr.mxu0 0.0
        %1196 = vmatpush2.msra.mxu0 0.0
        %1197 = vmatprep.subr.mxu0 0.0
        %1198 = vmatpush2.msra.mxu0 0.0
        %1199 = vmatprep.subr.mxu0 0.0
        %1200 = vmatpush2.msra.mxu0 0.0
        %1201 = vmatprep.subr.mxu0 0.0
        %1202 = vmatpush2.msra.mxu0 0.0
        %1203 = vmatprep.subr.mxu0 0.0
        %1204 = vmatpush2.msra.mxu0 0.0
        %1205 = vmatprep.subr.mxu0 0.0
        %1206 = vmatpush2.msra.mxu0 0.0
        %1207 = vmatprep.subr.mxu0 0.0
        %1208 = vmatpush2.msra.mxu0 0.0
        %1209 = vmatprep.mubr.f32.mxu0 0.0
        %1210 = vmatmul.mubr.f32.gmra.mxu0 %v1143
        %v1211 = vpop.f32.mrf.mxu0
        %v1212 = vadd.f32 0.0, %v1211
        %v1213 = vpop.f32.mrf.mxu0
        %1214 = vdwg.mxu0
        %1215 = vrot.lane.b32.xlu0 %v705, 64
        %v1216 = vpop.permute.xlu0 %1215
        %v1219 = vsel %vm716, %v1061, 0
        %1221 = vmatprep.subr.mxu0 0.0
        %1222 = vmatpush1.msra.mxu0 0.0
        %1223 = vmatprep.subr.mxu0 0.0
        %1224 = vmatpush1.msra.mxu0 0.0
        %1225 = vmatprep.subr.mxu0 0.0
        %1226 = vmatpush1.msra.mxu0 0.0
        %1227 = vmatprep.subr.mxu0 0.0
        %1228 = vmatpush1.msra.mxu0 0.0
        %1229 = vmatprep.subr.mxu0 0.0
        %1230 = vmatpush1.msra.mxu0 0.0
        %1231 = vmatprep.subr.mxu0 0.0
        %1232 = vmatpush1.msra.mxu0 0.0
        %1233 = vmatprep.subr.mxu0 0.0
        %1234 = vmatpush1.msra.mxu0 0.0
        %1235 = vmatprep.subr.mxu0 0.0
        %1236 = vmatpush1.msra.mxu0 0.0
        %1237 = vmatprep.subr.mxu0 0.0
        %1238 = vmatpush1.msra.mxu0 0.0
        %1239 = vmatprep.subr.mxu0 0.0
        %1240 = vmatpush1.msra.mxu0 0.0
        %1241 = vmatprep.subr.mxu0 0.0
        %1242 = vmatpush1.msra.mxu0 0.0
        %1243 = vmatprep.subr.mxu0 0.0
        %1244 = vmatpush1.msra.mxu0 0.0
        %1245 = vmatprep.subr.mxu0 0.0
        %1246 = vmatpush1.msra.mxu0 0.0
        %1247 = vmatprep.subr.mxu0 0.0
        %1248 = vmatpush1.msra.mxu0 0.0
        %1249 = vmatprep.subr.mxu0 0.0
        %1250 = vmatpush1.msra.mxu0 0.0
        %1251 = vmatprep.subr.mxu0 0.0
        %1252 = vmatpush1.msra.mxu0 %v1216
        %1253 = vmatprep.subr.mxu0 0.0
        %1254 = vmatpush2.msra.mxu0 0.0
        %1255 = vmatprep.subr.mxu0 0.0
        %1256 = vmatpush2.msra.mxu0 0.0
        %1257 = vmatprep.subr.mxu0 0.0
        %1258 = vmatpush2.msra.mxu0 0.0
        %1259 = vmatprep.subr.mxu0 0.0
        %1260 = vmatpush2.msra.mxu0 0.0
        %1261 = vmatprep.subr.mxu0 0.0
        %1262 = vmatpush2.msra.mxu0 0.0
        %1263 = vmatprep.subr.mxu0 0.0
        %1264 = vmatpush2.msra.mxu0 0.0
        %1265 = vmatprep.subr.mxu0 0.0
        %1266 = vmatpush2.msra.mxu0 0.0
        %1267 = vmatprep.subr.mxu0 0.0
        %1268 = vmatpush2.msra.mxu0 0.0
        %1269 = vmatprep.subr.mxu0 0.0
        %1270 = vmatpush2.msra.mxu0 0.0
        %1271 = vmatprep.subr.mxu0 0.0
        %1272 = vmatpush2.msra.mxu0 0.0
        %1273 = vmatprep.subr.mxu0 0.0
        %1274 = vmatpush2.msra.mxu0 0.0
        %1275 = vmatprep.subr.mxu0 0.0
        %1276 = vmatpush2.msra.mxu0 0.0
        %1277 = vmatprep.subr.mxu0 0.0
        %1278 = vmatpush2.msra.mxu0 0.0
        %1279 = vmatprep.subr.mxu0 0.0
        %1280 = vmatpush2.msra.mxu0 0.0
        %1281 = vmatprep.subr.mxu0 0.0
        %1282 = vmatpush2.msra.mxu0 0.0
        %1283 = vmatprep.subr.mxu0 0.0
        %1284 = vmatpush2.msra.mxu0 0.0
        %1285 = vmatprep.mubr.f32.mxu0 0.0
        %1286 = vmatmul.mubr.f32.gmra.mxu0 %v1219
        %v1287 = vpop.f32.mrf.mxu0
        %v1288 = vadd.f32 0.0, %v1287
        %v1289 = vpop.f32.mrf.mxu0
        %1290 = vdwg.mxu0
        %1291 = vrot.lane.b32.xlu0 %v707, 64
        %v1292 = vpop.permute.xlu0 %1291
        %v1295 = vsel %vm716, %v1062, 0
        %1297 = vmatprep.subr.mxu0 0.0
        %1298 = vmatpush1.msra.mxu0 0.0
        %1299 = vmatprep.subr.mxu0 0.0
        %1300 = vmatpush1.msra.mxu0 0.0
        %1301 = vmatprep.subr.mxu0 0.0
        %1302 = vmatpush1.msra.mxu0 0.0
        %1303 = vmatprep.subr.mxu0 0.0
        %1304 = vmatpush1.msra.mxu0 0.0
        %1305 = vmatprep.subr.mxu0 0.0
        %1306 = vmatpush1.msra.mxu0 0.0
        %1307 = vmatprep.subr.mxu0 0.0
        %1308 = vmatpush1.msra.mxu0 0.0
        %1309 = vmatprep.subr.mxu0 0.0
        %1310 = vmatpush1.msra.mxu0 0.0
        %1311 = vmatprep.subr.mxu0 0.0
        %1312 = vmatpush1.msra.mxu0 0.0
        %1313 = vmatprep.subr.mxu0 0.0
        %1314 = vmatpush1.msra.mxu0 0.0
        %1315 = vmatprep.subr.mxu0 0.0
        %1316 = vmatpush1.msra.mxu0 0.0
        %1317 = vmatprep.subr.mxu0 0.0
        %1318 = vmatpush1.msra.mxu0 0.0
        %1319 = vmatprep.subr.mxu0 0.0
        %1320 = vmatpush1.msra.mxu0 0.0
        %1321 = vmatprep.subr.mxu0 0.0
        %1322 = vmatpush1.msra.mxu0 0.0
        %1323 = vmatprep.subr.mxu0 0.0
        %1324 = vmatpush1.msra.mxu0 0.0
        %1325 = vmatprep.subr.mxu0 0.0
        %1326 = vmatpush1.msra.mxu0 0.0
        %1327 = vmatprep.subr.mxu0 0.0
        %1328 = vmatpush1.msra.mxu0 %v1292
        %1329 = vmatprep.subr.mxu0 0.0
        %1330 = vmatpush2.msra.mxu0 0.0
        %1331 = vmatprep.subr.mxu0 0.0
        %1332 = vmatpush2.msra.mxu0 0.0
        %1333 = vmatprep.subr.mxu0 0.0
        %1334 = vmatpush2.msra.mxu0 0.0
        %1335 = vmatprep.subr.mxu0 0.0
        %1336 = vmatpush2.msra.mxu0 0.0
        %1337 = vmatprep.subr.mxu0 0.0
        %1338 = vmatpush2.msra.mxu0 0.0
        %1339 = vmatprep.subr.mxu0 0.0
        %1340 = vmatpush2.msra.mxu0 0.0
        %1341 = vmatprep.subr.mxu0 0.0
        %1342 = vmatpush2.msra.mxu0 0.0
        %1343 = vmatprep.subr.mxu0 0.0
        %1344 = vmatpush2.msra.mxu0 0.0
        %1345 = vmatprep.subr.mxu0 0.0
        %1346 = vmatpush2.msra.mxu0 0.0
        %1347 = vmatprep.subr.mxu0 0.0
        %1348 = vmatpush2.msra.mxu0 0.0
        %1349 = vmatprep.subr.mxu0 0.0
        %1350 = vmatpush2.msra.mxu0 0.0
        %1351 = vmatprep.subr.mxu0 0.0
        %1352 = vmatpush2.msra.mxu0 0.0
        %1353 = vmatprep.subr.mxu0 0.0
        %1354 = vmatpush2.msra.mxu0 0.0
        %1355 = vmatprep.subr.mxu0 0.0
        %1356 = vmatpush2.msra.mxu0 0.0
        %1357 = vmatprep.subr.mxu0 0.0
        %1358 = vmatpush2.msra.mxu0 0.0
        %1359 = vmatprep.subr.mxu0 0.0
        %1360 = vmatpush2.msra.mxu0 0.0
        %1361 = vmatprep.mubr.f32.mxu0 0.0
        %1362 = vmatmul.mubr.f32.gmra.mxu0 %v1295
        %v1363 = vpop.f32.mrf.mxu0
        %v1364 = vadd.f32 0.0, %v1363
        %v1365 = vpop.f32.mrf.mxu0
        %1366 = vdwg.mxu0
        %1368 = vrot.lane.b32.xlu0 %v1212, 8
        %v1369 = vpop.permute.xlu0 %1368
        %1372 = vrot.lane.b32.xlu0 %v1288, 16
        %v1373 = vpop.permute.xlu0 %1372
        %1376 = vrot.lane.b32.xlu0 %v1364, 24
        %v1377 = vpop.permute.xlu0 %1376
        %v1379 = vsel %vm716, %v1136, %v1369
        %vm1380 = vcmask 130048
        %v1381 = vsel %vm1380, %v1379, %v1373
        %vm1382 = vcmask 195584
        %v1383 = vsel %vm1382, %v1381, %v1377
        %v1384 = vld [vmem:[%s6] sm:$0xff]
        %v1385 = vld [vmem:[%s6 + $0x8] sm:$0xff]
        %v1386 = vld [vmem:[%s6 + $0x10] sm:$0xff]
        %v1387 = vld [vmem:[%s6 + $0x18] sm:$0xff]
        %v1388 = vld [vmem:[%s7] sm:$0x1]
        %v1390 = vlaneseq
        %v1391 = vshrl.u32 %v1390, 7
        %v1392 = vsub.s32 0, %v1391
        %v1393 = vrot.slane %v1388, %v1392
        %v1396 = vsel %vm588, %v1383, 0
        %1398 = vmatprep.subr.mxu0 0.0
        %1399 = vmatpush1.msra.mxu0 0.0
        %1400 = vmatprep.subr.mxu0 0.0
        %1401 = vmatpush1.msra.mxu0 0.0
        %1402 = vmatprep.subr.mxu0 0.0
        %1403 = vmatpush1.msra.mxu0 0.0
        %1404 = vmatprep.subr.mxu0 0.0
        %1405 = vmatpush1.msra.mxu0 0.0
        %1406 = vmatprep.subr.mxu0 0.0
        %1407 = vmatpush1.msra.mxu0 0.0
        %1408 = vmatprep.subr.mxu0 0.0
        %1409 = vmatpush1.msra.mxu0 0.0
        %1410 = vmatprep.subr.mxu0 0.0
        %1411 = vmatpush1.msra.mxu0 0.0
        %1412 = vmatprep.subr.mxu0 0.0
        %1413 = vmatpush1.msra.mxu0 0.0
        %1414 = vmatprep.subr.mxu0 0.0
        %1415 = vmatpush1.msra.mxu0 0.0
        %1416 = vmatprep.subr.mxu0 0.0
        %1417 = vmatpush1.msra.mxu0 0.0
        %1418 = vmatprep.subr.mxu0 0.0
        %1419 = vmatpush1.msra.mxu0 0.0
        %1420 = vmatprep.subr.mxu0 0.0
        %1421 = vmatpush1.msra.mxu0 0.0
        %1422 = vmatprep.subr.mxu0 0.0
        %1423 = vmatpush1.msra.mxu0 %v1387
        %1424 = vmatprep.subr.mxu0 0.0
        %1425 = vmatpush1.msra.mxu0 %v1386
        %1426 = vmatprep.subr.mxu0 0.0
        %1427 = vmatpush1.msra.mxu0 %v1385
        %1428 = vmatprep.subr.mxu0 0.0
        %1429 = vmatpush1.msra.mxu0 %v1384
        %1430 = vmatprep.subr.mxu0 0.0
        %1431 = vmatpush2.msra.mxu0 0.0
        %1432 = vmatprep.subr.mxu0 0.0
        %1433 = vmatpush2.msra.mxu0 0.0
        %1434 = vmatprep.subr.mxu0 0.0
        %1435 = vmatpush2.msra.mxu0 0.0
        %1436 = vmatprep.subr.mxu0 0.0
        %1437 = vmatpush2.msra.mxu0 0.0
        %1438 = vmatprep.subr.mxu0 0.0
        %1439 = vmatpush2.msra.mxu0 0.0
        %1440 = vmatprep.subr.mxu0 0.0
        %1441 = vmatpush2.msra.mxu0 0.0
        %1442 = vmatprep.subr.mxu0 0.0
        %1443 = vmatpush2.msra.mxu0 0.0
        %1444 = vmatprep.subr.mxu0 0.0
        %1445 = vmatpush2.msra.mxu0 0.0
        %1446 = vmatprep.subr.mxu0 0.0
        %1447 = vmatpush2.msra.mxu0 0.0
        %1448 = vmatprep.subr.mxu0 0.0
        %1449 = vmatpush2.msra.mxu0 0.0
        %1450 = vmatprep.subr.mxu0 0.0
        %1451 = vmatpush2.msra.mxu0 0.0
        %1452 = vmatprep.subr.mxu0 0.0
        %1453 = vmatpush2.msra.mxu0 0.0
        %1454 = vmatprep.subr.mxu0 0.0
        %1455 = vmatpush2.msra.mxu0 0.0
        %1456 = vmatprep.subr.mxu0 0.0
        %1457 = vmatpush2.msra.mxu0 0.0
        %1458 = vmatprep.subr.mxu0 0.0
        %1459 = vmatpush2.msra.mxu0 0.0
        %1460 = vmatprep.subr.mxu0 0.0
        %1461 = vmatpush2.msra.mxu0 0.0
        %1462 = vmatprep.mubr.f32.mxu0 0.0
        %1463 = vmatmul.mubr.f32.gmra.mxu0 %v1396
        %v1464 = vpop.f32.mrf.mxu0
        %v1465 = vadd.f32 %v1393, %v1464
        %v1466 = vpop.f32.mrf.mxu0
        %1467 = vdwg.mxu0
        %v1468 = vadd.f32 %v1465, %v616
        %v1469 = vld [vmem:[%s8] sm:$0x1]
        %v1470 = vld [vmem:[%s9] sm:$0x1]
        %v1471 = vsel %vm588, %v1468, 0.0
        %1472 = vadd.xlane.f32.xlu0 %v1471
        %v1473 = vpop.xlane.xlu0 %1472
        %v1474 = vmul.f32 %v1473, %v592
        %v1475 = vsub.f32 %v1468, %v1474
        %v1476 = vmul.f32 %v1475, %v1475
        %v1477 = vsel %vm588, %v1476, 0.0
        %1478 = vadd.xlane.f32.xlu0 %v1477
        %v1479 = vpop.xlane.xlu0 %1478
        %v1480 = vmul.f32 %v1479, %v592
        %v1481 = vadd.f32 %v1480, 1e-12
        %v1482 = vrsqrt.pop %v1481
        %v1483 = vmul.f32 %v1475, %v1482
        %v1485 = vlaneseq
        %v1486 = vshrl.u32 %v1485, 7
        %v1487 = vsub.s32 0, %v1486
        %v1488 = vrot.slane %v1469, %v1487
        %v1490 = vmul.f32 %v1483, %v1488
        %v1492 = vlaneseq
        %v1493 = vshrl.u32 %v1492, 7
        %v1494 = vsub.s32 0, %v1493
        %v1495 = vrot.slane %v1470, %v1494
        %v1497 = vadd.f32 %v1490, %v1495
        %v1498 = vld [vmem:[%s10] sm:$0xff]
        %v1499 = vld [vmem:[%s10 + $0x8] sm:$0xff]
        %v1500 = vld [vmem:[%s10 + $0x10] sm:$0xff]
        %v1501 = vld [vmem:[%s10 + $0x18] sm:$0xff]
        %v1502 = vld [vmem:[%s11] sm:$0x1]
        %v1504 = vlaneseq
        %v1505 = vshrl.u32 %v1504, 7
        %v1506 = vsub.s32 0, %v1505
        %v1507 = vrot.slane %v1502, %v1506
        %v1510 = vsel %vm588, %v1497, 0
        %1512 = vmatprep.subr.mxu0 0.0
        %1513 = vmatpush1.msra.mxu0 0.0
        %1514 = vmatprep.subr.mxu0 0.0
        %1515 = vmatpush1.msra.mxu0 0.0
        %1516 = vmatprep.subr.mxu0 0.0
        %1517 = vmatpush1.msra.mxu0 0.0
        %1518 = vmatprep.subr.mxu0 0.0
        %1519 = vmatpush1.msra.mxu0 0.0
        %1520 = vmatprep.subr.mxu0 0.0
        %1521 = vmatpush1.msra.mxu0 0.0
        %1522 = vmatprep.subr.mxu0 0.0
        %1523 = vmatpush1.msra.mxu0 0.0
        %1524 = vmatprep.subr.mxu0 0.0
        %1525 = vmatpush1.msra.mxu0 0.0
        %1526 = vmatprep.subr.mxu0 0.0
        %1527 = vmatpush1.msra.mxu0 0.0
        %1528 = vmatprep.subr.mxu0 0.0
        %1529 = vmatpush1.msra.mxu0 0.0
        %1530 = vmatprep.subr.mxu0 0.0
        %1531 = vmatpush1.msra.mxu0 0.0
        %1532 = vmatprep.subr.mxu0 0.0
        %1533 = vmatpush1.msra.mxu0 0.0
        %1534 = vmatprep.subr.mxu0 0.0
        %1535 = vmatpush1.msra.mxu0 0.0
        %1536 = vmatprep.subr.mxu0 0.0
        %1537 = vmatpush1.msra.mxu0 %v1501
        %1538 = vmatprep.subr.mxu0 0.0
        %1539 = vmatpush1.msra.mxu0 %v1500
        %1540 = vmatprep.subr.mxu0 0.0
        %1541 = vmatpush1.msra.mxu0 %v1499
        %1542 = vmatprep.subr.mxu0 0.0
        %1543 = vmatpush1.msra.mxu0 %v1498
        %1544 = vmatprep.subr.mxu0 0.0
        %1545 = vmatpush2.msra.mxu0 0.0
        %1546 = vmatprep.subr.mxu0 0.0
        %1547 = vmatpush2.msra.mxu0 0.0
        %1548 = vmatprep.subr.mxu0 0.0
        %1549 = vmatpush2.msra.mxu0 0.0
        %1550 = vmatprep.subr.mxu0 0.0
        %1551 = vmatpush2.msra.mxu0 0.0
        %1552 = vmatprep.subr.mxu0 0.0
        %1553 = vmatpush2.msra.mxu0 0.0
        %1554 = vmatprep.subr.mxu0 0.0
        %1555 = vmatpush2.msra.mxu0 0.0
        %1556 = vmatprep.subr.mxu0 0.0
        %1557 = vmatpush2.msra.mxu0 0.0
        %1558 = vmatprep.subr.mxu0 0.0
        %1559 = vmatpush2.msra.mxu0 0.0
        %1560 = vmatprep.subr.mxu0 0.0
        %1561 = vmatpush2.msra.mxu0 0.0
        %1562 = vmatprep.subr.mxu0 0.0
        %1563 = vmatpush2.msra.mxu0 0.0
        %1564 = vmatprep.subr.mxu0 0.0
        %1565 = vmatpush2.msra.mxu0 0.0
        %1566 = vmatprep.subr.mxu0 0.0
        %1567 = vmatpush2.msra.mxu0 0.0
        %1568 = vmatprep.subr.mxu0 0.0
        %1569 = vmatpush2.msra.mxu0 0.0
        %1570 = vmatprep.subr.mxu0 0.0
        %1571 = vmatpush2.msra.mxu0 0.0
        %1572 = vmatprep.subr.mxu0 0.0
        %1573 = vmatpush2.msra.mxu0 0.0
        %1574 = vmatprep.subr.mxu0 0.0
        %1575 = vmatpush2.msra.mxu0 0.0
        %1576 = vmatprep.mubr.f32.mxu0 0.0
        %1577 = vmatmul.mubr.f32.gmra.mxu0 %v1510
        %v1578 = vpop.f32.mrf.mxu0
        %v1579 = vadd.f32 %v1507, %v1578
        %v1580 = vpop.f32.mrf.mxu0
        %1581 = vdwg.mxu0
        %v1582 = vmul.f32 %v1579, 0.5
        %v1583 = vmul.f32 %v1579, 0.044715
        %v1584 = vmul.f32 %v1583, %v1579
        %v1585 = vmul.f32 %v1584, %v1579
        %v1586 = vadd.f32 %v1579, %v1585
        %v1587 = vmul.f32 %v1586, 0.7978846
        %v1588 = vtanh.pop %v1587
        %v1589 = vadd.f32 %v1588, 1.0
        %v1590 = vmul.f32 %v1582, %v1589
        %v1591 = vld [vmem:[%s12] sm:$0xff]
        %v1592 = vld [vmem:[%s12 + $0x8] sm:$0xff]
        %v1593 = vld [vmem:[%s12 + $0x10] sm:$0xff]
        %v1594 = vld [vmem:[%s12 + $0x18] sm:$0xff]
        %v1595 = vld [vmem:[%s12 + $0x20] sm:$0xff]
        %v1596 = vld [vmem:[%s12 + $0x28] sm:$0xff]
        %v1597 = vld [vmem:[%s12 + $0x30] sm:$0xff]
        %v1598 = vld [vmem:[%s12 + $0x38] sm:$0xff]
        %v1599 = vld [vmem:[%s13] sm:$0x1]
        %v1601 = vlaneseq
        %v1602 = vshrl.u32 %v1601, 7
        %v1603 = vsub.s32 0, %v1602
        %v1604 = vrot.slane %v1599, %v1603
        %vm1606 = vcmask 523264
        %v1608 = vsel %vm1606, %v1590, 0
        %1610 = vmatprep.subr.mxu0 0.0
        %1611 = vmatpush1.msra.mxu0 0.0
        %1612 = vmatprep.subr.mxu0 0.0
        %1613 = vmatpush1.msra.mxu0 0.0
        %1614 = vmatprep.subr.mxu0 0.0
        %1615 = vmatpush1.msra.mxu0 0.0
        %1616 = vmatprep.subr.mxu0 0.0
        %1617 = vmatpush1.msra.mxu0 0.0
        %1618 = vmatprep.subr.mxu0 0.0
        %1619 = vmatpush1.msra.mxu0 0.0
        %1620 = vmatprep.subr.mxu0 0.0
        %1621 = vmatpush1.msra.mxu0 0.0
        %1622 = vmatprep.subr.mxu0 0.0
        %1623 = vmatpush1.msra.mxu0 0.0
        %1624 = vmatprep.subr.mxu0 0.0
        %1625 = vmatpush1.msra.mxu0 0.0
        %1626 = vmatprep.subr.mxu0 0.0
        %1627 = vmatpush1.msra.mxu0 %v1598
        %1628 = vmatprep.subr.mxu0 0.0
        %1629 = vmatpush1.msra.mxu0 %v1597
        %1630 = vmatprep.subr.mxu0 0.0
        %1631 = vmatpush1.msra.mxu0 %v1596
        %1632 = vmatprep.subr.mxu0 0.0
        %1633 = vmatpush1.msra.mxu0 %v1595
        %1634 = vmatprep.subr.mxu0 0.0
        %1635 = vmatpush1.msra.mxu0 %v1594
        %1636 = vmatprep.subr.mxu0 0.0
        %1637 = vmatpush1.msra.mxu0 %v1593
        %1638 = vmatprep.subr.mxu0 0.0
        %1639 = vmatpush1.msra.mxu0 %v1592
        %1640 = vmatprep.subr.mxu0 0.0
        %1641 = vmatpush1.msra.mxu0 %v1591
        %1642 = vmatprep.subr.mxu0 0.0
        %1643 = vmatpush2.msra.mxu0 0.0
        %1644 = vmatprep.subr.mxu0 0.0
        %1645 = vmatpush2.msra.mxu0 0.0
        %1646 = vmatprep.subr.mxu0 0.0
        %1647 = vmatpush2.msra.mxu0 0.0
        %1648 = vmatprep.subr.mxu0 0.0
        %1649 = vmatpush2.msra.mxu0 0.0
        %1650 = vmatprep.subr.mxu0 0.0
        %1651 = vmatpush2.msra.mxu0 0.0
        %1652 = vmatprep.subr.mxu0 0.0
        %1653 = vmatpush2.msra.mxu0 0.0
        %1654 = vmatprep.subr.mxu0 0.0
        %1655 = vmatpush2.msra.mxu0 0.0
        %1656 = vmatprep.subr.mxu0 0.0
        %1657 = vmatpush2.msra.mxu0 0.0
        %1658 = vmatprep.subr.mxu0 0.0
        %1659 = vmatpush2.msra.mxu0 0.0
        %1660 = vmatprep.subr.mxu0 0.0
        %1661 = vmatpush2.msra.mxu0 0.0
        %1662 = vmatprep.subr.mxu0 0.0
        %1663 = vmatpush2.msra.mxu0 0.0
        %1664 = vmatprep.subr.mxu0 0.0
        %1665 = vmatpush2.msra.mxu0 0.0
        %1666 = vmatprep.subr.mxu0 0.0
        %1667 = vmatpush2.msra.mxu0 0.0
        %1668 = vmatprep.subr.mxu0 0.0
        %1669 = vmatpush2.msra.mxu0 0.0
        %1670 = vmatprep.subr.mxu0 0.0
        %1671 = vmatpush2.msra.mxu0 0.0
        %1672 = vmatprep.subr.mxu0 0.0
        %1673 = vmatpush2.msra.mxu0 0.0
        %1674 = vmatprep.mubr.f32.mxu0 0.0
        %1675 = vmatmul.mubr.f32.gmra.mxu0 %v1608
        %v1676 = vpop.f32.mrf.mxu0
        %v1677 = vadd.f32 %v1604, %v1676
        %v1678 = vpop.f32.mrf.mxu0
        %1679 = vdwg.mxu0
        %v1680 = vadd.f32 %v1677, %v1497
        %v1681 = vld [vmem:[%s14] sm:$0x1]
        %v1682 = vld [vmem:[%s15] sm:$0x1]
        %v1683 = vsel %vm588, %v1680, 0.0
        %1684 = vadd.xlane.f32.xlu0 %v1683
        %v1685 = vpop.xlane.xlu0 %1684
        %v1686 = vmul.f32 %v1685, %v592
        %v1687 = vsub.f32 %v1680, %v1686
        %v1688 = vmul.f32 %v1687, %v1687
        %v1689 = vsel %vm588, %v1688, 0.0
        %1690 = vadd.xlane.f32.xlu0 %v1689
        %v1691 = vpop.xlane.xlu0 %1690
        %v1692 = vmul.f32 %v1691, %v592
        %v1693 = vadd.f32 %v1692, 1e-12
        %v1694 = vrsqrt.pop %v1693
        %v1695 = vmul.f32 %v1687, %v1694
        %v1697 = vlaneseq
        %v1698 = vshrl.u32 %v1697, 7
        %v1699 = vsub.s32 0, %v1698
        %v1700 = vrot.slane %v1681, %v1699
        %v1702 = vmul.f32 %v1695, %v1700
        %v1704 = vlaneseq
        %v1705 = vshrl.u32 %v1704, 7
        %v1706 = vsub.s32 0, %v1705
        %v1707 = vrot.slane %v1682, %v1706
        %v1709 = vadd.f32 %v1702, %v1707
        %s1710 = scalar_lea.vmem %s4, 32
        %v1711 = vld [vmem:[%s1710] sm:$0xff]
        %v1712 = vld [vmem:[%s1710 + $0x8] sm:$0xff]
        %v1713 = vld [vmem:[%s1710 + $0x10] sm:$0xff]
        %v1714 = vld [vmem:[%s1710 + $0x18] sm:$0xff]
        %s1715 = scalar_lea.vmem %s5, 1
        %v1716 = vld [vmem:[%s1715] sm:$0x1]
        %v1718 = vlaneseq
        %v1719 = vshrl.u32 %v1718, 7
        %v1720 = vsub.s32 0, %v1719
        %v1721 = vrot.slane %v1716, %v1720
        %v1724 = vsel %vm588, %v1709, 0
        %1726 = vmatprep.subr.mxu0 0.0
        %1727 = vmatpush1.msra.mxu0 0.0
        %1728 = vmatprep.subr.mxu0 0.0
        %1729 = vmatpush1.msra.mxu0 0.0
        %1730 = vmatprep.subr.mxu0 0.0
        %1731 = vmatpush1.msra.mxu0 0.0
        %1732 = vmatprep.subr.mxu0 0.0
        %1733 = vmatpush1.msra.mxu0 0.0
        %1734 = vmatprep.subr.mxu0 0.0
        %1735 = vmatpush1.msra.mxu0 0.0
        %1736 = vmatprep.subr.mxu0 0.0
        %1737 = vmatpush1.msra.mxu0 0.0
        %1738 = vmatprep.subr.mxu0 0.0
        %1739 = vmatpush1.msra.mxu0 0.0
        %1740 = vmatprep.subr.mxu0 0.0
        %1741 = vmatpush1.msra.mxu0 0.0
        %1742 = vmatprep.subr.mxu0 0.0
        %1743 = vmatpush1.msra.mxu0 0.0
        %1744 = vmatprep.subr.mxu0 0.0
        %1745 = vmatpush1.msra.mxu0 0.0
        %1746 = vmatprep.subr.mxu0 0.0
        %1747 = vmatpush1.msra.mxu0 0.0
        %1748 = vmatprep.subr.mxu0 0.0
        %1749 = vmatpush1.msra.mxu0 0.0
        %1750 = vmatprep.subr.mxu0 0.0
        %1751 = vmatpush1.msra.mxu0 %v1714
        %1752 = vmatprep.subr.mxu0 0.0
        %1753 = vmatpush1.msra.mxu0 %v1713
        %1754 = vmatprep.subr.mxu0 0.0
        %1755 = vmatpush1.msra.mxu0 %v1712
        %1756 = vmatprep.subr.mxu0 0.0
        %1757 = vmatpush1.msra.mxu0 %v1711
        %1758 = vmatprep.subr.mxu0 0.0
        %1759 = vmatpush2.msra.mxu0 0.0
        %1760 = vmatprep.subr.mxu0 0.0
        %1761 = vmatpush2.msra.mxu0 0.0
        %1762 = vmatprep.subr.mxu0 0.0
        %1763 = vmatpush2.msra.mxu0 0.0
        %1764 = vmatprep.subr.mxu0 0.0
        %1765 = vmatpush2.msra.mxu0 0.0
        %1766 = vmatprep.subr.mxu0 0.0
        %1767 = vmatpush2.msra.mxu0 0.0
        %1768 = vmatprep.subr.mxu0 0.0
        %1769 = vmatpush2.msra.mxu0 0.0
        %1770 = vmatprep.subr.mxu0 0.0
        %1771 = vmatpush2.msra.mxu0 0.0
        %1772 = vmatprep.subr.mxu0 0.0
        %1773 = vmatpush2.msra.mxu0 0.0
        %1774 = vmatprep.subr.mxu0 0.0
        %1775 = vmatpush2.msra.mxu0 0.0
        %1776 = vmatprep.subr.mxu0 0.0
        %1777 = vmatpush2.msra.mxu0 0.0
        %1778 = vmatprep.subr.mxu0 0.0
        %1779 = vmatpush2.msra.mxu0 0.0
        %1780 = vmatprep.subr.mxu0 0.0
        %1781 = vmatpush2.msra.mxu0 0.0
        %1782 = vmatprep.subr.mxu0 0.0
        %1783 = vmatpush2.msra.mxu0 0.0
        %1784 = vmatprep.subr.mxu0 0.0
        %1785 = vmatpush2.msra.mxu0 0.0
        %1786 = vmatprep.subr.mxu0 0.0
        %1787 = vmatpush2.msra.mxu0 0.0
        %1788 = vmatprep.subr.mxu0 0.0
        %1789 = vmatpush2.msra.mxu0 0.0
        %1790 = vmatprep.mubr.f32.mxu0 0.0
        %1791 = vmatmul.mubr.f32.gmra.mxu0 %v1724
        %v1792 = vpop.f32.mrf.mxu0
        %v1793 = vadd.f32 %v1721, %v1792
        %v1794 = vpop.f32.mrf.mxu0
        %1795 = vdwg.mxu0
        %1797 = vrot.lane.b32.xlu0 %v1793, 120
        %v1798 = vpop.permute.xlu0 %1797
        %1799 = vrot.lane.b32.xlu0 %v1793, 112
        %v1800 = vpop.permute.xlu0 %1799
        %1801 = vrot.lane.b32.xlu0 %v1793, 104
        %v1802 = vpop.permute.xlu0 %1801
        %1803 = vrot.lane.b32.xlu0 %v1793, 96
        %v1804 = vpop.permute.xlu0 %1803
        %v1805 = vsel %vm716, %v1793, 0
        %v1807 = vsel %vm716, %v1804, 0
        %1809 = vmatprep.subr.mxu0 0.0
        %1810 = vmatpush1.xpose.msra.mxu0 0.0
        %1811 = vmatprep.subr.mxu0 0.0
        %1812 = vmatpush1.xpose.msra.mxu0 0.0
        %1813 = vmatprep.subr.mxu0 0.0
        %1814 = vmatpush1.xpose.msra.mxu0 0.0
        %1815 = vmatprep.subr.mxu0 0.0
        %1816 = vmatpush1.xpose.msra.mxu0 0.0
        %1817 = vmatprep.subr.mxu0 0.0
        %1818 = vmatpush1.xpose.msra.mxu0 0.0
        %1819 = vmatprep.subr.mxu0 0.0
        %1820 = vmatpush1.xpose.msra.mxu0 0.0
        %1821 = vmatprep.subr.mxu0 0.0
        %1822 = vmatpush1.xpose.msra.mxu0 0.0
        %1823 = vmatprep.subr.mxu0 0.0
        %1824 = vmatpush1.xpose.msra.mxu0 0.0
        %1825 = vmatprep.subr.mxu0 0.0
        %1826 = vmatpush1.xpose.msra.mxu0 0.0
        %1827 = vmatprep.subr.mxu0 0.0
        %1828 = vmatpush1.xpose.msra.mxu0 0.0
        %1829 = vmatprep.subr.mxu0 0.0
        %1830 = vmatpush1.xpose.msra.mxu0 0.0
        %1831 = vmatprep.subr.mxu0 0.0
        %1832 = vmatpush1.xpose.msra.mxu0 0.0
        %1833 = vmatprep.subr.mxu0 0.0
        %1834 = vmatpush1.xpose.msra.mxu0 0.0
        %1835 = vmatprep.subr.mxu0 0.0
        %1836 = vmatpush1.xpose.msra.mxu0 0.0
        %1837 = vmatprep.subr.mxu0 0.0
        %1838 = vmatpush1.xpose.msra.mxu0 0.0
        %1839 = vmatprep.subr.mxu0 0.0
        %1840 = vmatpush1.xpose.msra.mxu0 %v1807
        %1841 = vmatprep.subr.mxu0 0.0
        %1842 = vmatpush2.xpose.msra.mxu0 0.0
        %1843 = vmatprep.subr.mxu0 0.0
        %1844 = vmatpush2.xpose.msra.mxu0 0.0
        %1845 = vmatprep.subr.mxu0 0.0
        %1846 = vmatpush2.xpose.msra.mxu0 0.0
        %1847 = vmatprep.subr.mxu0 0.0
        %1848 = vmatpush2.xpose.msra.mxu0 0.0
        %1849 = vmatprep.subr.mxu0 0.0
        %1850 = vmatpush2.xpose.msra.mxu0 0.0
        %1851 = vmatprep.subr.mxu0 0.0
        %1852 = vmatpush2.xpose.msra.mxu0 0.0
        %1853 = vmatprep.subr.mxu0 0.0
        %1854 = vmatpush2.xpose.msra.mxu0 0.0
        %1855 = vmatprep.subr.mxu0 0.0
        %1856 = vmatpush2.xpose.msra.mxu0 0.0
        %1857 = vmatprep.subr.mxu0 0.0
        %1858 = vmatpush2.xpose.msra.mxu0 0.0
        %1859 = vmatprep.subr.mxu0 0.0
        %1860 = vmatpush2.xpose.msra.mxu0 0.0
        %1861 = vmatprep.subr.mxu0 0.0
        %1862 = vmatpush2.xpose.msra.mxu0 0.0
        %1863 = vmatprep.subr.mxu0 0.0
        %1864 = vmatpush2.xpose.msra.mxu0 0.0
        %1865 = vmatprep.subr.mxu0 0.0
        %1866 = vmatpush2.xpose.msra.mxu0 0.0
        %1867 = vmatprep.subr.mxu0 0.0
        %1868 = vmatpush2.xpose.msra.mxu0 0.0
        %1869 = vmatprep.subr.mxu0 0.0
        %1870 = vmatpush2.xpose.msra.mxu0 0.0
        %1871 = vmatprep.subr.mxu0 0.0
        %1872 = vmatpush2.xpose.msra.mxu0 0.0
        %1873 = vmatprep.mubr.f32.mxu0 0.0
        %1874 = vmatmul.mubr.f32.gmra.mxu0 %v1805
        %v1875 = vpop.f32.mrf.mxu0
        %v1876 = vadd.f32 %v712, %v1875
        %v1877 = vpop.f32.mrf.mxu0
        %1878 = vdwg.mxu0
        %1879 = vrot.lane.b32.xlu0 %v1798, 96
        %v1880 = vpop.permute.xlu0 %1879
        %v1881 = vsel %vm716, %v1798, 0
        %v1883 = vsel %vm716, %v1880, 0
        %1885 = vmatprep.subr.mxu0 0.0
        %1886 = vmatpush1.xpose.msra.mxu0 0.0
        %1887 = vmatprep.subr.mxu0 0.0
        %1888 = vmatpush1.xpose.msra.mxu0 0.0
        %1889 = vmatprep.subr.mxu0 0.0
        %1890 = vmatpush1.xpose.msra.mxu0 0.0
        %1891 = vmatprep.subr.mxu0 0.0
        %1892 = vmatpush1.xpose.msra.mxu0 0.0
        %1893 = vmatprep.subr.mxu0 0.0
        %1894 = vmatpush1.xpose.msra.mxu0 0.0
        %1895 = vmatprep.subr.mxu0 0.0
        %1896 = vmatpush1.xpose.msra.mxu0 0.0
        %1897 = vmatprep.subr.mxu0 0.0
        %1898 = vmatpush1.xpose.msra.mxu0 0.0
        %1899 = vmatprep.subr.mxu0 0.0
        %1900 = vmatpush1.xpose.msra.mxu0 0.0
        %1901 = vmatprep.subr.mxu0 0.0
        %1902 = vmatpush1.xpose.msra.mxu0 0.0
        %1903 = vmatprep.subr.mxu0 0.0
        %1904 = vmatpush1.xpose.msra.mxu0 0.0
        %1905 = vmatprep.subr.mxu0 0.0
        %1906 = vmatpush1.xpose.msra.mxu0 0.0
        %1907 = vmatprep.subr.mxu0 0.0
        %1908 = vmatpush1.xpose.msra.mxu0 0.0
        %1909 = vmatprep.subr.mxu0 0.0
        %1910 = vmatpush1.xpose.msra.mxu0 0.0
        %1911 = vmatprep.subr.mxu0 0.0
        %1912 = vmatpush1.xpose.msra.mxu0 0.0
        %1913 = vmatprep.subr.mxu0 0.0
        %1914 = vmatpush1.xpose.msra.mxu0 0.0
        %1915 = vmatprep.subr.mxu0 0.0
        %1916 = vmatpush1.xpose.msra.mxu0 %v1883
        %1917 = vmatprep.subr.mxu0 0.0
        %1918 = vmatpush2.xpose.msra.mxu0 0.0
        %1919 = vmatprep.subr.mxu0 0.0
        %1920 = vmatpush2.xpose.msra.mxu0 0.0
        %1921 = vmatprep.subr.mxu0 0.0
        %1922 = vmatpush2.xpose.msra.mxu0 0.0
        %1923 = vmatprep.subr.mxu0 0.0
        %1924 = vmatpush2.xpose.msra.mxu0 0.0
        %1925 = vmatprep.subr.mxu0 0.0
        %1926 = vmatpush2.xpose.msra.mxu0 0.0
        %1927 = vmatprep.subr.mxu0 0.0
        %1928 = vmatpush2.xpose.msra.mxu0 0.0
        %1929 = vmatprep.subr.mxu0 0.0
        %1930 = vmatpush2.xpose.msra.mxu0 0.0
        %1931 = vmatprep.subr.mxu0 0.0
        %1932 = vmatpush2.xpose.msra.mxu0 0.0
        %1933 = vmatprep.subr.mxu0 0.0
        %1934 = vmatpush2.xpose.msra.mxu0 0.0
        %1935 = vmatprep.subr.mxu0 0.0
        %1936 = vmatpush2.xpose.msra.mxu0 0.0
        %1937 = vmatprep.subr.mxu0 0.0
        %1938 = vmatpush2.xpose.msra.mxu0 0.0
        %1939 = vmatprep.subr.mxu0 0.0
        %1940 = vmatpush2.xpose.msra.mxu0 0.0
        %1941 = vmatprep.subr.mxu0 0.0
        %1942 = vmatpush2.xpose.msra.mxu0 0.0
        %1943 = vmatprep.subr.mxu0 0.0
        %1944 = vmatpush2.xpose.msra.mxu0 0.0
        %1945 = vmatprep.subr.mxu0 0.0
        %1946 = vmatpush2.xpose.msra.mxu0 0.0
        %1947 = vmatprep.subr.mxu0 0.0
        %1948 = vmatpush2.xpose.msra.mxu0 0.0
        %1949 = vmatprep.mubr.f32.mxu0 0.0
        %1950 = vmatmul.mubr.f32.gmra.mxu0 %v1881
        %v1951 = vpop.f32.mrf.mxu0
        %v1952 = vadd.f32 %v712, %v1951
        %v1953 = vpop.f32.mrf.mxu0
        %1954 = vdwg.mxu0
        %1955 = vrot.lane.b32.xlu0 %v1800, 96
        %v1956 = vpop.permute.xlu0 %1955
        %v1957 = vsel %vm716, %v1800, 0
        %v1959 = vsel %vm716, %v1956, 0
        %1961 = vmatprep.subr.mxu0 0.0
        %1962 = vmatpush1.xpose.msra.mxu0 0.0
        %1963 = vmatprep.subr.mxu0 0.0
        %1964 = vmatpush1.xpose.msra.mxu0 0.0
        %1965 = vmatprep.subr.mxu0 0.0
        %1966 = vmatpush1.xpose.msra.mxu0 0.0
        %1967 = vmatprep.subr.mxu0 0.0
        %1968 = vmatpush1.xpose.msra.mxu0 0.0
        %1969 = vmatprep.subr.mxu0 0.0
        %1970 = vmatpush1.xpose.msra.mxu0 0.0
        %1971 = vmatprep.subr.mxu0 0.0
        %1972 = vmatpush1.xpose.msra.mxu0 0.0
        %1973 = vmatprep.subr.mxu0 0.0
        %1974 = vmatpush1.xpose.msra.mxu0 0.0
        %1975 = vmatprep.subr.mxu0 0.0
        %1976 = vmatpush1.xpose.msra.mxu0 0.0
        %1977 = vmatprep.subr.mxu0 0.0
        %1978 = vmatpush1.xpose.msra.mxu0 0.0
        %1979 = vmatprep.subr.mxu0 0.0
        %1980 = vmatpush1.xpose.msra.mxu0 0.0
        %1981 = vmatprep.subr.mxu0 0.0
        %1982 = vmatpush1.xpose.msra.mxu0 0.0
        %1983 = vmatprep.subr.mxu0 0.0
        %1984 = vmatpush1.xpose.msra.mxu0 0.0
        %1985 = vmatprep.subr.mxu0 0.0
        %1986 = vmatpush1.xpose.msra.mxu0 0.0
        %1987 = vmatprep.subr.mxu0 0.0
        %1988 = vmatpush1.xpose.msra.mxu0 0.0
        %1989 = vmatprep.subr.mxu0 0.0
        %1990 = vmatpush1.xpose.msra.mxu0 0.0
        %1991 = vmatprep.subr.mxu0 0.0
        %1992 = vmatpush1.xpose.msra.mxu0 %v1959
        %1993 = vmatprep.subr.mxu0 0.0
        %1994 = vmatpush2.xpose.msra.mxu0 0.0
        %1995 = vmatprep.subr.mxu0 0.0
        %1996 = vmatpush2.xpose.msra.mxu0 0.0
        %1997 = vmatprep.subr.mxu0 0.0
        %1998 = vmatpush2.xpose.msra.mxu0 0.0
        %1999 = vmatprep.subr.mxu0 0.0
        %2000 = vmatpush2.xpose.msra.mxu0 0.0
        %2001 = vmatprep.subr.mxu0 0.0
        %2002 = vmatpush2.xpose.msra.mxu0 0.0
        %2003 = vmatprep.subr.mxu0 0.0
        %2004 = vmatpush2.xpose.msra.mxu0 0.0
        %2005 = vmatprep.subr.mxu0 0.0
        %2006 = vmatpush2.xpose.msra.mxu0 0.0
        %2007 = vmatprep.subr.mxu0 0.0
        %2008 = vmatpush2.xpose.msra.mxu0 0.0
        %2009 = vmatprep.subr.mxu0 0.0
        %2010 = vmatpush2.xpose.msra.mxu0 0.0
        %2011 = vmatprep.subr.mxu0 0.0
        %2012 = vmatpush2.xpose.msra.mxu0 0.0
        %2013 = vmatprep.subr.mxu0 0.0
        %2014 = vmatpush2.xpose.msra.mxu0 0.0
        %2015 = vmatprep.subr.mxu0 0.0
        %2016 = vmatpush2.xpose.msra.mxu0 0.0
        %2017 = vmatprep.subr.mxu0 0.0
        %2018 = vmatpush2.xpose.msra.mxu0 0.0
        %2019 = vmatprep.subr.mxu0 0.0
        %2020 = vmatpush2.xpose.msra.mxu0 0.0
        %2021 = vmatprep.subr.mxu0 0.0
        %2022 = vmatpush2.xpose.msra.mxu0 0.0
        %2023 = vmatprep.subr.mxu0 0.0
        %2024 = vmatpush2.xpose.msra.mxu0 0.0
        %2025 = vmatprep.mubr.f32.mxu0 0.0
        %2026 = vmatmul.mubr.f32.gmra.mxu0 %v1957
        %v2027 = vpop.f32.mrf.mxu0
        %v2028 = vadd.f32 %v712, %v2027
        %v2029 = vpop.f32.mrf.mxu0
        %2030 = vdwg.mxu0
        %2031 = vrot.lane.b32.xlu0 %v1802, 96
        %v2032 = vpop.permute.xlu0 %2031
        %v2033 = vsel %vm716, %v1802, 0
        %v2035 = vsel %vm716, %v2032, 0
        %2037 = vmatprep.subr.mxu0 0.0
        %2038 = vmatpush1.xpose.msra.mxu0 0.0
        %2039 = vmatprep.subr.mxu0 0.0
        %2040 = vmatpush1.xpose.msra.mxu0 0.0
        %2041 = vmatprep.subr.mxu0 0.0
        %2042 = vmatpush1.xpose.msra.mxu0 0.0
        %2043 = vmatprep.subr.mxu0 0.0
        %2044 = vmatpush1.xpose.msra.mxu0 0.0
        %2045 = vmatprep.subr.mxu0 0.0
        %2046 = vmatpush1.xpose.msra.mxu0 0.0
        %2047 = vmatprep.subr.mxu0 0.0
        %2048 = vmatpush1.xpose.msra.mxu0 0.0
        %2049 = vmatprep.subr.mxu0 0.0
        %2050 = vmatpush1.xpose.msra.mxu0 0.0
        %2051 = vmatprep.subr.mxu0 0.0
        %2052 = vmatpush1.xpose.msra.mxu0 0.0
        %2053 = vmatprep.subr.mxu0 0.0
        %2054 = vmatpush1.xpose.msra.mxu0 0.0
        %2055 = vmatprep.subr.mxu0 0.0
        %2056 = vmatpush1.xpose.msra.mxu0 0.0
        %2057 = vmatprep.subr.mxu0 0.0
        %2058 = vmatpush1.xpose.msra.mxu0 0.0
        %2059 = vmatprep.subr.mxu0 0.0
        %2060 = vmatpush1.xpose.msra.mxu0 0.0
        %2061 = vmatprep.subr.mxu0 0.0
        %2062 = vmatpush1.xpose.msra.mxu0 0.0
        %2063 = vmatprep.subr.mxu0 0.0
        %2064 = vmatpush1.xpose.msra.mxu0 0.0
        %2065 = vmatprep.subr.mxu0 0.0
        %2066 = vmatpush1.xpose.msra.mxu0 0.0
        %2067 = vmatprep.subr.mxu0 0.0
        %2068 = vmatpush1.xpose.msra.mxu0 %v2035
        %2069 = vmatprep.subr.mxu0 0.0
        %2070 = vmatpush2.xpose.msra.mxu0 0.0
        %2071 = vmatprep.subr.mxu0 0.0
        %2072 = vmatpush2.xpose.msra.mxu0 0.0
        %2073 = vmatprep.subr.mxu0 0.0
        %2074 = vmatpush2.xpose.msra.mxu0 0.0
        %2075 = vmatprep.subr.mxu0 0.0
        %2076 = vmatpush2.xpose.msra.mxu0 0.0
        %2077 = vmatprep.subr.mxu0 0.0
        %2078 = vmatpush2.xpose.msra.mxu0 0.0
        %2079 = vmatprep.subr.mxu0 0.0
        %2080 = vmatpush2.xpose.msra.mxu0 0.0
        %2081 = vmatprep.subr.mxu0 0.0
        %2082 = vmatpush2.xpose.msra.mxu0 0.0
        %2083 = vmatprep.subr.mxu0 0.0
        %2084 = vmatpush2.xpose.msra.mxu0 0.0
        %2085 = vmatprep.subr.mxu0 0.0
        %2086 = vmatpush2.xpose.msra.mxu0 0.0
        %2087 = vmatprep.subr.mxu0 0.0
        %2088 = vmatpush2.xpose.msra.mxu0 0.0
        %2089 = vmatprep.subr.mxu0 0.0
        %2090 = vmatpush2.xpose.msra.mxu0 0.0
        %2091 = vmatprep.subr.mxu0 0.0
        %2092 = vmatpush2.xpose.msra.mxu0 0.0
        %2093 = vmatprep.subr.mxu0 0.0
        %2094 = vmatpush2.xpose.msra.mxu0 0.0
        %2095 = vmatprep.subr.mxu0 0.0
        %2096 = vmatpush2.xpose.msra.mxu0 0.0
        %2097 = vmatprep.subr.mxu0 0.0
        %2098 = vmatpush2.xpose.msra.mxu0 0.0
        %2099 = vmatprep.subr.mxu0 0.0
        %2100 = vmatpush2.xpose.msra.mxu0 0.0
        %2101 = vmatprep.mubr.f32.mxu0 0.0
        %2102 = vmatmul.mubr.f32.gmra.mxu0 %v2033
        %v2103 = vpop.f32.mrf.mxu0
        %v2104 = vadd.f32 %v712, %v2103
        %v2105 = vpop.f32.mrf.mxu0
        %2106 = vdwg.mxu0
        %v2107 = vsel %vm716, %v1876, -inf
        %2108 = vmax.xlane.f32.xlu0 %v2107
        %v2109 = vpop.xlane.xlu0 %2108
        %v2110 = vsel %vm716, %v1952, -inf
        %2111 = vmax.xlane.f32.xlu0 %v2110
        %v2112 = vpop.xlane.xlu0 %2111
        %v2113 = vsel %vm716, %v2028, -inf
        %2114 = vmax.xlane.f32.xlu0 %v2113
        %v2115 = vpop.xlane.xlu0 %2114
        %v2116 = vsel %vm716, %v2104, -inf
        %2117 = vmax.xlane.f32.xlu0 %v2116
        %v2118 = vpop.xlane.xlu0 %2117
        %v2119 = vsub.f32 %v1876, %v2109
        %v2120 = vsub.f32 %v1952, %v2112
        %v2121 = vsub.f32 %v2028, %v2115
        %v2122 = vsub.f32 %v2104, %v2118
        %v2123 = vmul.f32 %v2119, 1.442695
        %v2124 = vpow.pop %v2123
        %v2125 = vmul.f32 %v2120, 1.442695
        %v2126 = vpow.pop %v2125
        %v2127 = vmul.f32 %v2121, 1.442695
        %v2128 = vpow.pop %v2127
        %v2129 = vmul.f32 %v2122, 1.442695
        %v2130 = vpow.pop %v2129
        %v2131 = vsel %vm716, %v2124, 0.0
        %2132 = vadd.xlane.f32.xlu0 %v2131
        %v2133 = vpop.xlane.xlu0 %2132
        %v2134 = vsel %vm716, %v2126, 0.0
        %2135 = vadd.xlane.f32.xlu0 %v2134
        %v2136 = vpop.xlane.xlu0 %2135
        %v2137 = vsel %vm716, %v2128, 0.0
        %2138 = vadd.xlane.f32.xlu0 %v2137
        %v2139 = vpop.xlane.xlu0 %2138
        %v2140 = vsel %vm716, %v2130, 0.0
        %2141 = vadd.xlane.f32.xlu0 %v2140
        %v2142 = vpop.xlane.xlu0 %2141
        %v2143 = vrcp.pop %v2133
        %v2144 = vrcp.pop %v2136
        %v2145 = vrcp.pop %v2139
        %v2146 = vrcp.pop %v2142
        %v2147 = vmul.f32 %v2124, %v2143
        %v2148 = vmul.f32 %v2126, %v2144
        %v2149 = vmul.f32 %v2128, %v2145
        %v2150 = vmul.f32 %v2130, %v2146
        %2151 = vrot.lane.b32.xlu0 %v1793, 64
        %v2152 = vpop.permute.xlu0 %2151
        %v2155 = vsel %vm716, %v2147, 0
        %2157 = vmatprep.subr.mxu0 0.0
        %2158 = vmatpush1.msra.mxu0 0.0
        %2159 = vmatprep.subr.mxu0 0.0
        %2160 = vmatpush1.msra.mxu0 0.0
        %2161 = vmatprep.subr.mxu0 0.0
        %2162 = vmatpush1.msra.mxu0 0.0
        %2163 = vmatprep.subr.mxu0 0.0
        %2164 = vmatpush1.msra.mxu0 0.0
        %2165 = vmatprep.subr.mxu0 0.0
        %2166 = vmatpush1.msra.mxu0 0.0
        %2167 = vmatprep.subr.mxu0 0.0
        %2168 = vmatpush1.msra.mxu0 0.0
        %2169 = vmatprep.subr.mxu0 0.0
        %2170 = vmatpush1.msra.mxu0 0.0
        %2171 = vmatprep.subr.mxu0 0.0
        %2172 = vmatpush1.msra.mxu0 0.0
        %2173 = vmatprep.subr.mxu0 0.0
        %2174 = vmatpush1.msra.mxu0 0.0
        %2175 = vmatprep.subr.mxu0 0.0
        %2176 = vmatpush1.msra.mxu0 0.0
        %2177 = vmatprep.subr.mxu0 0.0
        %2178 = vmatpush1.msra.mxu0 0.0
        %2179 = vmatprep.subr.mxu0 0.0
        %2180 = vmatpush1.msra.mxu0 0.0
        %2181 = vmatprep.subr.mxu0 0.0
        %2182 = vmatpush1.msra.mxu0 0.0
        %2183 = vmatprep.subr.mxu0 0.0
        %2184 = vmatpush1.msra.mxu0 0.0
        %2185 = vmatprep.subr.mxu0 0.0
        %2186 = vmatpush1.msra.mxu0 0.0
        %2187 = vmatprep.subr.mxu0 0.0
        %2188 = vmatpush1.msra.mxu0 %v2152
        %2189 = vmatprep.subr.mxu0 0.0
        %2190 = vmatpush2.msra.mxu0 0.0
        %2191 = vmatprep.subr.mxu0 0.0
        %2192 = vmatpush2.msra.mxu0 0.0
        %2193 = vmatprep.subr.mxu0 0.0
        %2194 = vmatpush2.msra.mxu0 0.0
        %2195 = vmatprep.subr.mxu0 0.0
        %2196 = vmatpush2.msra.mxu0 0.0
        %2197 = vmatprep.subr.mxu0 0.0
        %2198 = vmatpush2.msra.mxu0 0.0
        %2199 = vmatprep.subr.mxu0 0.0
        %2200 = vmatpush2.msra.mxu0 0.0
        %2201 = vmatprep.subr.mxu0 0.0
        %2202 = vmatpush2.msra.mxu0 0.0
        %2203 = vmatprep.subr.mxu0 0.0
        %2204 = vmatpush2.msra.mxu0 0.0
        %2205 = vmatprep.subr.mxu0 0.0
        %2206 = vmatpush2.msra.mxu0 0.0
        %2207 = vmatprep.subr.mxu0 0.0
        %2208 = vmatpush2.msra.mxu0 0.0
        %2209 = vmatprep.subr.mxu0 0.0
        %2210 = vmatpush2.msra.mxu0 0.0
        %2211 = vmatprep.subr.mxu0 0.0
        %2212 = vmatpush2.msra.mxu0 0.0
        %2213 = vmatprep.subr.mxu0 0.0
        %2214 = vmatpush2.msra.mxu0 0.0
        %2215 = vmatprep.subr.mxu0 0.0
        %2216 = vmatpush2.msra.mxu0 0.0
        %2217 = vmatprep.subr.mxu0 0.0
        %2218 = vmatpush2.msra.mxu0 0.0
        %2219 = vmatprep.subr.mxu0 0.0
        %2220 = vmatpush2.msra.mxu0 0.0
        %2221 = vmatprep.mubr.f32.mxu0 0.0
        %2222 = vmatmul.mubr.f32.gmra.mxu0 %v2155
        %v2223 = vpop.f32.mrf.mxu0
        %v2224 = vadd.f32 0.0, %v2223
        %v2225 = vpop.f32.mrf.mxu0
        %2226 = vdwg.mxu0
        %2227 = vrot.lane.b32.xlu0 %v1798, 64
        %v2228 = vpop.permute.xlu0 %2227
        %v2231 = vsel %vm716, %v2148, 0
        %2233 = vmatprep.subr.mxu0 0.0
        %2234 = vmatpush1.msra.mxu0 0.0
        %2235 = vmatprep.subr.mxu0 0.0
        %2236 = vmatpush1.msra.mxu0 0.0
        %2237 = vmatprep.subr.mxu0 0.0
        %2238 = vmatpush1.msra.mxu0 0.0
        %2239 = vmatprep.subr.mxu0 0.0
        %2240 = vmatpush1.msra.mxu0 0.0
        %2241 = vmatprep.subr.mxu0 0.0
        %2242 = vmatpush1.msra.mxu0 0.0
        %2243 = vmatprep.subr.mxu0 0.0
        %2244 = vmatpush1.msra.mxu0 0.0
        %2245 = vmatprep.subr.mxu0 0.0
        %2246 = vmatpush1.msra.mxu0 0.0
        %2247 = vmatprep.subr.mxu0 0.0
        %2248 = vmatpush1.msra.mxu0 0.0
        %2249 = vmatprep.subr.mxu0 0.0
        %2250 = vmatpush1.msra.mxu0 0.0
        %2251 = vmatprep.subr.mxu0 0.0
        %2252 = vmatpush1.msra.mxu0 0.0
        %2253 = vmatprep.subr.mxu0 0.0
        %2254 = vmatpush1.msra.mxu0 0.0
        %2255 = vmatprep.subr.mxu0 0.0
        %2256 = vmatpush1.msra.mxu0 0.0
        %2257 = vmatprep.subr.mxu0 0.0
        %2258 = vmatpush1.msra.mxu0 0.0
        %2259 = vmatprep.subr.mxu0 0.0
        %2260 = vmatpush1.msra.mxu0 0.0
        %2261 = vmatprep.subr.mxu0 0.0
        %2262 = vmatpush1.msra.mxu0 0.0
        %2263 = vmatprep.subr.mxu0 0.0
        %2264 = vmatpush1.msra.mxu0 %v2228
        %2265 = vmatprep.subr.mxu0 0.0
        %2266 = vmatpush2.msra.mxu0 0.0
        %2267 = vmatprep.subr.mxu0 0.0
        %2268 = vmatpush2.msra.mxu0 0.0
        %2269 = vmatprep.subr.mxu0 0.0
        %2270 = vmatpush2.msra.mxu0 0.0
        %2271 = vmatprep.subr.mxu0 0.0
        %2272 = vmatpush2.msra.mxu0 0.0
        %2273 = vmatprep.subr.mxu0 0.0
        %2274 = vmatpush2.msra.mxu0 0.0
        %2275 = vmatprep.subr.mxu0 0.0
        %2276 = vmatpush2.msra.mxu0 0.0
        %2277 = vmatprep.subr.mxu0 0.0
        %2278 = vmatpush2.msra.mxu0 0.0
        %2279 = vmatprep.subr.mxu0 0.0
        %2280 = vmatpush2.msra.mxu0 0.0
        %2281 = vmatprep.subr.mxu0 0.0
        %2282 = vmatpush2.msra.mxu0 0.0
        %2283 = vmatprep.subr.mxu0 0.0
        %2284 = vmatpush2.msra.mxu0 0.0
        %2285 = vmatprep.subr.mxu0 0.0
        %2286 = vmatpush2.msra.mxu0 0.0
        %2287 = vmatprep.subr.mxu0 0.0
        %2288 = vmatpush2.msra.mxu0 0.0
        %2289 = vmatprep.subr.mxu0 0.0
        %2290 = vmatpush2.msra.mxu0 0.0
        %2291 = vmatprep.subr.mxu0 0.0
        %2292 = vmatpush2.msra.mxu0 0.0
        %2293 = vmatprep.subr.mxu0 0.0
        %2294 = vmatpush2.msra.mxu0 0.0
        %2295 = vmatprep.subr.mxu0 0.0
        %2296 = vmatpush2.msra.mxu0 0.0
        %2297 = vmatprep.mubr.f32.mxu0 0.0
        %2298 = vmatmul.mubr.f32.gmra.mxu0 %v2231
        %v2299 = vpop.f32.mrf.mxu0
        %v2300 = vadd.f32 0.0, %v2299
        %v2301 = vpop.f32.mrf.mxu0
        %2302 = vdwg.mxu0
        %2303 = vrot.lane.b32.xlu0 %v1800, 64
        %v2304 = vpop.permute.xlu0 %2303
        %v2307 = vsel %vm716, %v2149, 0
        %2309 = vmatprep.subr.mxu0 0.0
        %2310 = vmatpush1.msra.mxu0 0.0
        %2311 = vmatprep.subr.mxu0 0.0
        %2312 = vmatpush1.msra.mxu0 0.0
        %2313 = vmatprep.subr.mxu0 0.0
        %2314 = vmatpush1.msra.mxu0 0.0
        %2315 = vmatprep.subr.mxu0 0.0
        %2316 = vmatpush1.msra.mxu0 0.0
        %2317 = vmatprep.subr.mxu0 0.0
        %2318 = vmatpush1.msra.mxu0 0.0
        %2319 = vmatprep.subr.mxu0 0.0
        %2320 = vmatpush1.msra.mxu0 0.0
        %2321 = vmatprep.subr.mxu0 0.0
        %2322 = vmatpush1.msra.mxu0 0.0
        %2323 = vmatprep.subr.mxu0 0.0
        %2324 = vmatpush1.msra.mxu0 0.0
        %2325 = vmatprep.subr.mxu0 0.0
        %2326 = vmatpush1.msra.mxu0 0.0
        %2327 = vmatprep.subr.mxu0 0.0
        %2328 = vmatpush1.msra.mxu0 0.0
        %2329 = vmatprep.subr.mxu0 0.0
        %2330 = vmatpush1.msra.mxu0 0.0
        %2331 = vmatprep.subr.mxu0 0.0
        %2332 = vmatpush1.msra.mxu0 0.0
        %2333 = vmatprep.subr.mxu0 0.0
        %2334 = vmatpush1.msra.mxu0 0.0
        %2335 = vmatprep.subr.mxu0 0.0
        %2336 = vmatpush1.msra.mxu0 0.0
        %2337 = vmatprep.subr.mxu0 0.0
        %2338 = vmatpush1.msra.mxu0 0.0
        %2339 = vmatprep.subr.mxu0 0.0
        %2340 = vmatpush1.msra.mxu0 %v2304
        %2341 = vmatprep.subr.mxu0 0.0
        %2342 = vmatpush2.msra.mxu0 0.0
        %2343 = vmatprep.subr.mxu0 0.0
        %2344 = vmatpush2.msra.mxu0 0.0
        %2345 = vmatprep.subr.mxu0 0.0
        %2346 = vmatpush2.msra.mxu0 0.0
        %2347 = vmatprep.subr.mxu0 0.0
        %2348 = vmatpush2.msra.mxu0 0.0
        %2349 = vmatprep.subr.mxu0 0.0
        %2350 = vmatpush2.msra.mxu0 0.0
        %2351 = vmatprep.subr.mxu0 0.0
        %2352 = vmatpush2.msra.mxu0 0.0
        %2353 = vmatprep.subr.mxu0 0.0
        %2354 = vmatpush2.msra.mxu0 0.0
        %2355 = vmatprep.subr.mxu0 0.0
        %2356 = vmatpush2.msra.mxu0 0.0
        %2357 = vmatprep.subr.mxu0 0.0
        %2358 = vmatpush2.msra.mxu0 0.0
        %2359 = vmatprep.subr.mxu0 0.0
        %2360 = vmatpush2.msra.mxu0 0.0
        %2361 = vmatprep.subr.mxu0 0.0
        %2362 = vmatpush2.msra.mxu0 0.0
        %2363 = vmatprep.subr.mxu0 0.0
        %2364 = vmatpush2.msra.mxu0 0.0
        %2365 = vmatprep.subr.mxu0 0.0
        %2366 = vmatpush2.msra.mxu0 0.0
        %2367 = vmatprep.subr.mxu0 0.0
        %2368 = vmatpush2.msra.mxu0 0.0
        %2369 = vmatprep.subr.mxu0 0.0
        %2370 = vmatpush2.msra.mxu0 0.0
        %2371 = vmatprep.subr.mxu0 0.0
        %2372 = vmatpush2.msra.mxu0 0.0
        %2373 = vmatprep.mubr.f32.mxu0 0.0
        %2374 = vmatmul.mubr.f32.gmra.mxu0 %v2307
        %v2375 = vpop.f32.mrf.mxu0
        %v2376 = vadd.f32 0.0, %v2375
        %v2377 = vpop.f32.mrf.mxu0
        %2378 = vdwg.mxu0
        %2379 = vrot.lane.b32.xlu0 %v1802, 64
        %v2380 = vpop.permute.xlu0 %2379
        %v2383 = vsel %vm716, %v2150, 0
        %2385 = vmatprep.subr.mxu0 0.0
        %2386 = vmatpush1.msra.mxu0 0.0
        %2387 = vmatprep.subr.mxu0 0.0
        %2388 = vmatpush1.msra.mxu0 0.0
        %2389 = vmatprep.subr.mxu0 0.0
        %2390 = vmatpush1.msra.mxu0 0.0
        %2391 = vmatprep.subr.mxu0 0.0
        %2392 = vmatpush1.msra.mxu0 0.0
        %2393 = vmatprep.subr.mxu0 0.0
        %2394 = vmatpush1.msra.mxu0 0.0
        %2395 = vmatprep.subr.mxu0 0.0
        %2396 = vmatpush1.msra.mxu0 0.0
        %2397 = vmatprep.subr.mxu0 0.0
        %2398 = vmatpush1.msra.mxu0 0.0
        %2399 = vmatprep.subr.mxu0 0.0
        %2400 = vmatpush1.msra.mxu0 0.0
        %2401 = vmatprep.subr.mxu0 0.0
        %2402 = vmatpush1.msra.mxu0 0.0
        %2403 = vmatprep.subr.mxu0 0.0
        %2404 = vmatpush1.msra.mxu0 0.0
        %2405 = vmatprep.subr.mxu0 0.0
        %2406 = vmatpush1.msra.mxu0 0.0
        %2407 = vmatprep.subr.mxu0 0.0
        %2408 = vmatpush1.msra.mxu0 0.0
        %2409 = vmatprep.subr.mxu0 0.0
        %2410 = vmatpush1.msra.mxu0 0.0
        %2411 = vmatprep.subr.mxu0 0.0
        %2412 = vmatpush1.msra.mxu0 0.0
        %2413 = vmatprep.subr.mxu0 0.0
        %2414 = vmatpush1.msra.mxu0 0.0
        %2415 = vmatprep.subr.mxu0 0.0
        %2416 = vmatpush1.msra.mxu0 %v2380
        %2417 = vmatprep.subr.mxu0 0.0
        %2418 = vmatpush2.msra.mxu0 0.0
        %2419 = vmatprep.subr.mxu0 0.0
        %2420 = vmatpush2.msra.mxu0 0.0
        %2421 = vmatprep.subr.mxu0 0.0
        %2422 = vmatpush2.msra.mxu0 0.0
        %2423 = vmatprep.subr.mxu0 0.0
        %2424 = vmatpush2.msra.mxu0 0.0
        %2425 = vmatprep.subr.mxu0 0.0
        %2426 = vmatpush2.msra.mxu0 0.0
        %2427 = vmatprep.subr.mxu0 0.0
        %2428 = vmatpush2.msra.mxu0 0.0
        %2429 = vmatprep.subr.mxu0 0.0
        %2430 = vmatpush2.msra.mxu0 0.0
        %2431 = vmatprep.subr.mxu0 0.0
        %2432 = vmatpush2.msra.mxu0 0.0
        %2433 = vmatprep.subr.mxu0 0.0
        %2434 = vmatpush2.msra.mxu0 0.0
        %2435 = vmatprep.subr.mxu0 0.0
        %2436 = vmatpush2.msra.mxu0 0.0
        %2437 = vmatprep.subr.mxu0 0.0
        %2438 = vmatpush2.msra.mxu0 0.0
        %2439 = vmatprep.subr.mxu0 0.0
        %2440 = vmatpush2.msra.mxu0 0.0
        %2441 = vmatprep.subr.mxu0 0.0
        %2442 = vmatpush2.msra.mxu0 0.0
        %2443 = vmatprep.subr.mxu0 0.0
        %2444 = vmatpush2.msra.mxu0 0.0
        %2445 = vmatprep.subr.mxu0 0.0
        %2446 = vmatpush2.msra.mxu0 0.0
        %2447 = vmatprep.subr.mxu0 0.0
        %2448 = vmatpush2.msra.mxu0 0.0
        %2449 = vmatprep.mubr.f32.mxu0 0.0
        %2450 = vmatmul.mubr.f32.gmra.mxu0 %v2383
        %v2451 = vpop.f32.mrf.mxu0
        %v2452 = vadd.f32 0.0, %v2451
        %v2453 = vpop.f32.mrf.mxu0
        %2454 = vdwg.mxu0
        %2456 = vrot.lane.b32.xlu0 %v2300, 8
        %v2457 = vpop.permute.xlu0 %2456
        %2460 = vrot.lane.b32.xlu0 %v2376, 16
        %v2461 = vpop.permute.xlu0 %2460
        %2464 = vrot.lane.b32.xlu0 %v2452, 24
        %v2465 = vpop.permute.xlu0 %2464
        %v2467 = vsel %vm716, %v2224, %v2457
        %v2468 = vsel %vm1380, %v2467, %v2461
        %v2469 = vsel %vm1382, %v2468, %v2465
        %s2470 = scalar_lea.vmem %s6, 32
        %v2471 = vld [vmem:[%s2470] sm:$0xff]
        %v2472 = vld [vmem:[%s2470 + $0x8] sm:$0xff]
        %v2473 = vld [vmem:[%s2470 + $0x10] sm:$0xff]
        %v2474 = vld [vmem:[%s2470 + $0x18] sm:$0xff]
        %s2475 = scalar_lea.vmem %s7, 1
        %v2476 = vld [vmem:[%s2475] sm:$0x1]
        %v2478 = vlaneseq
        %v2479 = vshrl.u32 %v2478, 7
        %v2480 = vsub.s32 0, %v2479
        %v2481 = vrot.slane %v2476, %v2480
        %v2484 = vsel %vm588, %v2469, 0
        %2486 = vmatprep.subr.mxu0 0.0
        %2487 = vmatpush1.msra.mxu0 0.0
        %2488 = vmatprep.subr.mxu0 0.0
        %2489 = vmatpush1.msra.mxu0 0.0
        %2490 = vmatprep.subr.mxu0 0.0
        %2491 = vmatpush1.msra.mxu0 0.0
        %2492 = vmatprep.subr.mxu0 0.0
        %2493 = vmatpush1.msra.mxu0 0.0
        %2494 = vmatprep.subr.mxu0 0.0
        %2495 = vmatpush1.msra.mxu0 0.0
        %2496 = vmatprep.subr.mxu0 0.0
        %2497 = vmatpush1.msra.mxu0 0.0
        %2498 = vmatprep.subr.mxu0 0.0
        %2499 = vmatpush1.msra.mxu0 0.0
        %2500 = vmatprep.subr.mxu0 0.0
        %2501 = vmatpush1.msra.mxu0 0.0
        %2502 = vmatprep.subr.mxu0 0.0
        %2503 = vmatpush1.msra.mxu0 0.0
        %2504 = vmatprep.subr.mxu0 0.0
        %2505 = vmatpush1.msra.mxu0 0.0
        %2506 = vmatprep.subr.mxu0 0.0
        %2507 = vmatpush1.msra.mxu0 0.0
        %2508 = vmatprep.subr.mxu0 0.0
        %2509 = vmatpush1.msra.mxu0 0.0
        %2510 = vmatprep.subr.mxu0 0.0
        %2511 = vmatpush1.msra.mxu0 %v2474
        %2512 = vmatprep.subr.mxu0 0.0
        %2513 = vmatpush1.msra.mxu0 %v2473
        %2514 = vmatprep.subr.mxu0 0.0
        %2515 = vmatpush1.msra.mxu0 %v2472
        %2516 = vmatprep.subr.mxu0 0.0
        %2517 = vmatpush1.msra.mxu0 %v2471
        %2518 = vmatprep.subr.mxu0 0.0
        %2519 = vmatpush2.msra.mxu0 0.0
        %2520 = vmatprep.subr.mxu0 0.0
        %2521 = vmatpush2.msra.mxu0 0.0
        %2522 = vmatprep.subr.mxu0 0.0
        %2523 = vmatpush2.msra.mxu0 0.0
        %2524 = vmatprep.subr.mxu0 0.0
        %2525 = vmatpush2.msra.mxu0 0.0
        %2526 = vmatprep.subr.mxu0 0.0
        %2527 = vmatpush2.msra.mxu0 0.0
        %2528 = vmatprep.subr.mxu0 0.0
        %2529 = vmatpush2.msra.mxu0 0.0
        %2530 = vmatprep.subr.mxu0 0.0
        %2531 = vmatpush2.msra.mxu0 0.0
        %2532 = vmatprep.subr.mxu0 0.0
        %2533 = vmatpush2.msra.mxu0 0.0
        %2534 = vmatprep.subr.mxu0 0.0
        %2535 = vmatpush2.msra.mxu0 0.0
        %2536 = vmatprep.subr.mxu0 0.0
        %2537 = vmatpush2.msra.mxu0 0.0
        %2538 = vmatprep.subr.mxu0 0.0
        %2539 = vmatpush2.msra.mxu0 0.0
        %2540 = vmatprep.subr.mxu0 0.0
        %2541 = vmatpush2.msra.mxu0 0.0
        %2542 = vmatprep.subr.mxu0 0.0
        %2543 = vmatpush2.msra.mxu0 0.0
        %2544 = vmatprep.subr.mxu0 0.0
        %2545 = vmatpush2.msra.mxu0 0.0
        %2546 = vmatprep.subr.mxu0 0.0
        %2547 = vmatpush2.msra.mxu0 0.0
        %2548 = vmatprep.subr.mxu0 0.0
        %2549 = vmatpush2.msra.mxu0 0.0
        %2550 = vmatprep.mubr.f32.mxu0 0.0
        %2551 = vmatmul.mubr.f32.gmra.mxu0 %v2484
        %v2552 = vpop.f32.mrf.mxu0
        %v2553 = vadd.f32 %v2481, %v2552
        %v2554 = vpop.f32.mrf.mxu0
        %2555 = vdwg.mxu0
        %v2556 = vadd.f32 %v2553, %v1709
        %s2557 = scalar_lea.vmem %s8, 1
        %v2558 = vld [vmem:[%s2557] sm:$0x1]
        %s2559 = scalar_lea.vmem %s9, 1
        %v2560 = vld [vmem:[%s2559] sm:$0x1]
        %v2561 = vsel %vm588, %v2556, 0.0
        %2562 = vadd.xlane.f32.xlu0 %v2561
        %v2563 = vpop.xlane.xlu0 %2562
        %v2564 = vmul.f32 %v2563, %v592
        %v2565 = vsub.f32 %v2556, %v2564
        %v2566 = vmul.f32 %v2565, %v2565
        %v2567 = vsel %vm588, %v2566, 0.0
        %2568 = vadd.xlane.f32.xlu0 %v2567
        %v2569 = vpop.xlane.xlu0 %2568
        %v2570 = vmul.f32 %v2569, %v592
        %v2571 = vadd.f32 %v2570, 1e-12
        %v2572 = vrsqrt.pop %v2571
        %v2573 = vmul.f32 %v2565, %v2572
        %v2575 = vlaneseq
        %v2576 = vshrl.u32 %v2575, 7
        %v2577 = vsub.s32 0, %v2576
        %v2578 = vrot.slane %v2558, %v2577
        %v2580 = vmul.f32 %v2573, %v2578
        %v2582 = vlaneseq
        %v2583 = vshrl.u32 %v2582, 7
        %v2584 = vsub.s32 0, %v2583
        %v2585 = vrot.slane %v2560, %v2584
        %v2587 = vadd.f32 %v2580, %v2585
        %s2588 = scalar_lea.vmem %s10, 32
        %v2589 = vld [vmem:[%s2588] sm:$0xff]
        %v2590 = vld [vmem:[%s2588 + $0x8] sm:$0xff]
        %v2591 = vld [vmem:[%s2588 + $0x10] sm:$0xff]
        %v2592 = vld [vmem:[%s2588 + $0x18] sm:$0xff]
        %s2593 = scalar_lea.vmem %s11, 1
        %v2594 = vld [vmem:[%s2593] sm:$0x1]
        %v2596 = vlaneseq
        %v2597 = vshrl.u32 %v2596, 7
        %v2598 = vsub.s32 0, %v2597
        %v2599 = vrot.slane %v2594, %v2598
        %v2602 = vsel %vm588, %v2587, 0
        %2604 = vmatprep.subr.mxu0 0.0
        %2605 = vmatpush1.msra.mxu0 0.0
        %2606 = vmatprep.subr.mxu0 0.0
        %2607 = vmatpush1.msra.mxu0 0.0
        %2608 = vmatprep.subr.mxu0 0.0
        %2609 = vmatpush1.msra.mxu0 0.0
        %2610 = vmatprep.subr.mxu0 0.0
        %2611 = vmatpush1.msra.mxu0 0.0
        %2612 = vmatprep.subr.mxu0 0.0
        %2613 = vmatpush1.msra.mxu0 0.0
        %2614 = vmatprep.subr.mxu0 0.0
        %2615 = vmatpush1.msra.mxu0 0.0
        %2616 = vmatprep.subr.mxu0 0.0
        %2617 = vmatpush1.msra.mxu0 0.0
        %2618 = vmatprep.subr.mxu0 0.0
        %2619 = vmatpush1.msra.mxu0 0.0
        %2620 = vmatprep.subr.mxu0 0.0
        %2621 = vmatpush1.msra.mxu0 0.0
        %2622 = vmatprep.subr.mxu0 0.0
        %2623 = vmatpush1.msra.mxu0 0.0
        %2624 = vmatprep.subr.mxu0 0.0
        %2625 = vmatpush1.msra.mxu0 0.0
        %2626 = vmatprep.subr.mxu0 0.0
        %2627 = vmatpush1.msra.mxu0 0.0
        %2628 = vmatprep.subr.mxu0 0.0
        %2629 = vmatpush1.msra.mxu0 %v2592
        %2630 = vmatprep.subr.mxu0 0.0
        %2631 = vmatpush1.msra.mxu0 %v2591
        %2632 = vmatprep.subr.mxu0 0.0
        %2633 = vmatpush1.msra.mxu0 %v2590
        %2634 = vmatprep.subr.mxu0 0.0
        %2635 = vmatpush1.msra.mxu0 %v2589
        %2636 = vmatprep.subr.mxu0 0.0
        %2637 = vmatpush2.msra.mxu0 0.0
        %2638 = vmatprep.subr.mxu0 0.0
        %2639 = vmatpush2.msra.mxu0 0.0
        %2640 = vmatprep.subr.mxu0 0.0
        %2641 = vmatpush2.msra.mxu0 0.0
        %2642 = vmatprep.subr.mxu0 0.0
        %2643 = vmatpush2.msra.mxu0 0.0
        %2644 = vmatprep.subr.mxu0 0.0
        %2645 = vmatpush2.msra.mxu0 0.0
        %2646 = vmatprep.subr.mxu0 0.0
        %2647 = vmatpush2.msra.mxu0 0.0
        %2648 = vmatprep.subr.mxu0 0.0
        %2649 = vmatpush2.msra.mxu0 0.0
        %2650 = vmatprep.subr.mxu0 0.0
        %2651 = vmatpush2.msra.mxu0 0.0
        %2652 = vmatprep.subr.mxu0 0.0
        %2653 = vmatpush2.msra.mxu0 0.0
        %2654 = vmatprep.subr.mxu0 0.0
        %2655 = vmatpush2.msra.mxu0 0.0
        %2656 = vmatprep.subr.mxu0 0.0
        %2657 = vmatpush2.msra.mxu0 0.0
        %2658 = vmatprep.subr.mxu0 0.0
        %2659 = vmatpush2.msra.mxu0 0.0
        %2660 = vmatprep.subr.mxu0 0.0
        %2661 = vmatpush2.msra.mxu0 0.0
        %2662 = vmatprep.subr.mxu0 0.0
        %2663 = vmatpush2.msra.mxu0 0.0
        %2664 = vmatprep.subr.mxu0 0.0
        %2665 = vmatpush2.msra.mxu0 0.0
        %2666 = vmatprep.subr.mxu0 0.0
        %2667 = vmatpush2.msra.mxu0 0.0
        %2668 = vmatprep.mubr.f32.mxu0 0.0
        %2669 = vmatmul.mubr.f32.gmra.mxu0 %v2602
        %v2670 = vpop.f32.mrf.mxu0
        %v2671 = vadd.f32 %v2599, %v2670
        %v2672 = vpop.f32.mrf.mxu0
        %2673 = vdwg.mxu0
        %v2674 = vmul.f32 %v2671, 0.5
        %v2675 = vmul.f32 %v2671, 0.044715
        %v2676 = vmul.f32 %v2675, %v2671
        %v2677 = vmul.f32 %v2676, %v2671
        %v2678 = vadd.f32 %v2671, %v2677
        %v2679 = vmul.f32 %v2678, 0.7978846
        %v2680 = vtanh.pop %v2679
        %v2681 = vadd.f32 %v2680, 1.0
        %v2682 = vmul.f32 %v2674, %v2681
        %s2683 = scalar_lea.vmem %s12, 64
        %v2684 = vld [vmem:[%s2683] sm:$0xff]
        %v2685 = vld [vmem:[%s2683 + $0x8] sm:$0xff]
        %v2686 = vld [vmem:[%s2683 + $0x10] sm:$0xff]
        %v2687 = vld [vmem:[%s2683 + $0x18] sm:$0xff]
        %v2688 = vld [vmem:[%s2683 + $0x20] sm:$0xff]
        %v2689 = vld [vmem:[%s2683 + $0x28] sm:$0xff]
        %v2690 = vld [vmem:[%s2683 + $0x30] sm:$0xff]
        %v2691 = vld [vmem:[%s2683 + $0x38] sm:$0xff]
        %s2692 = scalar_lea.vmem %s13, 1
        %v2693 = vld [vmem:[%s2692] sm:$0x1]
        %v2695 = vlaneseq
        %v2696 = vshrl.u32 %v2695, 7
        %v2697 = vsub.s32 0, %v2696
        %v2698 = vrot.slane %v2693, %v2697
        %v2701 = vsel %vm1606, %v2682, 0
        %2703 = vmatprep.subr.mxu0 0.0
        %2704 = vmatpush1.msra.mxu0 0.0
        %2705 = vmatprep.subr.mxu0 0.0
        %2706 = vmatpush1.msra.mxu0 0.0
        %2707 = vmatprep.subr.mxu0 0.0
        %2708 = vmatpush1.msra.mxu0 0.0
        %2709 = vmatprep.subr.mxu0 0.0
        %2710 = vmatpush1.msra.mxu0 0.0
        %2711 = vmatprep.subr.mxu0 0.0
        %2712 = vmatpush1.msra.mxu0 0.0
        %2713 = vmatprep.subr.mxu0 0.0
        %2714 = vmatpush1.msra.mxu0 0.0
        %2715 = vmatprep.subr.mxu0 0.0
        %2716 = vmatpush1.msra.mxu0 0.0
        %2717 = vmatprep.subr.mxu0 0.0
        %2718 = vmatpush1.msra.mxu0 0.0
        %2719 = vmatprep.subr.mxu0 0.0
        %2720 = vmatpush1.msra.mxu0 %v2691
        %2721 = vmatprep.subr.mxu0 0.0
        %2722 = vmatpush1.msra.mxu0 %v2690
        %2723 = vmatprep.subr.mxu0 0.0
        %2724 = vmatpush1.msra.mxu0 %v2689
        %2725 = vmatprep.subr.mxu0 0.0
        %2726 = vmatpush1.msra.mxu0 %v2688
        %2727 = vmatprep.subr.mxu0 0.0
        %2728 = vmatpush1.msra.mxu0 %v2687
        %2729 = vmatprep.subr.mxu0 0.0
        %2730 = vmatpush1.msra.mxu0 %v2686
        %2731 = vmatprep.subr.mxu0 0.0
        %2732 = vmatpush1.msra.mxu0 %v2685
        %2733 = vmatprep.subr.mxu0 0.0
        %2734 = vmatpush1.msra.mxu0 %v2684
        %2735 = vmatprep.subr.mxu0 0.0
        %2736 = vmatpush2.msra.mxu0 0.0
        %2737 = vmatprep.subr.mxu0 0.0
        %2738 = vmatpush2.msra.mxu0 0.0
        %2739 = vmatprep.subr.mxu0 0.0
        %2740 = vmatpush2.msra.mxu0 0.0
        %2741 = vmatprep.subr.mxu0 0.0
        %2742 = vmatpush2.msra.mxu0 0.0
        %2743 = vmatprep.subr.mxu0 0.0
        %2744 = vmatpush2.msra.mxu0 0.0
        %2745 = vmatprep.subr.mxu0 0.0
        %2746 = vmatpush2.msra.mxu0 0.0
        %2747 = vmatprep.subr.mxu0 0.0
        %2748 = vmatpush2.msra.mxu0 0.0
        %2749 = vmatprep.subr.mxu0 0.0
        %2750 = vmatpush2.msra.mxu0 0.0
        %2751 = vmatprep.subr.mxu0 0.0
        %2752 = vmatpush2.msra.mxu0 0.0
        %2753 = vmatprep.subr.mxu0 0.0
        %2754 = vmatpush2.msra.mxu0 0.0
        %2755 = vmatprep.subr.mxu0 0.0
        %2756 = vmatpush2.msra.mxu0 0.0
        %2757 = vmatprep.subr.mxu0 0.0
        %2758 = vmatpush2.msra.mxu0 0.0
        %2759 = vmatprep.subr.mxu0 0.0
        %2760 = vmatpush2.msra.mxu0 0.0
        %2761 = vmatprep.subr.mxu0 0.0
        %2762 = vmatpush2.msra.mxu0 0.0
        %2763 = vmatprep.subr.mxu0 0.0
        %2764 = vmatpush2.msra.mxu0 0.0
        %2765 = vmatprep.subr.mxu0 0.0
        %2766 = vmatpush2.msra.mxu0 0.0
        %2767 = vmatprep.mubr.f32.mxu0 0.0
        %2768 = vmatmul.mubr.f32.gmra.mxu0 %v2701
        %v2769 = vpop.f32.mrf.mxu0
        %v2770 = vadd.f32 %v2698, %v2769
        %v2771 = vpop.f32.mrf.mxu0
        %2772 = vdwg.mxu0
        %v2773 = vadd.f32 %v2770, %v2587
        %s2774 = scalar_lea.vmem %s14, 1
        %v2775 = vld [vmem:[%s2774] sm:$0x1]
        %s2776 = scalar_lea.vmem %s15, 1
        %v2777 = vld [vmem:[%s2776] sm:$0x1]
        %v2778 = vsel %vm588, %v2773, 0.0
        %2779 = vadd.xlane.f32.xlu0 %v2778
        %v2780 = vpop.xlane.xlu0 %2779
        %v2781 = vmul.f32 %v2780, %v592
        %v2782 = vsub.f32 %v2773, %v2781
        %v2783 = vmul.f32 %v2782, %v2782
        %v2784 = vsel %vm588, %v2783, 0.0
        %2785 = vadd.xlane.f32.xlu0 %v2784
        %v2786 = vpop.xlane.xlu0 %2785
        %v2787 = vmul.f32 %v2786, %v592
        %v2788 = vadd.f32 %v2787, 1e-12
        %v2789 = vrsqrt.pop %v2788
        %v2790 = vmul.f32 %v2782, %v2789
        %v2792 = vlaneseq
        %v2793 = vshrl.u32 %v2792, 7
        %v2794 = vsub.s32 0, %v2793
        %v2795 = vrot.slane %v2775, %v2794
        %v2797 = vmul.f32 %v2790, %v2795
        %v2799 = vlaneseq
        %v2800 = vshrl.u32 %v2799, 7
        %v2801 = vsub.s32 0, %v2800
        %v2802 = vrot.slane %v2777, %v2801
        %v2804 = vadd.f32 %v2797, %v2802
        %v2805 = vld [vmem:[%s16] sm:$0xff]
        %v2806 = vld [vmem:[%s16 + $0x8] sm:$0xff]
        %v2807 = vld [vmem:[%s16 + $0x10] sm:$0xff]
        %v2808 = vld [vmem:[%s16 + $0x18] sm:$0xff]
        %v2809 = vld [vmem:[%s17] sm:$0x1]
        %v2811 = vsel %vm588, %v2804, 0
        %2813 = vmatprep.subr.mxu0 0.0
        %2814 = vmatpush1.msra.mxu0 0.0
        %2815 = vmatprep.subr.mxu0 0.0
        %2816 = vmatpush1.msra.mxu0 0.0
        %2817 = vmatprep.subr.mxu0 0.0
        %2818 = vmatpush1.msra.mxu0 0.0
        %2819 = vmatprep.subr.mxu0 0.0
        %2820 = vmatpush1.msra.mxu0 0.0
        %2821 = vmatprep.subr.mxu0 0.0
        %2822 = vmatpush1.msra.mxu0 0.0
        %2823 = vmatprep.subr.mxu0 0.0
        %2824 = vmatpush1.msra.mxu0 0.0
        %2825 = vmatprep.subr.mxu0 0.0
        %2826 = vmatpush1.msra.mxu0 0.0
        %2827 = vmatprep.subr.mxu0 0.0
        %2828 = vmatpush1.msra.mxu0 0.0
        %2829 = vmatprep.subr.mxu0 0.0
        %2830 = vmatpush1.msra.mxu0 0.0
        %2831 = vmatprep.subr.mxu0 0.0
        %2832 = vmatpush1.msra.mxu0 0.0
        %2833 = vmatprep.subr.mxu0 0.0
        %2834 = vmatpush1.msra.mxu0 0.0
        %2835 = vmatprep.subr.mxu0 0.0
        %2836 = vmatpush1.msra.mxu0 0.0
        %2837 = vmatprep.subr.mxu0 0.0
        %2838 = vmatpush1.msra.mxu0 %v2808
        %2839 = vmatprep.subr.mxu0 0.0
        %2840 = vmatpush1.msra.mxu0 %v2807
        %2841 = vmatprep.subr.mxu0 0.0
        %2842 = vmatpush1.msra.mxu0 %v2806
        %2843 = vmatprep.subr.mxu0 0.0
        %2844 = vmatpush1.msra.mxu0 %v2805
        %2845 = vmatprep.subr.mxu0 0.0
        %2846 = vmatpush2.msra.mxu0 0.0
        %2847 = vmatprep.subr.mxu0 0.0
        %2848 = vmatpush2.msra.mxu0 0.0
        %2849 = vmatprep.subr.mxu0 0.0
        %2850 = vmatpush2.msra.mxu0 0.0
        %2851 = vmatprep.subr.mxu0 0.0
        %2852 = vmatpush2.msra.mxu0 0.0
        %2853 = vmatprep.subr.mxu0 0.0
        %2854 = vmatpush2.msra.mxu0 0.0
        %2855 = vmatprep.subr.mxu0 0.0
        %2856 = vmatpush2.msra.mxu0 0.0
        %2857 = vmatprep.subr.mxu0 0.0
        %2858 = vmatpush2.msra.mxu0 0.0
        %2859 = vmatprep.subr.mxu0 0.0
        %2860 = vmatpush2.msra.mxu0 0.0
        %2861 = vmatprep.subr.mxu0 0.0
        %2862 = vmatpush2.msra.mxu0 0.0
        %2863 = vmatprep.subr.mxu0 0.0
        %2864 = vmatpush2.msra.mxu0 0.0
        %2865 = vmatprep.subr.mxu0 0.0
        %2866 = vmatpush2.msra.mxu0 0.0
        %2867 = vmatprep.subr.mxu0 0.0
        %2868 = vmatpush2.msra.mxu0 0.0
        %2869 = vmatprep.subr.mxu0 0.0
        %2870 = vmatpush2.msra.mxu0 0.0
        %2871 = vmatprep.subr.mxu0 0.0
        %2872 = vmatpush2.msra.mxu0 0.0
        %2873 = vmatprep.subr.mxu0 0.0
        %2874 = vmatpush2.msra.mxu0 0.0
        %2875 = vmatprep.subr.mxu0 0.0
        %2876 = vmatpush2.msra.mxu0 0.0
        %2877 = vmatprep.mubr.f32.mxu0 0.0
        %2878 = vmatmul.mubr.f32.gmra.mxu0 %v2811
        %v2879 = vpop.f32.mrf.mxu0
        %v2880 = vadd.f32 %v2809, %v2879
        %v2881 = vpop.f32.mrf.mxu0
        %2882 = vdwg.mxu0
        %vm2883 = vcmask 8192
        %2884 = vst.msk [vmem:[%s576] sm:$0x1] %vm2883, %v2880
        %s2885 = sand.u32 %s428, 1
        %s2886 = scalar_lea.sflag [#allocation3], %s2885
        %s2887 = sand.u32 %s428, 1
        %s2888 = scalar_lea.vmem [#allocation2], %s2887
        // Predicated region
        $region93: #{model_forward.1} parent=91 // pred_check
          %p2889 = pneg %p438
        $region94: #{model_forward.1} parent=91 // pred_check_branch
          %2891 = sbr.rel (%p2889) target = $region96
        $region95: #{model_forward.1} parent=91 // pred_region
          %s2893 = ssub.s32 16, 16
          %2894 = vsyncadd %s2886, %s2893
          %s2895 = smul.addr %s32, 16
          %s2896 = scalar_lea.hbm %s18, %s2895
          %s2898 = sshll.u32 %s2888, 4
          %s2899 = int_to_ptr.vmem [resolvable:$true] %s2898
          %2901 = dma.vmem_to_hbm [thread:$0]  %s2899, 16, %s2896, %s2886
        $region96: #{model_forward.1} parent=91 // pred_fallthru
          _
      $region92: #{model_forward.1} parent=5 // pred_fallthru
        _
      %p2902 = scmp.le.s32.totalorder 2, %s27
      // Predicated region
      $region97: #{model_forward.1} parent=5 // pred_check
        %p2903 = pneg %p2902
      $region98: #{model_forward.1} parent=5 // pred_check_branch
        %2905 = sbr.rel (%p2903) target = $region100
      $region99: #{model_forward.1} parent=5 // pred_region
        %s2906 = ssub.s32 %s27, 2
        // Predicated region
        $region101: #{model_forward.1} parent=99 // pred_check
          %p2907 = pneg %p444
        $region102: #{model_forward.1} parent=99 // pred_check_branch
          %2909 = sbr.rel (%p2907) target = $region104
        $region103: #{model_forward.1} parent=99 // pred_region
          %s2910 = sand.u32 %s429, 1
          %s2911 = scalar_lea.sflag [#allocation3], %s2910
          %s2912 = sand.u32 %s429, 1
          %s2913 = scalar_lea.vmem [#allocation2], %s2912
          %2914 = dma.done %s2911, 16
        $region104: #{model_forward.1} parent=99 // pred_fallthru
          _
      $region100: #{model_forward.1} parent=5 // pred_fallthru
        _
    $region6: #{model_forward.1} parent=1 // loop_footer
      %s31 = sadd.s32 1, %s27
    $region7: #{model_forward.1} parent=1 // loop_footer_branch
      %26 = sbr.rel target = $region3
    $region8: #{model_forward.1} parent=1 // loop_exit
      _
    %2915 = vsyncpa [#allocation3], 1
    %s2916 = scalar_lea.sflag [#allocation3], 1
    %2917 = vsyncpa %s2916, 1

</llo_original>
